<compile_context>
chip_gen: v6e
topology: v6e:2x2x1
jax: 0.10.0
libtpu: 0.0.40
codegen_flags: <defaults>
</compile_context>

<pallas_src>
import functools

import jax
import jax.numpy as jnp
from jax.experimental import pallas as pl
from jax.experimental.pallas import tpu as pltpu

_EPS = 1e-5
_LANES = 128


def _round_up(v, m):
    return ((v + m - 1) // m) * m


# ----------------------------- in-kernel helpers -----------------------------
def _write_spatially_padded(pad_ref, interior_f32, nb, H, W, Cp):
    """Write the tile into a (H+2, W+2) zero-padded VMEM scratch.

    The scratch persists across grid steps, so the halo is zeroed only on the
    first step; the interior is written exactly once per step.
    """
    @pl.when(pl.program_id(0) == 0)
    def _():
        zrow = jnp.zeros((nb, 1, W + 2, Cp), jnp.float32)
        zcol = jnp.zeros((nb, H, 1, Cp), jnp.float32)
        pad_ref[:, 0:1, :, :] = zrow
        pad_ref[:, H + 1:H + 2, :, :] = zrow
        pad_ref[:, 1:H + 1, 0:1, :] = zcol
        pad_ref[:, 1:H + 1, W + 1:W + 2, :] = zcol

    pad_ref[:, 1:H + 1, 1:W + 1, :] = interior_f32


def _conv3x3_im2col(pad_ref, w_ref, b_ref, nb, H, W, Cp):
    """3x3 / stride-1 conv as a single im2col matmul (K = 9*Cp).

    bf16 MXU operands, f32 accumulation.  Returns (nb*H*W, Cp) f32 with bias.
    """
    cols = [pad_ref[:, ky:ky + H, kx:kx + W, :].reshape(nb * H * W, Cp)
            for ky in range(3) for kx in range(3)]
    patch = jnp.concatenate(cols, axis=1)                     # (nb*H*W, 9*Cp)
    acc = jnp.dot(patch.astype(jnp.bfloat16), w_ref[...],
                  preferred_element_type=jnp.float32)
    return acc + b_ref[...]


def _accumulate_stats(stats_ref, acc):
    """Accumulate per-channel sum and sum-of-squares across grid steps."""
    tile_stats = jnp.concatenate(
        [jnp.sum(acc, axis=0, keepdims=True),
         jnp.sum(acc * acc, axis=0, keepdims=True)], axis=0)  # (2, Cp) f32

    @pl.when(pl.program_id(0) == 0)
    def _():
        stats_ref[...] = jnp.zeros_like(stats_ref)

    stats_ref[...] += tile_stats


def _bn_scale_shift(stats_ref, gamma_ref, beta_ref, inv_count):
    """Per-channel affine (s, t) such that bn(x) = x*s + t (batch stats)."""
    mean = stats_ref[0:1, :] * inv_count
    var = stats_ref[1:2, :] * inv_count - mean * mean         # one-pass, f32
    s = gamma_ref[...] * jax.lax.rsqrt(var + _EPS)
    t = beta_ref[...] - mean * s
    return s, t


# --------------------------- pass 1: conv1 + stats ---------------------------
def _conv1_stats_kernel(x_ref, w1_ref, b1_ref, y1_ref, stats1_ref, pad_ref):
    nb, H, W, Cp = x_ref.shape
    _write_spatially_padded(pad_ref, x_ref[...], nb, H, W, Cp)
    acc = _conv3x3_im2col(pad_ref, w1_ref, b1_ref, nb, H, W, Cp)
    y1_ref[...] = acc.reshape(nb, H, W, Cp)
    _accumulate_stats(stats1_ref, acc)


# --------------------- pass 2: bn1 + relu + conv2 + stats --------------------
def _bn1_relu_conv2_stats_kernel(y1_ref, stats1_ref, g1_ref, be1_ref,
                                 w2_ref, b2_ref, y2_ref, stats2_ref, pad_ref,
                                 *, inv_count):
    nb, H, W, Cp = y1_ref.shape
    s, t = _bn_scale_shift(stats1_ref, g1_ref, be1_ref, inv_count)
    y = jnp.maximum(y1_ref[...] * s.reshape(1, 1, 1, Cp)
                    + t.reshape(1, 1, 1, Cp), 0.0)            # f32 elementwise
    _write_spatially_padded(pad_ref, y, nb, H, W, Cp)
    acc2 = _conv3x3_im2col(pad_ref, w2_ref, b2_ref, nb, H, W, Cp)
    y2_ref[...] = acc2.reshape(nb, H, W, Cp)
    _accumulate_stats(stats2_ref, acc2)


# --------------------- pass 3: bn2 + residual add + relu ---------------------
def _bn2_add_relu_kernel(y2_ref, stats2_ref, g2_ref, be2_ref, x_ref, out_ref,
                         *, inv_count):
    Cp = y2_ref.shape[-1]
    s, t = _bn_scale_shift(stats2_ref, g2_ref, be2_ref, inv_count)
    y = (y2_ref[...] * s.reshape(1, 1, 1, Cp)
         + t.reshape(1, 1, 1, Cp) + x_ref[...])
    out_ref[...] = jnp.maximum(y, 0.0)


# --------------------------------- wrapper -----------------------------------
@jax.jit
def residual_forward_nhwc(x, w1, b1, g1, be1, w2, b2, g2, be2):
    """x: (N, H, W, Cin) f32.  w*: (3, 3, Cin, C) HWIO.  Returns (N, H, W, Cin)."""
    N, H, W, Cin = x.shape
    C = w1.shape[-1]
    # Default Residual() path only: conv3 is None, stride == 1 => Cout == Cin.
    assert C == Cin and w1.shape == (3, 3, Cin, C) and w2.shape == (3, 3, C, C)

    Cp = _round_up(C, _LANES)     # lane-dense channel axis (no-op if C%128==0)
    nb = 1                        # batch tile; per-step VMEM ~ a few MiB
    assert N % nb == 0
    grid = (N // nb,)
    inv_count = 1.0 / float(N * H * W)

    # Wrapper-side packing: channel pad, im2col weight flattening, bf16 weights.
    def pad_w(w):
        wp = jnp.pad(w, ((0, 0), (0, 0),
                         (0, Cp - w.shape[2]), (0, Cp - w.shape[3])))
        return wp.reshape(9 * Cp, Cp).astype(jnp.bfloat16)

    def pad_vec(v):
        return jnp.pad(v.astype(jnp.float32).reshape(1, -1), ((0, 0), (0, Cp - C)))

    x_p = jnp.pad(x.astype(jnp.float32), ((0, 0), (0, 0), (0, 0), (0, Cp - Cin)))
    w1_p, w2_p = pad_w(w1), pad_w(w2)
    b1_p, g1_p, be1_p = pad_vec(b1), pad_vec(g1), pad_vec(be1)
    b2_p, g2_p, be2_p = pad_vec(b2), pad_vec(g2), pad_vec(be2)

    tile_spec = lambda: pl.BlockSpec((nb, H, W, Cp), lambda i: (i, 0, 0, 0))
    whole_spec = lambda a: pl.BlockSpec(a.shape, lambda i: (0,) * a.ndim)
    stats_spec = pl.BlockSpec((2, Cp), lambda i: (0, 0))   # resident accumulator
    pad_scratch = pltpu.VMEM((nb, H + 2, W + 2, Cp), jnp.float32)
    act_shape = jax.ShapeDtypeStruct((N, H, W, Cp), jnp.float32)
    stats_shape = jax.ShapeDtypeStruct((2, Cp), jnp.float32)

    # ---- pass 1: conv1 + bias, accumulate per-channel sum / sumsq ----
    y1, stats1 = pl.pallas_call(
        _conv1_stats_kernel,
        grid=grid,
        in_specs=[tile_spec(), whole_spec(w1_p), whole_spec(b1_p)],
        out_specs=(tile_spec(), stats_spec),
        out_shape=(act_shape, stats_shape),
        scratch_shapes=[pad_scratch],
        compiler_params=pltpu.CompilerParams(
            dimension_semantics=("arbitrary",)),
    )(x_p, w1_p, b1_p)

    # ---- pass 2: bn1 (global stats) + relu + conv2 + bias, accumulate stats2 ----
    y2, stats2 = pl.pallas_call(
        functools.partial(_bn1_relu_conv2_stats_kernel, inv_count=inv_count),
        grid=grid,
        in_specs=[tile_spec(), whole_spec(stats1), whole_spec(g1_p),
                  whole_spec(be1_p), whole_spec(w2_p), whole_spec(b2_p)],
        out_specs=(tile_spec(), stats_spec),
        out_shape=(act_shape, stats_shape),
        scratch_shapes=[pad_scratch],
        compiler_params=pltpu.CompilerParams(
            dimension_semantics=("arbitrary",)),
    )(y1, stats1, g1_p, be1_p, w2_p, b2_p)

    # ---- pass 3: bn2 + residual add + relu (shards across TCs on v7x) ----
    out = pl.pallas_call(
        functools.partial(_bn2_add_relu_kernel, inv_count=inv_count),
        grid=grid,
        in_specs=[tile_spec(), whole_spec(stats2), whole_spec(g2_p),
                  whole_spec(be2_p), tile_spec()],
        out_specs=tile_spec(),
        out_shape=act_shape,
        compiler_params=pltpu.CompilerParams(
            dimension_semantics=("parallel",)),
    )(y2, stats2, g2_p, be2_p, x_p)

    return out[..., :Cin]


def residual_forward_nchw(x_nchw, params):
    x_nhwc = jnp.transpose(x_nchw, (0, 2, 3, 1))
    y_nhwc = residual_forward_nhwc(x_nhwc, *params)
    return jnp.transpose(y_nhwc, (0, 3, 1, 2))


# ------------------------ pure-JAX reference (checking) ----------------------
def _reference_nhwc(x, w1, b1, g1, be1, w2, b2, g2, be2):
    """Convs use bf16 operands with f32 accumulation to mirror the kernel's
    MXU precision; BN / residual math in f32 (PyTorch training-mode BN)."""
    def conv(x, w, b):
        y = jax.lax.conv_general_dilated(
            x.astype(jnp.bfloat16), w.astype(jnp.bfloat16),
            window_strides=(1, 1), padding="SAME",
            dimension_numbers=("NHWC", "HWIO", "NHWC"),
            preferred_element_type=jnp.float32)
        return y + b.reshape(1, 1, 1, -1).astype(jnp.float32)

    def bn(x, g, be):
        m = x.mean(axis=(0, 1, 2), keepdims=True)
        v = ((x - m) ** 2).mean(axis=(0, 1, 2), keepdims=True)
        return (x - m) * jax.lax.rsqrt(v + _EPS) * g.reshape(1, 1, 1, -1) \
               + be.reshape(1, 1, 1, -1)

    y = jax.nn.relu(bn(conv(x, w1, b1), g1, be1))
    y = bn(conv(y, w2, b2), g2, be2)
    return jax.nn.relu(y + x)


if __name__ == "__main__":
    key = jax.random.PRNGKey(0)
    ks = jax.random.split(key, 10)

    N, C, H, W = 2, 4, 16, 16          # num_channels == in_channels (conv3 is None)
    x_nchw = jax.random.normal(ks[0], (N, C, H, W), jnp.float32)

    w1 = 0.1 * jax.random.normal(ks[1], (3, 3, C, C), jnp.float32)   # HWIO
    b1 = 0.1 * jax.random.normal(ks[2], (C,), jnp.float32)
    g1 = 1.0 + 0.1 * jax.random.normal(ks[3], (C,), jnp.float32)
    be1 = 0.1 * jax.random.normal(ks[4], (C,), jnp.float32)
    w2 = 0.1 * jax.random.normal(ks[5], (3, 3, C, C), jnp.float32)
    b2 = 0.1 * jax.random.normal(ks[6], (C,), jnp.float32)
    g2 = 1.0 + 0.1 * jax.random.normal(ks[7], (C,), jnp.float32)
    be2 = 0.1 * jax.random.normal(ks[8], (C,), jnp.float32)
    params = (w1, b1, g1, be1, w2, b2, g2, be2)

    y = residual_forward_nchw(x_nchw, params)
    y = jax.block_until_ready(y)

    x_nhwc = jnp.transpose(x_nchw, (0, 2, 3, 1))
    y_ref = jnp.transpose(_reference_nhwc(x_nhwc, *params), (0, 3, 1, 2))

    assert y.shape == x_nchw.shape and y.dtype == jnp.float32
    max_err = float(jnp.max(jnp.abs(y - y_ref)))
    # Both kernel and reference use bf16 MXU operands with f32 accumulation;
    # remaining differences are reduction-order / one-pass-BN rounding only.
    assert max_err < 2e-2, f"max abs err = {max_err}"

    print("KERNEL_OK")
</pallas_src>

<mosaic_0001>
module attributes {stable_mosaic.version = 11 : i64} {
  func.func @_bn1_relu_conv2_stats_kernel(%arg0: i32, %arg1: memref<1x16x16x128xf32, #tpu.memory_space<vmem>>, %arg2: memref<2x128xf32, #tpu.memory_space<vmem>>, %arg3: memref<1x128xf32, #tpu.memory_space<vmem>>, %arg4: memref<1x128xf32, #tpu.memory_space<vmem>>, %arg5: memref<1152x128xbf16, #tpu.memory_space<vmem>>, %arg6: memref<1x128xf32, #tpu.memory_space<vmem>>, %arg7: memref<1x16x16x128xf32, #tpu.memory_space<vmem>>, %arg8: memref<2x128xf32, #tpu.memory_space<vmem>>, %arg9: memref<1x18x18x128xf32, #tpu.memory_space<vmem>>) attributes {dimension_semantics = [#tpu.dimension_semantics<arbitrary>], iteration_bounds = array<i64: 2>, scalar_prefetch = 0 : i64, scratch_operands = 1 : i64, tpu.core_type = #tpu.core_type<tc>, window_params = [{transform_indices = @transform_0, window_bounds = array<i64: 1, 16, 16, 128>}, {pipeline_mode = #tpu.pipeline_mode<synchronous>, transform_indices = @transform_1, window_bounds = array<i64: 2, 128>}, {pipeline_mode = #tpu.pipeline_mode<synchronous>, transform_indices = @transform_2, window_bounds = array<i64: 1, 128>}, {pipeline_mode = #tpu.pipeline_mode<synchronous>, transform_indices = @transform_3, window_bounds = array<i64: 1, 128>}, {pipeline_mode = #tpu.pipeline_mode<synchronous>, transform_indices = @transform_4, window_bounds = array<i64: 1152, 128>}, {pipeline_mode = #tpu.pipeline_mode<synchronous>, transform_indices = @transform_5, window_bounds = array<i64: 1, 128>}, {transform_indices = @transform_6, window_bounds = array<i64: 1, 16, 16, 128>}, {pipeline_mode = #tpu.pipeline_mode<synchronous>, transform_indices = @transform_7, window_bounds = array<i64: 2, 128>}]} {
    %c0 = arith.constant 0 : index
    %c0_0 = arith.constant 0 : index
    %0 = vector.load %arg2[%c0, %c0_0] : memref<2x128xf32, #tpu.memory_space<vmem>>, vector<1x128xf32>
    %cst = arith.constant 0.001953125 : f32
    %1 = vector.broadcast %cst : f32 to vector<1x128xf32>
    %2 = arith.mulf %0, %1 : vector<1x128xf32>
    %c1 = arith.constant 1 : index
    %c0_1 = arith.constant 0 : index
    %3 = vector.load %arg2[%c1, %c0_1] : memref<2x128xf32, #tpu.memory_space<vmem>>, vector<1x128xf32>
    %cst_2 = arith.constant 0.001953125 : f32
    %4 = vector.broadcast %cst_2 : f32 to vector<1x128xf32>
    %5 = arith.mulf %3, %4 : vector<1x128xf32>
    %6 = arith.mulf %2, %2 : vector<1x128xf32>
    %7 = arith.subf %5, %6 : vector<1x128xf32>
    %c0_3 = arith.constant 0 : index
    %c0_4 = arith.constant 0 : index
    %8 = vector.load %arg3[%c0_3, %c0_4] : memref<1x128xf32, #tpu.memory_space<vmem>>, vector<1x128xf32>
    %cst_5 = arith.constant 9.99999974E-6 : f32
    %9 = vector.broadcast %cst_5 : f32 to vector<1x128xf32>
    %10 = arith.addf %7, %9 : vector<1x128xf32>
    %11 = math.rsqrt %10 : vector<1x128xf32>
    %12 = arith.mulf %8, %11 : vector<1x128xf32>
    %c0_6 = arith.constant 0 : index
    %c0_7 = arith.constant 0 : index
    %13 = vector.load %arg4[%c0_6, %c0_7] : memref<1x128xf32, #tpu.memory_space<vmem>>, vector<1x128xf32>
    %14 = arith.mulf %2, %12 : vector<1x128xf32>
    %15 = arith.subf %13, %14 : vector<1x128xf32>
    %c0_8 = arith.constant 0 : index
    %c0_9 = arith.constant 0 : index
    %c0_10 = arith.constant 0 : index
    %c0_11 = arith.constant 0 : index
    %16 = vector.load %arg1[%c0_8, %c0_9, %c0_10, %c0_11] : memref<1x16x16x128xf32, #tpu.memory_space<vmem>>, vector<1x16x16x128xf32>
    %17 = vector.shape_cast %12 : vector<1x128xf32> to vector<1x1x1x128xf32>
    %18 = vector.broadcast %17 : vector<1x1x1x128xf32> to vector<1x16x16x128xf32>
    %19 = arith.mulf %16, %18 : vector<1x16x16x128xf32>
    %20 = vector.shape_cast %15 : vector<1x128xf32> to vector<1x1x1x128xf32>
    %21 = vector.broadcast %20 : vector<1x1x1x128xf32> to vector<1x16x16x128xf32>
    %22 = arith.addf %19, %21 : vector<1x16x16x128xf32>
    %cst_12 = arith.constant 0.000000e+00 : f32
    %23 = vector.broadcast %cst_12 : f32 to vector<1x16x16x128xf32>
    %24 = arith.maximumf %22, %23 : vector<1x16x16x128xf32>
    %c0_i32 = arith.constant 0 : i32
    %25 = arith.cmpi eq, %arg0, %c0_i32 : i32
    %26 = arith.extui %25 : i1 to i32
    %c0_i32_13 = arith.constant 0 : i32
    %27 = arith.cmpi ne, %26, %c0_i32_13 : i32
    scf.if %27 {
      %cst_70 = arith.constant 0.000000e+00 : f32
      %68 = vector.broadcast %cst_70 : f32 to vector<1x1x18x128xf32>
      %cst_71 = arith.constant 0.000000e+00 : f32
      %69 = vector.broadcast %cst_71 : f32 to vector<1x16x1x128xf32>
      %c0_72 = arith.constant 0 : index
      %c0_73 = arith.constant 0 : index
      %c0_74 = arith.constant 0 : index
      %c0_75 = arith.constant 0 : index
      %70 = vector.load %arg9[%c0_72, %c0_73, %c0_74, %c0_75] : memref<1x18x18x128xf32, #tpu.memory_space<vmem>>, vector<1x1x18x128xf32>
      tpu.vector_store %arg9[%c0_72, %c0_73, %c0_74, %c0_75], %68 {strides = array<i32>} : memref<1x18x18x128xf32, #tpu.memory_space<vmem>>, vector<1x1x18x128xf32>,
      %c0_76 = arith.constant 0 : index
      %c17 = arith.constant 17 : index
      %c0_77 = arith.constant 0 : index
      %c0_78 = arith.constant 0 : index
      %71 = vector.load %arg9[%c0_76, %c17, %c0_77, %c0_78] : memref<1x18x18x128xf32, #tpu.memory_space<vmem>>, vector<1x1x18x128xf32>
      tpu.vector_store %arg9[%c0_76, %c17, %c0_77, %c0_78], %68 {strides = array<i32>} : memref<1x18x18x128xf32, #tpu.memory_space<vmem>>, vector<1x1x18x128xf32>,
      %c0_79 = arith.constant 0 : index
      %c1_80 = arith.constant 1 : index
      %c0_81 = arith.constant 0 : index
      %c0_82 = arith.constant 0 : index
      %72 = vector.load %arg9[%c0_79, %c1_80, %c0_81, %c0_82] : memref<1x18x18x128xf32, #tpu.memory_space<vmem>>, vector<1x16x1x128xf32>
      tpu.vector_store %arg9[%c0_79, %c1_80, %c0_81, %c0_82], %69 {strides = array<i32>} : memref<1x18x18x128xf32, #tpu.memory_space<vmem>>, vector<1x16x1x128xf32>,
      %c0_83 = arith.constant 0 : index
      %c1_84 = arith.constant 1 : index
      %c17_85 = arith.constant 17 : index
      %c0_86 = arith.constant 0 : index
      %73 = vector.load %arg9[%c0_83, %c1_84, %c17_85, %c0_86] : memref<1x18x18x128xf32, #tpu.memory_space<vmem>>, vector<1x16x1x128xf32>
      tpu.vector_store %arg9[%c0_83, %c1_84, %c17_85, %c0_86], %69 {strides = array<i32>} : memref<1x18x18x128xf32, #tpu.memory_space<vmem>>, vector<1x16x1x128xf32>,
    } else {
    }
    %c0_14 = arith.constant 0 : index
    %c1_15 = arith.constant 1 : index
    %c1_16 = arith.constant 1 : index
    %c0_17 = arith.constant 0 : index
    %28 = vector.load %arg9[%c0_14, %c1_15, %c1_16, %c0_17] : memref<1x18x18x128xf32, #tpu.memory_space<vmem>>, vector<1x16x16x128xf32>
    tpu.vector_store %arg9[%c0_14, %c1_15, %c1_16, %c0_17], %24 {strides = array<i32>} : memref<1x18x18x128xf32, #tpu.memory_space<vmem>>, vector<1x16x16x128xf32>,
    %c0_18 = arith.constant 0 : index
    %c0_19 = arith.constant 0 : index
    %c0_20 = arith.constant 0 : index
    %c0_21 = arith.constant 0 : index
    %29 = vector.load %arg9[%c0_18, %c0_19, %c0_20, %c0_21] : memref<1x18x18x128xf32, #tpu.memory_space<vmem>>, vector<1x16x16x128xf32>
    %30 = vector.shape_cast %29 : vector<1x16x16x128xf32> to vector<256x128xf32>
    %c0_22 = arith.constant 0 : index
    %c0_23 = arith.constant 0 : index
    %c1_24 = arith.constant 1 : index
    %c0_25 = arith.constant 0 : index
    %31 = vector.load %arg9[%c0_22, %c0_23, %c1_24, %c0_25] : memref<1x18x18x128xf32, #tpu.memory_space<vmem>>, vector<1x16x16x128xf32>
    %32 = vector.shape_cast %31 : vector<1x16x16x128xf32> to vector<256x128xf32>
    %c0_26 = arith.constant 0 : index
    %c0_27 = arith.constant 0 : index
    %c2 = arith.constant 2 : index
    %c0_28 = arith.constant 0 : index
    %33 = vector.load %arg9[%c0_26, %c0_27, %c2, %c0_28] : memref<1x18x18x128xf32, #tpu.memory_space<vmem>>, vector<1x16x16x128xf32>
    %34 = vector.shape_cast %33 : vector<1x16x16x128xf32> to vector<256x128xf32>
    %c0_29 = arith.constant 0 : index
    %c1_30 = arith.constant 1 : index
    %c0_31 = arith.constant 0 : index
    %c0_32 = arith.constant 0 : index
    %35 = vector.load %arg9[%c0_29, %c1_30, %c0_31, %c0_32] : memref<1x18x18x128xf32, #tpu.memory_space<vmem>>, vector<1x16x16x128xf32>
    %36 = vector.shape_cast %35 : vector<1x16x16x128xf32> to vector<256x128xf32>
    %c0_33 = arith.constant 0 : index
    %c1_34 = arith.constant 1 : index
    %c1_35 = arith.constant 1 : index
    %c0_36 = arith.constant 0 : index
    %37 = vector.load %arg9[%c0_33, %c1_34, %c1_35, %c0_36] : memref<1x18x18x128xf32, #tpu.memory_space<vmem>>, vector<1x16x16x128xf32>
    %38 = vector.shape_cast %37 : vector<1x16x16x128xf32> to vector<256x128xf32>
    %c0_37 = arith.constant 0 : index
    %c1_38 = arith.constant 1 : index
    %c2_39 = arith.constant 2 : index
    %c0_40 = arith.constant 0 : index
    %39 = vector.load %arg9[%c0_37, %c1_38, %c2_39, %c0_40] : memref<1x18x18x128xf32, #tpu.memory_space<vmem>>, vector<1x16x16x128xf32>
    %40 = vector.shape_cast %39 : vector<1x16x16x128xf32> to vector<256x128xf32>
    %c0_41 = arith.constant 0 : index
    %c2_42 = arith.constant 2 : index
    %c0_43 = arith.constant 0 : index
    %c0_44 = arith.constant 0 : index
    %41 = vector.load %arg9[%c0_41, %c2_42, %c0_43, %c0_44] : memref<1x18x18x128xf32, #tpu.memory_space<vmem>>, vector<1x16x16x128xf32>
    %42 = vector.shape_cast %41 : vector<1x16x16x128xf32> to vector<256x128xf32>
    %c0_45 = arith.constant 0 : index
    %c2_46 = arith.constant 2 : index
    %c1_47 = arith.constant 1 : index
    %c0_48 = arith.constant 0 : index
    %43 = vector.load %arg9[%c0_45, %c2_46, %c1_47, %c0_48] : memref<1x18x18x128xf32, #tpu.memory_space<vmem>>, vector<1x16x16x128xf32>
    %44 = vector.shape_cast %43 : vector<1x16x16x128xf32> to vector<256x128xf32>
    %c0_49 = arith.constant 0 : index
    %c2_50 = arith.constant 2 : index
    %c2_51 = arith.constant 2 : index
    %c0_52 = arith.constant 0 : index
    %45 = vector.load %arg9[%c0_49, %c2_50, %c2_51, %c0_52] : memref<1x18x18x128xf32, #tpu.memory_space<vmem>>, vector<1x16x16x128xf32>
    %46 = vector.shape_cast %45 : vector<1x16x16x128xf32> to vector<256x128xf32>
    %47 = tpu.concatenate %30, %32, %34, %36, %38, %40, %42, %44, %46 in 1 : vector<256x128xf32>, vector<256x128xf32>, vector<256x128xf32>, vector<256x128xf32>, vector<256x128xf32>, vector<256x128xf32>, vector<256x128xf32>, vector<256x128xf32>, vector<256x128xf32> -> vector<256x1152xf32>
    %48 = arith.truncf %47 : vector<256x1152xf32> to vector<256x1152xbf16>
    %c0_53 = arith.constant 0 : index
    %c0_54 = arith.constant 0 : index
    %49 = vector.load %arg5[%c0_53, %c0_54] : memref<1152x128xbf16, #tpu.memory_space<vmem>>, vector<1152x128xbf16>
    %cst_55 = arith.constant dense<0.000000e+00> : vector<256x128xf32>
    %50 = tpu.matmul %48, %49, %cst_55 {dimension_numbers = #tpu.dot_dimension_numbers<[1], [0], [0], [1], [0, 0, 1, 1], [], []>} : vector<256x1152xbf16>, vector<1152x128xbf16>, vector<256x128xf32> -> vector<256x128xf32>
    %c0_56 = arith.constant 0 : index
    %c0_57 = arith.constant 0 : index
    %51 = vector.load %arg6[%c0_56, %c0_57] : memref<1x128xf32, #tpu.memory_space<vmem>>, vector<1x128xf32>
    %52 = vector.broadcast %51 : vector<1x128xf32> to vector<256x128xf32>
    %53 = arith.addf %50, %52 : vector<256x128xf32>
    %54 = vector.shape_cast %53 : vector<256x128xf32> to vector<1x16x16x128xf32>
    %c0_58 = arith.constant 0 : index
    %c0_59 = arith.constant 0 : index
    %c0_60 = arith.constant 0 : index
    %c0_61 = arith.constant 0 : index
    %55 = vector.load %arg7[%c0_58, %c0_59, %c0_60, %c0_61] : memref<1x16x16x128xf32, #tpu.memory_space<vmem>>, vector<1x16x16x128xf32>
    tpu.vector_store %arg7[%c0_58, %c0_59, %c0_60, %c0_61], %54 {strides = array<i32>} : memref<1x16x16x128xf32, #tpu.memory_space<vmem>>, vector<1x16x16x128xf32>,
    %cst_62 = arith.constant dense<0.000000e+00> : vector<128xf32>
    %56 = vector.multi_reduction <add>, %53, %cst_62 [0] : vector<256x128xf32> to vector<128xf32>
    %57 = vector.shape_cast %56 : vector<128xf32> to vector<1x128xf32>
    %58 = arith.mulf %53, %53 : vector<256x128xf32>
    %cst_63 = arith.constant dense<0.000000e+00> : vector<128xf32>
    %59 = vector.multi_reduction <add>, %58, %cst_63 [0] : vector<256x128xf32> to vector<128xf32>
    %60 = vector.shape_cast %59 : vector<128xf32> to vector<1x128xf32>
    %61 = tpu.concatenate %57, %60 in 0 : vector<1x128xf32>, vector<1x128xf32> -> vector<2x128xf32>
    %c0_i32_64 = arith.constant 0 : i32
    %62 = arith.cmpi eq, %arg0, %c0_i32_64 : i32
    %63 = arith.extui %62 : i1 to i32
    %c0_i32_65 = arith.constant 0 : i32
    %64 = arith.cmpi ne, %63, %c0_i32_65 : i32
    scf.if %64 {
      %cst_70 = arith.constant 0.000000e+00 : f32
      %68 = vector.broadcast %cst_70 : f32 to vector<2x128xf32>
      %c0_71 = arith.constant 0 : index
      %c0_72 = arith.constant 0 : index
      %69 = vector.load %arg8[%c0_71, %c0_72] : memref<2x128xf32, #tpu.memory_space<vmem>>, vector<2x128xf32>
      tpu.vector_store %arg8[%c0_71, %c0_72], %68 {strides = array<i32>} : memref<2x128xf32, #tpu.memory_space<vmem>>, vector<2x128xf32>,
    } else {
    }
    %c0_66 = arith.constant 0 : index
    %c0_67 = arith.constant 0 : index
    %65 = vector.load %arg8[%c0_66, %c0_67] : memref<2x128xf32, #tpu.memory_space<vmem>>, vector<2x128xf32>
    %66 = arith.addf %65, %61 : vector<2x128xf32>
    %c0_68 = arith.constant 0 : index
    %c0_69 = arith.constant 0 : index
    %67 = vector.load %arg8[%c0_68, %c0_69] : memref<2x128xf32, #tpu.memory_space<vmem>>, vector<2x128xf32>
    tpu.vector_store %arg8[%c0_68, %c0_69], %66 {strides = array<i32>} : memref<2x128xf32, #tpu.memory_space<vmem>>, vector<2x128xf32>,
    return
  }
  func.func @transform_0(%arg0: i32) -> (i32, i32, i32, i32) {
    %c0_i32 = arith.constant 0 : i32
    %c0_i32_0 = arith.constant 0 : i32
    %c0_i32_1 = arith.constant 0 : i32
    %c0_i32_2 = arith.constant 0 : i32
    return %arg0, %c0_i32, %c0_i32_0, %c0_i32_1 : i32, i32, i32, i32
  }
  func.func @transform_1(%arg0: i32) -> (i32, i32) {
    %c0_i32 = arith.constant 0 : i32
    %c0_i32_0 = arith.constant 0 : i32
    %c0_i32_1 = arith.constant 0 : i32
    return %c0_i32, %c0_i32_0 : i32, i32
  }
  func.func @transform_2(%arg0: i32) -> (i32, i32) {
    %c0_i32 = arith.constant 0 : i32
    %c0_i32_0 = arith.constant 0 : i32
    %c0_i32_1 = arith.constant 0 : i32
    return %c0_i32, %c0_i32_0 : i32, i32
  }
  func.func @transform_3(%arg0: i32) -> (i32, i32) {
    %c0_i32 = arith.constant 0 : i32
    %c0_i32_0 = arith.constant 0 : i32
    %c0_i32_1 = arith.constant 0 : i32
    return %c0_i32, %c0_i32_0 : i32, i32
  }
  func.func @transform_4(%arg0: i32) -> (i32, i32) {
    %c0_i32 = arith.constant 0 : i32
    %c0_i32_0 = arith.constant 0 : i32
    %c0_i32_1 = arith.constant 0 : i32
    return %c0_i32, %c0_i32_0 : i32, i32
  }
  func.func @transform_5(%arg0: i32) -> (i32, i32) {
    %c0_i32 = arith.constant 0 : i32
    %c0_i32_0 = arith.constant 0 : i32
    %c0_i32_1 = arith.constant 0 : i32
    return %c0_i32, %c0_i32_0 : i32, i32
  }
  func.func @transform_6(%arg0: i32) -> (i32, i32, i32, i32) {
    %c0_i32 = arith.constant 0 : i32
    %c0_i32_0 = arith.constant 0 : i32
    %c0_i32_1 = arith.constant 0 : i32
    %c0_i32_2 = arith.constant 0 : i32
    return %arg0, %c0_i32, %c0_i32_0, %c0_i32_1 : i32, i32, i32, i32
  }
  func.func @transform_7(%arg0: i32) -> (i32, i32) {
    %c0_i32 = arith.constant 0 : i32
    %c0_i32_0 = arith.constant 0 : i32
    %c0_i32_1 = arith.constant 0 : i32
    return %c0_i32, %c0_i32_0 : i32, i32
  }
}

module attributes {stable_mosaic.version = 11 : i64} {
  func.func @_conv1_stats_kernel(%arg0: i32, %arg1: memref<1x16x16x128xf32, #tpu.memory_space<vmem>>, %arg2: memref<1152x128xbf16, #tpu.memory_space<vmem>>, %arg3: memref<1x128xf32, #tpu.memory_space<vmem>>, %arg4: memref<1x16x16x128xf32, #tpu.memory_space<vmem>>, %arg5: memref<2x128xf32, #tpu.memory_space<vmem>>, %arg6: memref<1x18x18x128xf32, #tpu.memory_space<vmem>>) attributes {dimension_semantics = [#tpu.dimension_semantics<arbitrary>], iteration_bounds = array<i64: 2>, scalar_prefetch = 0 : i64, scratch_operands = 1 : i64, tpu.core_type = #tpu.core_type<tc>, window_params = [{transform_indices = @transform_0, window_bounds = array<i64: 1, 16, 16, 128>}, {pipeline_mode = #tpu.pipeline_mode<synchronous>, transform_indices = @transform_1, window_bounds = array<i64: 1152, 128>}, {pipeline_mode = #tpu.pipeline_mode<synchronous>, transform_indices = @transform_2, window_bounds = array<i64: 1, 128>}, {transform_indices = @transform_3, window_bounds = array<i64: 1, 16, 16, 128>}, {pipeline_mode = #tpu.pipeline_mode<synchronous>, transform_indices = @transform_4, window_bounds = array<i64: 2, 128>}]} {
    %c0 = arith.constant 0 : index
    %c0_0 = arith.constant 0 : index
    %c0_1 = arith.constant 0 : index
    %c0_2 = arith.constant 0 : index
    %0 = vector.load %arg1[%c0, %c0_0, %c0_1, %c0_2] : memref<1x16x16x128xf32, #tpu.memory_space<vmem>>, vector<1x16x16x128xf32>
    %c0_i32 = arith.constant 0 : i32
    %1 = arith.cmpi eq, %arg0, %c0_i32 : i32
    %2 = arith.extui %1 : i1 to i32
    %c0_i32_3 = arith.constant 0 : i32
    %3 = arith.cmpi ne, %2, %c0_i32_3 : i32
    scf.if %3 {
      %cst_58 = arith.constant 0.000000e+00 : f32
      %44 = vector.broadcast %cst_58 : f32 to vector<1x1x18x128xf32>
      %cst_59 = arith.constant 0.000000e+00 : f32
      %45 = vector.broadcast %cst_59 : f32 to vector<1x16x1x128xf32>
      %c0_60 = arith.constant 0 : index
      %c0_61 = arith.constant 0 : index
      %c0_62 = arith.constant 0 : index
      %c0_63 = arith.constant 0 : index
      %46 = vector.load %arg6[%c0_60, %c0_61, %c0_62, %c0_63] : memref<1x18x18x128xf32, #tpu.memory_space<vmem>>, vector<1x1x18x128xf32>
      tpu.vector_store %arg6[%c0_60, %c0_61, %c0_62, %c0_63], %44 {strides = array<i32>} : memref<1x18x18x128xf32, #tpu.memory_space<vmem>>, vector<1x1x18x128xf32>,
      %c0_64 = arith.constant 0 : index
      %c17 = arith.constant 17 : index
      %c0_65 = arith.constant 0 : index
      %c0_66 = arith.constant 0 : index
      %47 = vector.load %arg6[%c0_64, %c17, %c0_65, %c0_66] : memref<1x18x18x128xf32, #tpu.memory_space<vmem>>, vector<1x1x18x128xf32>
      tpu.vector_store %arg6[%c0_64, %c17, %c0_65, %c0_66], %44 {strides = array<i32>} : memref<1x18x18x128xf32, #tpu.memory_space<vmem>>, vector<1x1x18x128xf32>,
      %c0_67 = arith.constant 0 : index
      %c1_68 = arith.constant 1 : index
      %c0_69 = arith.constant 0 : index
      %c0_70 = arith.constant 0 : index
      %48 = vector.load %arg6[%c0_67, %c1_68, %c0_69, %c0_70] : memref<1x18x18x128xf32, #tpu.memory_space<vmem>>, vector<1x16x1x128xf32>
      tpu.vector_store %arg6[%c0_67, %c1_68, %c0_69, %c0_70], %45 {strides = array<i32>} : memref<1x18x18x128xf32, #tpu.memory_space<vmem>>, vector<1x16x1x128xf32>,
      %c0_71 = arith.constant 0 : index
      %c1_72 = arith.constant 1 : index
      %c17_73 = arith.constant 17 : index
      %c0_74 = arith.constant 0 : index
      %49 = vector.load %arg6[%c0_71, %c1_72, %c17_73, %c0_74] : memref<1x18x18x128xf32, #tpu.memory_space<vmem>>, vector<1x16x1x128xf32>
      tpu.vector_store %arg6[%c0_71, %c1_72, %c17_73, %c0_74], %45 {strides = array<i32>} : memref<1x18x18x128xf32, #tpu.memory_space<vmem>>, vector<1x16x1x128xf32>,
    } else {
    }
    %c0_4 = arith.constant 0 : index
    %c1 = arith.constant 1 : index
    %c1_5 = arith.constant 1 : index
    %c0_6 = arith.constant 0 : index
    %4 = vector.load %arg6[%c0_4, %c1, %c1_5, %c0_6] : memref<1x18x18x128xf32, #tpu.memory_space<vmem>>, vector<1x16x16x128xf32>
    tpu.vector_store %arg6[%c0_4, %c1, %c1_5, %c0_6], %0 {strides = array<i32>} : memref<1x18x18x128xf32, #tpu.memory_space<vmem>>, vector<1x16x16x128xf32>,
    %c0_7 = arith.constant 0 : index
    %c0_8 = arith.constant 0 : index
    %c0_9 = arith.constant 0 : index
    %c0_10 = arith.constant 0 : index
    %5 = vector.load %arg6[%c0_7, %c0_8, %c0_9, %c0_10] : memref<1x18x18x128xf32, #tpu.memory_space<vmem>>, vector<1x16x16x128xf32>
    %6 = vector.shape_cast %5 : vector<1x16x16x128xf32> to vector<256x128xf32>
    %c0_11 = arith.constant 0 : index
    %c0_12 = arith.constant 0 : index
    %c1_13 = arith.constant 1 : index
    %c0_14 = arith.constant 0 : index
    %7 = vector.load %arg6[%c0_11, %c0_12, %c1_13, %c0_14] : memref<1x18x18x128xf32, #tpu.memory_space<vmem>>, vector<1x16x16x128xf32>
    %8 = vector.shape_cast %7 : vector<1x16x16x128xf32> to vector<256x128xf32>
    %c0_15 = arith.constant 0 : index
    %c0_16 = arith.constant 0 : index
    %c2 = arith.constant 2 : index
    %c0_17 = arith.constant 0 : index
    %9 = vector.load %arg6[%c0_15, %c0_16, %c2, %c0_17] : memref<1x18x18x128xf32, #tpu.memory_space<vmem>>, vector<1x16x16x128xf32>
    %10 = vector.shape_cast %9 : vector<1x16x16x128xf32> to vector<256x128xf32>
    %c0_18 = arith.constant 0 : index
    %c1_19 = arith.constant 1 : index
    %c0_20 = arith.constant 0 : index
    %c0_21 = arith.constant 0 : index
    %11 = vector.load %arg6[%c0_18, %c1_19, %c0_20, %c0_21] : memref<1x18x18x128xf32, #tpu.memory_space<vmem>>, vector<1x16x16x128xf32>
    %12 = vector.shape_cast %11 : vector<1x16x16x128xf32> to vector<256x128xf32>
    %c0_22 = arith.constant 0 : index
    %c1_23 = arith.constant 1 : index
    %c1_24 = arith.constant 1 : index
    %c0_25 = arith.constant 0 : index
    %13 = vector.load %arg6[%c0_22, %c1_23, %c1_24, %c0_25] : memref<1x18x18x128xf32, #tpu.memory_space<vmem>>, vector<1x16x16x128xf32>
    %14 = vector.shape_cast %13 : vector<1x16x16x128xf32> to vector<256x128xf32>
    %c0_26 = arith.constant 0 : index
    %c1_27 = arith.constant 1 : index
    %c2_28 = arith.constant 2 : index
    %c0_29 = arith.constant 0 : index
    %15 = vector.load %arg6[%c0_26, %c1_27, %c2_28, %c0_29] : memref<1x18x18x128xf32, #tpu.memory_space<vmem>>, vector<1x16x16x128xf32>
    %16 = vector.shape_cast %15 : vector<1x16x16x128xf32> to vector<256x128xf32>
    %c0_30 = arith.constant 0 : index
    %c2_31 = arith.constant 2 : index
    %c0_32 = arith.constant 0 : index
    %c0_33 = arith.constant 0 : index
    %17 = vector.load %arg6[%c0_30, %c2_31, %c0_32, %c0_33] : memref<1x18x18x128xf32, #tpu.memory_space<vmem>>, vector<1x16x16x128xf32>
    %18 = vector.shape_cast %17 : vector<1x16x16x128xf32> to vector<256x128xf32>
    %c0_34 = arith.constant 0 : index
    %c2_35 = arith.constant 2 : index
    %c1_36 = arith.constant 1 : index
    %c0_37 = arith.constant 0 : index
    %19 = vector.load %arg6[%c0_34, %c2_35, %c1_36, %c0_37] : memref<1x18x18x128xf32, #tpu.memory_space<vmem>>, vector<1x16x16x128xf32>
    %20 = vector.shape_cast %19 : vector<1x16x16x128xf32> to vector<256x128xf32>
    %c0_38 = arith.constant 0 : index
    %c2_39 = arith.constant 2 : index
    %c2_40 = arith.constant 2 : index
    %c0_41 = arith.constant 0 : index
    %21 = vector.load %arg6[%c0_38, %c2_39, %c2_40, %c0_41] : memref<1x18x18x128xf32, #tpu.memory_space<vmem>>, vector<1x16x16x128xf32>
    %22 = vector.shape_cast %21 : vector<1x16x16x128xf32> to vector<256x128xf32>
    %23 = tpu.concatenate %6, %8, %10, %12, %14, %16, %18, %20, %22 in 1 : vector<256x128xf32>, vector<256x128xf32>, vector<256x128xf32>, vector<256x128xf32>, vector<256x128xf32>, vector<256x128xf32>, vector<256x128xf32>, vector<256x128xf32>, vector<256x128xf32> -> vector<256x1152xf32>
    %24 = arith.truncf %23 : vector<256x1152xf32> to vector<256x1152xbf16>
    %c0_42 = arith.constant 0 : index
    %c0_43 = arith.constant 0 : index
    %25 = vector.load %arg2[%c0_42, %c0_43] : memref<1152x128xbf16, #tpu.memory_space<vmem>>, vector<1152x128xbf16>
    %cst = arith.constant dense<0.000000e+00> : vector<256x128xf32>
    %26 = tpu.matmul %24, %25, %cst {dimension_numbers = #tpu.dot_dimension_numbers<[1], [0], [0], [1], [0, 0, 1, 1], [], []>} : vector<256x1152xbf16>, vector<1152x128xbf16>, vector<256x128xf32> -> vector<256x128xf32>
    %c0_44 = arith.constant 0 : index
    %c0_45 = arith.constant 0 : index
    %27 = vector.load %arg3[%c0_44, %c0_45] : memref<1x128xf32, #tpu.memory_space<vmem>>, vector<1x128xf32>
    %28 = vector.broadcast %27 : vector<1x128xf32> to vector<256x128xf32>
    %29 = arith.addf %26, %28 : vector<256x128xf32>
    %30 = vector.shape_cast %29 : vector<256x128xf32> to vector<1x16x16x128xf32>
    %c0_46 = arith.constant 0 : index
    %c0_47 = arith.constant 0 : index
    %c0_48 = arith.constant 0 : index
    %c0_49 = arith.constant 0 : index
    %31 = vector.load %arg4[%c0_46, %c0_47, %c0_48, %c0_49] : memref<1x16x16x128xf32, #tpu.memory_space<vmem>>, vector<1x16x16x128xf32>
    tpu.vector_store %arg4[%c0_46, %c0_47, %c0_48, %c0_49], %30 {strides = array<i32>} : memref<1x16x16x128xf32, #tpu.memory_space<vmem>>, vector<1x16x16x128xf32>,
    %cst_50 = arith.constant dense<0.000000e+00> : vector<128xf32>
    %32 = vector.multi_reduction <add>, %29, %cst_50 [0] : vector<256x128xf32> to vector<128xf32>
    %33 = vector.shape_cast %32 : vector<128xf32> to vector<1x128xf32>
    %34 = arith.mulf %29, %29 : vector<256x128xf32>
    %cst_51 = arith.constant dense<0.000000e+00> : vector<128xf32>
    %35 = vector.multi_reduction <add>, %34, %cst_51 [0] : vector<256x128xf32> to vector<128xf32>
    %36 = vector.shape_cast %35 : vector<128xf32> to vector<1x128xf32>
    %37 = tpu.concatenate %33, %36 in 0 : vector<1x128xf32>, vector<1x128xf32> -> vector<2x128xf32>
    %c0_i32_52 = arith.constant 0 : i32
    %38 = arith.cmpi eq, %arg0, %c0_i32_52 : i32
    %39 = arith.extui %38 : i1 to i32
    %c0_i32_53 = arith.constant 0 : i32
    %40 = arith.cmpi ne, %39, %c0_i32_53 : i32
    scf.if %40 {
      %cst_58 = arith.constant 0.000000e+00 : f32
      %44 = vector.broadcast %cst_58 : f32 to vector<2x128xf32>
      %c0_59 = arith.constant 0 : index
      %c0_60 = arith.constant 0 : index
      %45 = vector.load %arg5[%c0_59, %c0_60] : memref<2x128xf32, #tpu.memory_space<vmem>>, vector<2x128xf32>
      tpu.vector_store %arg5[%c0_59, %c0_60], %44 {strides = array<i32>} : memref<2x128xf32, #tpu.memory_space<vmem>>, vector<2x128xf32>,
    } else {
    }
    %c0_54 = arith.constant 0 : index
    %c0_55 = arith.constant 0 : index
    %41 = vector.load %arg5[%c0_54, %c0_55] : memref<2x128xf32, #tpu.memory_space<vmem>>, vector<2x128xf32>
    %42 = arith.addf %41, %37 : vector<2x128xf32>
    %c0_56 = arith.constant 0 : index
    %c0_57 = arith.constant 0 : index
    %43 = vector.load %arg5[%c0_56, %c0_57] : memref<2x128xf32, #tpu.memory_space<vmem>>, vector<2x128xf32>
    tpu.vector_store %arg5[%c0_56, %c0_57], %42 {strides = array<i32>} : memref<2x128xf32, #tpu.memory_space<vmem>>, vector<2x128xf32>,
    return
  }
  func.func @transform_0(%arg0: i32) -> (i32, i32, i32, i32) {
    %c0_i32 = arith.constant 0 : i32
    %c0_i32_0 = arith.constant 0 : i32
    %c0_i32_1 = arith.constant 0 : i32
    %c0_i32_2 = arith.constant 0 : i32
    return %arg0, %c0_i32, %c0_i32_0, %c0_i32_1 : i32, i32, i32, i32
  }
  func.func @transform_1(%arg0: i32) -> (i32, i32) {
    %c0_i32 = arith.constant 0 : i32
    %c0_i32_0 = arith.constant 0 : i32
    %c0_i32_1 = arith.constant 0 : i32
    return %c0_i32, %c0_i32_0 : i32, i32
  }
  func.func @transform_2(%arg0: i32) -> (i32, i32) {
    %c0_i32 = arith.constant 0 : i32
    %c0_i32_0 = arith.constant 0 : i32
    %c0_i32_1 = arith.constant 0 : i32
    return %c0_i32, %c0_i32_0 : i32, i32
  }
  func.func @transform_3(%arg0: i32) -> (i32, i32, i32, i32) {
    %c0_i32 = arith.constant 0 : i32
    %c0_i32_0 = arith.constant 0 : i32
    %c0_i32_1 = arith.constant 0 : i32
    %c0_i32_2 = arith.constant 0 : i32
    return %arg0, %c0_i32, %c0_i32_0, %c0_i32_1 : i32, i32, i32, i32
  }
  func.func @transform_4(%arg0: i32) -> (i32, i32) {
    %c0_i32 = arith.constant 0 : i32
    %c0_i32_0 = arith.constant 0 : i32
    %c0_i32_1 = arith.constant 0 : i32
    return %c0_i32, %c0_i32_0 : i32, i32
  }
}

module attributes {stable_mosaic.version = 11 : i64} {
  func.func @_bn2_add_relu_kernel(%arg0: i32, %arg1: memref<1x16x16x128xf32, #tpu.memory_space<vmem>>, %arg2: memref<2x128xf32, #tpu.memory_space<vmem>>, %arg3: memref<1x128xf32, #tpu.memory_space<vmem>>, %arg4: memref<1x128xf32, #tpu.memory_space<vmem>>, %arg5: memref<1x16x16x128xf32, #tpu.memory_space<vmem>>, %arg6: memref<1x16x16x128xf32, #tpu.memory_space<vmem>>) attributes {dimension_semantics = [#tpu.dimension_semantics<parallel>], iteration_bounds = array<i64: 2>, scalar_prefetch = 0 : i64, scratch_operands = 0 : i64, tpu.core_type = #tpu.core_type<tc>, window_params = [{transform_indices = @transform_0, window_bounds = array<i64: 1, 16, 16, 128>}, {pipeline_mode = #tpu.pipeline_mode<synchronous>, transform_indices = @transform_1, window_bounds = array<i64: 2, 128>}, {pipeline_mode = #tpu.pipeline_mode<synchronous>, transform_indices = @transform_2, window_bounds = array<i64: 1, 128>}, {pipeline_mode = #tpu.pipeline_mode<synchronous>, transform_indices = @transform_3, window_bounds = array<i64: 1, 128>}, {transform_indices = @transform_4, window_bounds = array<i64: 1, 16, 16, 128>}, {transform_indices = @transform_5, window_bounds = array<i64: 1, 16, 16, 128>}]} {
    %c0 = arith.constant 0 : index
    %c0_0 = arith.constant 0 : index
    %0 = vector.load %arg2[%c0, %c0_0] : memref<2x128xf32, #tpu.memory_space<vmem>>, vector<1x128xf32>
    %cst = arith.constant 0.001953125 : f32
    %1 = vector.broadcast %cst : f32 to vector<1x128xf32>
    %2 = arith.mulf %0, %1 : vector<1x128xf32>
    %c1 = arith.constant 1 : index
    %c0_1 = arith.constant 0 : index
    %3 = vector.load %arg2[%c1, %c0_1] : memref<2x128xf32, #tpu.memory_space<vmem>>, vector<1x128xf32>
    %cst_2 = arith.constant 0.001953125 : f32
    %4 = vector.broadcast %cst_2 : f32 to vector<1x128xf32>
    %5 = arith.mulf %3, %4 : vector<1x128xf32>
    %6 = arith.mulf %2, %2 : vector<1x128xf32>
    %7 = arith.subf %5, %6 : vector<1x128xf32>
    %c0_3 = arith.constant 0 : index
    %c0_4 = arith.constant 0 : index
    %8 = vector.load %arg3[%c0_3, %c0_4] : memref<1x128xf32, #tpu.memory_space<vmem>>, vector<1x128xf32>
    %cst_5 = arith.constant 9.99999974E-6 : f32
    %9 = vector.broadcast %cst_5 : f32 to vector<1x128xf32>
    %10 = arith.addf %7, %9 : vector<1x128xf32>
    %11 = math.rsqrt %10 : vector<1x128xf32>
    %12 = arith.mulf %8, %11 : vector<1x128xf32>
    %c0_6 = arith.constant 0 : index
    %c0_7 = arith.constant 0 : index
    %13 = vector.load %arg4[%c0_6, %c0_7] : memref<1x128xf32, #tpu.memory_space<vmem>>, vector<1x128xf32>
    %14 = arith.mulf %2, %12 : vector<1x128xf32>
    %15 = arith.subf %13, %14 : vector<1x128xf32>
    %c0_8 = arith.constant 0 : index
    %c0_9 = arith.constant 0 : index
    %c0_10 = arith.constant 0 : index
    %c0_11 = arith.constant 0 : index
    %16 = vector.load %arg1[%c0_8, %c0_9, %c0_10, %c0_11] : memref<1x16x16x128xf32, #tpu.memory_space<vmem>>, vector<1x16x16x128xf32>
    %17 = vector.shape_cast %12 : vector<1x128xf32> to vector<1x1x1x128xf32>
    %18 = vector.broadcast %17 : vector<1x1x1x128xf32> to vector<1x16x16x128xf32>
    %19 = arith.mulf %16, %18 : vector<1x16x16x128xf32>
    %20 = vector.shape_cast %15 : vector<1x128xf32> to vector<1x1x1x128xf32>
    %21 = vector.broadcast %20 : vector<1x1x1x128xf32> to vector<1x16x16x128xf32>
    %22 = arith.addf %19, %21 : vector<1x16x16x128xf32>
    %c0_12 = arith.constant 0 : index
    %c0_13 = arith.constant 0 : index
    %c0_14 = arith.constant 0 : index
    %c0_15 = arith.constant 0 : index
    %23 = vector.load %arg5[%c0_12, %c0_13, %c0_14, %c0_15] : memref<1x16x16x128xf32, #tpu.memory_space<vmem>>, vector<1x16x16x128xf32>
    %24 = arith.addf %22, %23 : vector<1x16x16x128xf32>
    %cst_16 = arith.constant 0.000000e+00 : f32
    %25 = vector.broadcast %cst_16 : f32 to vector<1x16x16x128xf32>
    %26 = arith.maximumf %24, %25 : vector<1x16x16x128xf32>
    %c0_17 = arith.constant 0 : index
    %c0_18 = arith.constant 0 : index
    %c0_19 = arith.constant 0 : index
    %c0_20 = arith.constant 0 : index
    %27 = vector.load %arg6[%c0_17, %c0_18, %c0_19, %c0_20] : memref<1x16x16x128xf32, #tpu.memory_space<vmem>>, vector<1x16x16x128xf32>
    tpu.vector_store %arg6[%c0_17, %c0_18, %c0_19, %c0_20], %26 {strides = array<i32>} : memref<1x16x16x128xf32, #tpu.memory_space<vmem>>, vector<1x16x16x128xf32>,
    return
  }
  func.func @transform_0(%arg0: i32) -> (i32, i32, i32, i32) {
    %c0_i32 = arith.constant 0 : i32
    %c0_i32_0 = arith.constant 0 : i32
    %c0_i32_1 = arith.constant 0 : i32
    %c0_i32_2 = arith.constant 0 : i32
    return %arg0, %c0_i32, %c0_i32_0, %c0_i32_1 : i32, i32, i32, i32
  }
  func.func @transform_1(%arg0: i32) -> (i32, i32) {
    %c0_i32 = arith.constant 0 : i32
    %c0_i32_0 = arith.constant 0 : i32
    %c0_i32_1 = arith.constant 0 : i32
    return %c0_i32, %c0_i32_0 : i32, i32
  }
  func.func @transform_2(%arg0: i32) -> (i32, i32) {
    %c0_i32 = arith.constant 0 : i32
    %c0_i32_0 = arith.constant 0 : i32
    %c0_i32_1 = arith.constant 0 : i32
    return %c0_i32, %c0_i32_0 : i32, i32
  }
  func.func @transform_3(%arg0: i32) -> (i32, i32) {
    %c0_i32 = arith.constant 0 : i32
    %c0_i32_0 = arith.constant 0 : i32
    %c0_i32_1 = arith.constant 0 : i32
    return %c0_i32, %c0_i32_0 : i32, i32
  }
  func.func @transform_4(%arg0: i32) -> (i32, i32, i32, i32) {
    %c0_i32 = arith.constant 0 : i32
    %c0_i32_0 = arith.constant 0 : i32
    %c0_i32_1 = arith.constant 0 : i32
    %c0_i32_2 = arith.constant 0 : i32
    return %arg0, %c0_i32, %c0_i32_0, %c0_i32_1 : i32, i32, i32, i32
  }
  func.func @transform_5(%arg0: i32) -> (i32, i32, i32, i32) {
    %c0_i32 = arith.constant 0 : i32
    %c0_i32_0 = arith.constant 0 : i32
    %c0_i32_1 = arith.constant 0 : i32
    %c0_i32_2 = arith.constant 0 : i32
    return %arg0, %c0_i32, %c0_i32_0, %c0_i32_1 : i32, i32, i32, i32
  }
}

</mosaic_0001>

<llo_original>
// kernel: residual_forward_nhwc.5
$region0: #{residual_forward_nhwc.5}
  #allocation0 [shape = 'u32[]', space=smem, size = 0x4, offset = 0x4, fixed_abs, tag = 'smem constant byte address 0x4 - core index']
  #allocation1 [shape = 'u32[144,128]{1,0:T(1,128)}', space=vmem, size = 0x12000, scoped, tag = 'internal scratch']
  %s0 = inlined_call_operand.vmem [shape: f32[2,16,16,128], index: 0, kind: input, shape index: {}]
  %s1 = inlined_call_operand.vmem [shape: f32[2,128], index: 1, kind: input, shape index: {}]
  %s2 = inlined_call_operand.vmem [shape: f32[1,128], index: 2, kind: input, shape index: {}]
  %s3 = inlined_call_operand.vmem [shape: f32[1,128], index: 3, kind: input, shape index: {}]
  %s4 = inlined_call_operand.vmem [shape: f32[2,16,16,128], index: 4, kind: input, shape index: {}]
  %s5 = inlined_call_operand.vmem [shape: f32[2,16,16,128], index: 5, kind: output, shape index: {}]
  %s6 = sld [smem:[#allocation0]]
  $region53: #{residual_forward_nhwc.5} parent=0
    _
  %s8 = ssub.s32 1, %s6
  %s9 = scalar_select 0, %s8, %s6
  loop: start=0, step=1, limit=4
  $region2: #{residual_forward_nhwc.5} parent=0 // loop_pre_header
    _
  $region3: #{residual_forward_nhwc.5} parent=0 // loop_header
    %s11 = sphi 0, %s15
    %p12 = scmp.ge.s32.totalorder %s11, 4
    %s21 = sphi 0, %s23
    %s24 = sphi 0, %s21
    %s25 = sphi 0, %s24
    %s41 = sphi 0, %s25
    %s45 = sphi 0, %s45
    %s47 = sphi 0, %s45
    %s48 = sphi 0, %s47
    %s62 = sphi 0, %s48
    %s66 = sphi 0, %s66
    %s68 = sphi 0, %s66
    %s69 = sphi 0, %s68
    %s83 = sphi 0, %s69
    %s87 = sphi 0, %s87
    %s89 = sphi 0, %s87
    %s90 = sphi 0, %s89
    %s104 = sphi 0, %s90
    %s110 = sphi 0, %s112
    %s113 = sphi 0, %s110
    %s114 = sphi 0, %s113
    %s130 = sphi 0, %s114
    %s136 = sphi 0, %s138
    %s139 = sphi 0, %s136
    %s140 = sphi 0, %s139
    %s156 = sphi 0, %s140
  $region4: #{residual_forward_nhwc.5} parent=0 // loop_header_branch
    %14 = sbr.rel (%p12) target = $region8
  $region5: #{residual_forward_nhwc.5} parent=0 // loop_body
    %s16 = ssub.s32 %s11, 1
    %s17 = ssub.s32 %s11, 2
    %s18 = sadd.s32 %s11, 1
    %s19 = ssub.s32 %s11, %s18
    %p20 = scmp.eq.s32.totalorder %s19, 0
    %s22 = sadd.s32 %s21, 1
    %s23 = scalar_select %p20, %s21, %s22
    %p26 = pneg %p20
    %p27 = scmp.eq.s32.totalorder %s11, 1
    %p28 = por %p26, %p27
    %p29 = scmp.ne.s32.totalorder %s21, %s24
    %p30 = scmp.eq.s32.totalorder %s11, 0
    %p31 = por %p29, %p30
    %p32 = scmp.ne.s32.totalorder %s21, %s24
    %p33 = scmp.eq.s32.totalorder %s16, 1
    %p34 = por %p32, %p33
    %p35 = scmp.ne.s32.totalorder %s24, %s25
    %p36 = scmp.eq.s32.totalorder %s16, 0
    %p37 = por %p35, %p36
    %p38 = scmp.ne.s32.totalorder %s24, %s25
    %p39 = scmp.eq.s32.totalorder %s17, 1
    %p40 = por %p38, %p39
    %p42 = scmp.ne.s32.totalorder %s25, %s41
    %p43 = scmp.eq.s32.totalorder %s17, 0
    %p44 = por %p42, %p43
    %s46 = sadd.s32 %s45, 1
    %p49 = scmp.eq.s32.totalorder %s11, 1
    %p50 = scmp.ne.s32.totalorder %s45, %s47
    %p51 = scmp.eq.s32.totalorder %s11, 0
    %p52 = por %p50, %p51
    %p53 = scmp.ne.s32.totalorder %s45, %s47
    %p54 = scmp.eq.s32.totalorder %s16, 1
    %p55 = por %p53, %p54
    %p56 = scmp.ne.s32.totalorder %s47, %s48
    %p57 = scmp.eq.s32.totalorder %s16, 0
    %p58 = por %p56, %p57
    %p59 = scmp.ne.s32.totalorder %s47, %s48
    %p60 = scmp.eq.s32.totalorder %s17, 1
    %p61 = por %p59, %p60
    %p63 = scmp.ne.s32.totalorder %s48, %s62
    %p64 = scmp.eq.s32.totalorder %s17, 0
    %p65 = por %p63, %p64
    %s67 = sadd.s32 %s66, 1
    %p70 = scmp.eq.s32.totalorder %s11, 1
    %p71 = scmp.ne.s32.totalorder %s66, %s68
    %p72 = scmp.eq.s32.totalorder %s11, 0
    %p73 = por %p71, %p72
    %p74 = scmp.ne.s32.totalorder %s66, %s68
    %p75 = scmp.eq.s32.totalorder %s16, 1
    %p76 = por %p74, %p75
    %p77 = scmp.ne.s32.totalorder %s68, %s69
    %p78 = scmp.eq.s32.totalorder %s16, 0
    %p79 = por %p77, %p78
    %p80 = scmp.ne.s32.totalorder %s68, %s69
    %p81 = scmp.eq.s32.totalorder %s17, 1
    %p82 = por %p80, %p81
    %p84 = scmp.ne.s32.totalorder %s69, %s83
    %p85 = scmp.eq.s32.totalorder %s17, 0
    %p86 = por %p84, %p85
    %s88 = sadd.s32 %s87, 1
    %p91 = scmp.eq.s32.totalorder %s11, 1
    %p92 = scmp.ne.s32.totalorder %s87, %s89
    %p93 = scmp.eq.s32.totalorder %s11, 0
    %p94 = por %p92, %p93
    %p95 = scmp.ne.s32.totalorder %s87, %s89
    %p96 = scmp.eq.s32.totalorder %s16, 1
    %p97 = por %p95, %p96
    %p98 = scmp.ne.s32.totalorder %s89, %s90
    %p99 = scmp.eq.s32.totalorder %s16, 0
    %p100 = por %p98, %p99
    %p101 = scmp.ne.s32.totalorder %s89, %s90
    %p102 = scmp.eq.s32.totalorder %s17, 1
    %p103 = por %p101, %p102
    %p105 = scmp.ne.s32.totalorder %s90, %s104
    %p106 = scmp.eq.s32.totalorder %s17, 0
    %p107 = por %p105, %p106
    %s108 = ssub.s32 %s11, %s18
    %p109 = scmp.eq.s32.totalorder %s108, 0
    %s111 = sadd.s32 %s110, 1
    %s112 = scalar_select %p109, %s110, %s111
    %p115 = pneg %p109
    %p116 = scmp.eq.s32.totalorder %s11, 1
    %p117 = por %p115, %p116
    %p118 = scmp.ne.s32.totalorder %s110, %s113
    %p119 = scmp.eq.s32.totalorder %s11, 0
    %p120 = por %p118, %p119
    %p121 = scmp.ne.s32.totalorder %s110, %s113
    %p122 = scmp.eq.s32.totalorder %s16, 1
    %p123 = por %p121, %p122
    %p124 = scmp.ne.s32.totalorder %s113, %s114
    %p125 = scmp.eq.s32.totalorder %s16, 0
    %p126 = por %p124, %p125
    %p127 = scmp.ne.s32.totalorder %s113, %s114
    %p128 = scmp.eq.s32.totalorder %s17, 1
    %p129 = por %p127, %p128
    %p131 = scmp.ne.s32.totalorder %s114, %s130
    %p132 = scmp.eq.s32.totalorder %s17, 0
    %p133 = por %p131, %p132
    %s134 = ssub.s32 %s11, %s18
    %p135 = scmp.eq.s32.totalorder %s134, 0
    %s137 = sadd.s32 %s136, 1
    %s138 = scalar_select %p135, %s136, %s137
    %p141 = pneg %p135
    %p142 = scmp.eq.s32.totalorder %s11, 1
    %p143 = por %p141, %p142
    %p144 = scmp.ne.s32.totalorder %s136, %s139
    %p145 = scmp.eq.s32.totalorder %s11, 0
    %p146 = por %p144, %p145
    %p147 = scmp.ne.s32.totalorder %s136, %s139
    %p148 = scmp.eq.s32.totalorder %s16, 1
    %p149 = por %p147, %p148
    %p150 = scmp.ne.s32.totalorder %s139, %s140
    %p151 = scmp.eq.s32.totalorder %s16, 0
    %p152 = por %p150, %p151
    %p153 = scmp.ne.s32.totalorder %s139, %s140
    %p154 = scmp.eq.s32.totalorder %s17, 1
    %p155 = por %p153, %p154
    %p157 = scmp.ne.s32.totalorder %s140, %s156
    %p158 = scmp.eq.s32.totalorder %s17, 0
    %p159 = por %p157, %p158
    %p160 = scmp.le.s32.totalorder 1, %s11
    %p161 = scmp.lt.s32.totalorder %s11, 3
    %p162 = pnand %p160, %p161
    %p163 = pneg %p162
    // Predicated region
    $region9: #{residual_forward_nhwc.5} parent=5 // pred_check
      _
    $region10: #{residual_forward_nhwc.5} parent=5 // pred_check_branch
      %165 = sbr.rel (%p162) target = $region12
    $region11: #{residual_forward_nhwc.5} parent=5 // pred_region
      %s166 = ssub.s32 %s11, 1
      // Predicated region
      $region13: #{residual_forward_nhwc.5} parent=11 // pred_check
        %p167 = pneg %p58
      $region14: #{residual_forward_nhwc.5} parent=11 // pred_check_branch
        %169 = sbr.rel (%p167) target = $region16
      $region15: #{residual_forward_nhwc.5} parent=11 // pred_region
        _
      $region16: #{residual_forward_nhwc.5} parent=11 // pred_fallthru
        _
      // Predicated region
      $region17: #{residual_forward_nhwc.5} parent=11 // pred_check
        %p170 = pneg %p79
      $region18: #{residual_forward_nhwc.5} parent=11 // pred_check_branch
        %172 = sbr.rel (%p170) target = $region20
      $region19: #{residual_forward_nhwc.5} parent=11 // pred_region
        _
      $region20: #{residual_forward_nhwc.5} parent=11 // pred_fallthru
        _
      // Predicated region
      $region21: #{residual_forward_nhwc.5} parent=11 // pred_check
        %p173 = pneg %p100
      $region22: #{residual_forward_nhwc.5} parent=11 // pred_check_branch
        %175 = sbr.rel (%p173) target = $region24
      $region23: #{residual_forward_nhwc.5} parent=11 // pred_region
        _
      $region24: #{residual_forward_nhwc.5} parent=11 // pred_fallthru
        _
    $region12: #{residual_forward_nhwc.5} parent=5 // pred_fallthru
      _
    %p176 = scmp.lt.s32.totalorder %s11, 2
    // Predicated region
    $region25: #{residual_forward_nhwc.5} parent=5 // pred_check
      %p177 = pneg %p176
    $region26: #{residual_forward_nhwc.5} parent=5 // pred_check_branch
      %179 = sbr.rel (%p177) target = $region28
    $region27: #{residual_forward_nhwc.5} parent=5 // pred_region
      // Predicated region
      $region29: #{residual_forward_nhwc.5} parent=27 // pred_check
        %p180 = pneg %p31
      $region30: #{residual_forward_nhwc.5} parent=27 // pred_check_branch
        %182 = sbr.rel (%p180) target = $region32
      $region31: #{residual_forward_nhwc.5} parent=27 // pred_region
        %p183 = scmp.lt.s32.totalorder %s11, 1
        %s184 = scalar_select %p183, %s11, 1
        %s185 = smul.addr %s184, 32
        %s186 = smul.addr %s185, 8
        %s187 = scalar_lea.vmem %s0, %s186
      $region32: #{residual_forward_nhwc.5} parent=27 // pred_fallthru
        _
      // Predicated region
      $region33: #{residual_forward_nhwc.5} parent=27 // pred_check
        %p188 = pneg %p120
      $region34: #{residual_forward_nhwc.5} parent=27 // pred_check_branch
        %190 = sbr.rel (%p188) target = $region36
      $region35: #{residual_forward_nhwc.5} parent=27 // pred_region
        %p191 = scmp.lt.s32.totalorder %s11, 1
        %s192 = scalar_select %p191, %s11, 1
        %s193 = smul.addr %s192, 32
        %s194 = smul.addr %s193, 8
        %s195 = scalar_lea.vmem %s4, %s194
      $region36: #{residual_forward_nhwc.5} parent=27 // pred_fallthru
        _
    $region28: #{residual_forward_nhwc.5} parent=5 // pred_fallthru
      _
    %p196 = scmp.le.s32.totalorder 1, %s11
    %p197 = scmp.lt.s32.totalorder %s11, 3
    %p198 = pnand %p196, %p197
    %p199 = pneg %p198
    // Predicated region
    $region37: #{residual_forward_nhwc.5} parent=5 // pred_check
      _
    $region38: #{residual_forward_nhwc.5} parent=5 // pred_check_branch
      %201 = sbr.rel (%p198) target = $region40
    $region39: #{residual_forward_nhwc.5} parent=5 // pred_region
      %s202 = ssub.s32 %s11, 1
      %p203 = scmp.lt.s32.totalorder %s16, 1
      %s204 = scalar_select %p203, %s16, 1
      %s205 = smul.addr %s204, 32
      %s206 = smul.addr %s205, 8
      %s207 = scalar_lea.vmem %s0, %s206
      %p208 = pneg %p37
      %p209 = pneg %p34
      %p210 = pneg %p58
      %p211 = pneg %p55
      %p212 = pneg %p79
      %p213 = pneg %p76
      %p214 = pneg %p100
      %p215 = pneg %p97
      %p216 = scmp.lt.s32.totalorder %s16, 1
      %s217 = scalar_select %p216, %s16, 1
      %s218 = smul.addr %s217, 32
      %s219 = smul.addr %s218, 8
      %s220 = scalar_lea.vmem %s4, %s219
      %p221 = pneg %p126
      %p222 = pneg %p123
      %p223 = pneg %p152
      %p224 = pneg %p149
      %p225 = scmp.lt.s32.totalorder %s16, 1
      %s226 = scalar_select %p225, %s16, 1
      %s227 = smul.addr %s226, 32
      %s228 = smul.addr %s227, 8
      %s229 = scalar_lea.vmem %s5, %s228
      %p230 = scmp.lt.s32.totalorder %s16, 1
      %s231 = scalar_select %p230, %s16, 1
      %s232 = smul.addr %s231, 32
      %s233 = smul.addr %s232, 8
      %s234 = scalar_lea.vmem %s0, %s233
      %p235 = scmp.lt.s32.totalorder %s16, 1
      %s236 = scalar_select %p235, %s16, 1
      %s237 = smul.addr %s236, 32
      %s238 = smul.addr %s237, 8
      %s239 = scalar_lea.vmem %s4, %s238
      %p240 = scmp.lt.s32.totalorder %s16, 1
      %s241 = scalar_select %p240, %s16, 1
      %s242 = smul.addr %s241, 32
      %s243 = smul.addr %s242, 8
      %s244 = scalar_lea.vmem %s5, %s243
      %v245 = vld [vmem:[%s1] sm:$0x1]
      %v246 = vmul.f32 %v245, 0.001953125
      %v247 = vld [vmem:[%s1 + $0x1] sm:$0x1]
      %v248 = vmul.f32 %v247, 0.001953125
      %v249 = vmul.f32 %v246, %v246
      %v250 = vsub.f32 %v248, %v249
      %v251 = vld [vmem:[%s2] sm:$0x1]
      %v252 = vadd.f32 %v250, 1e-05
      %v253 = vrsqrt.pop %v252
      %v254 = vmul.f32 %v251, %v253
      %v255 = vld [vmem:[%s3] sm:$0x1]
      %v256 = vmul.f32 %v246, %v254
      %v257 = vsub.f32 %v255, %v256
      %v258 = vld [vmem:[%s234] sm:$0xff]
      %v259 = vld [vmem:[%s234 + $0x8] sm:$0xff]
      %v260 = vld [vmem:[%s234 + $0x10] sm:$0xff]
      %v261 = vld [vmem:[%s234 + $0x18] sm:$0xff]
      %v262 = vld [vmem:[%s234 + $0x20] sm:$0xff]
      %v263 = vld [vmem:[%s234 + $0x28] sm:$0xff]
      %v264 = vld [vmem:[%s234 + $0x30] sm:$0xff]
      %v265 = vld [vmem:[%s234 + $0x38] sm:$0xff]
      %v266 = vld [vmem:[%s234 + $0x40] sm:$0xff]
      %v267 = vld [vmem:[%s234 + $0x48] sm:$0xff]
      %v268 = vld [vmem:[%s234 + $0x50] sm:$0xff]
      %v269 = vld [vmem:[%s234 + $0x58] sm:$0xff]
      %v270 = vld [vmem:[%s234 + $0x60] sm:$0xff]
      %v271 = vld [vmem:[%s234 + $0x68] sm:$0xff]
      %v272 = vld [vmem:[%s234 + $0x70] sm:$0xff]
      %v273 = vld [vmem:[%s234 + $0x78] sm:$0xff]
      %v274 = vld [vmem:[%s234 + $0x80] sm:$0xff]
      %v275 = vld [vmem:[%s234 + $0x88] sm:$0xff]
      %v276 = vld [vmem:[%s234 + $0x90] sm:$0xff]
      %v277 = vld [vmem:[%s234 + $0x98] sm:$0xff]
      %v278 = vld [vmem:[%s234 + $0xa0] sm:$0xff]
      %v279 = vld [vmem:[%s234 + $0xa8] sm:$0xff]
      %v280 = vld [vmem:[%s234 + $0xb0] sm:$0xff]
      %v281 = vld [vmem:[%s234 + $0xb8] sm:$0xff]
      %v282 = vld [vmem:[%s234 + $0xc0] sm:$0xff]
      %v283 = vld [vmem:[%s234 + $0xc8] sm:$0xff]
      %v284 = vld [vmem:[%s234 + $0xd0] sm:$0xff]
      %v285 = vld [vmem:[%s234 + $0xd8] sm:$0xff]
      %v286 = vld [vmem:[%s234 + $0xe0] sm:$0xff]
      %v287 = vld [vmem:[%s234 + $0xe8] sm:$0xff]
      %v288 = vld [vmem:[%s234 + $0xf0] sm:$0xff]
      %v289 = vld [vmem:[%s234 + $0xf8] sm:$0xff]
      %v291 = vlaneseq
      %v292 = vshrl.u32 %v291, 7
      %v293 = vsub.s32 0, %v292
      %v294 = vrot.slane %v254, %v293
      %v296 = vmul.f32 %v258, %v294
      %v297 = vmul.f32 %v259, %v294
      %v298 = vmul.f32 %v260, %v294
      %v299 = vmul.f32 %v261, %v294
      %v300 = vmul.f32 %v262, %v294
      %v301 = vmul.f32 %v263, %v294
      %v302 = vmul.f32 %v264, %v294
      %v303 = vmul.f32 %v265, %v294
      %v304 = vmul.f32 %v266, %v294
      %v305 = vmul.f32 %v267, %v294
      %v306 = vmul.f32 %v268, %v294
      %v307 = vmul.f32 %v269, %v294
      %v308 = vmul.f32 %v270, %v294
      %v309 = vmul.f32 %v271, %v294
      %v310 = vmul.f32 %v272, %v294
      %v311 = vmul.f32 %v273, %v294
      %v312 = vmul.f32 %v274, %v294
      %v313 = vmul.f32 %v275, %v294
      %v314 = vmul.f32 %v276, %v294
      %v315 = vmul.f32 %v277, %v294
      %v316 = vmul.f32 %v278, %v294
      %v317 = vmul.f32 %v279, %v294
      %v318 = vmul.f32 %v280, %v294
      %v319 = vmul.f32 %v281, %v294
      %v320 = vmul.f32 %v282, %v294
      %v321 = vmul.f32 %v283, %v294
      %v322 = vmul.f32 %v284, %v294
      %v323 = vmul.f32 %v285, %v294
      %v324 = vmul.f32 %v286, %v294
      %v325 = vmul.f32 %v287, %v294
      %v326 = vmul.f32 %v288, %v294
      %v327 = vmul.f32 %v289, %v294
      %v329 = vlaneseq
      %v330 = vshrl.u32 %v329, 7
      %v331 = vsub.s32 0, %v330
      %v332 = vrot.slane %v257, %v331
      %v334 = vadd.f32 %v296, %v332
      %v335 = vadd.f32 %v297, %v332
      %v336 = vadd.f32 %v298, %v332
      %v337 = vadd.f32 %v299, %v332
      %v338 = vadd.f32 %v300, %v332
      %v339 = vadd.f32 %v301, %v332
      %v340 = vadd.f32 %v302, %v332
      %v341 = vadd.f32 %v303, %v332
      %v342 = vadd.f32 %v304, %v332
      %v343 = vadd.f32 %v305, %v332
      %v344 = vadd.f32 %v306, %v332
      %v345 = vadd.f32 %v307, %v332
      %v346 = vadd.f32 %v308, %v332
      %v347 = vadd.f32 %v309, %v332
      %v348 = vadd.f32 %v310, %v332
      %v349 = vadd.f32 %v311, %v332
      %v350 = vadd.f32 %v312, %v332
      %v351 = vadd.f32 %v313, %v332
      %v352 = vadd.f32 %v314, %v332
      %v353 = vadd.f32 %v315, %v332
      %v354 = vadd.f32 %v316, %v332
      %v355 = vadd.f32 %v317, %v332
      %v356 = vadd.f32 %v318, %v332
      %v357 = vadd.f32 %v319, %v332
      %v358 = vadd.f32 %v320, %v332
      %v359 = vadd.f32 %v321, %v332
      %v360 = vadd.f32 %v322, %v332
      %v361 = vadd.f32 %v323, %v332
      %v362 = vadd.f32 %v324, %v332
      %v363 = vadd.f32 %v325, %v332
      %v364 = vadd.f32 %v326, %v332
      %v365 = vadd.f32 %v327, %v332
      %v366 = vld [vmem:[%s239] sm:$0xff]
      %v367 = vld [vmem:[%s239 + $0x8] sm:$0xff]
      %v368 = vld [vmem:[%s239 + $0x10] sm:$0xff]
      %v369 = vld [vmem:[%s239 + $0x18] sm:$0xff]
      %v370 = vld [vmem:[%s239 + $0x20] sm:$0xff]
      %v371 = vld [vmem:[%s239 + $0x28] sm:$0xff]
      %v372 = vld [vmem:[%s239 + $0x30] sm:$0xff]
      %v373 = vld [vmem:[%s239 + $0x38] sm:$0xff]
      %v374 = vld [vmem:[%s239 + $0x40] sm:$0xff]
      %v375 = vld [vmem:[%s239 + $0x48] sm:$0xff]
      %v376 = vld [vmem:[%s239 + $0x50] sm:$0xff]
      %v377 = vld [vmem:[%s239 + $0x58] sm:$0xff]
      %v378 = vld [vmem:[%s239 + $0x60] sm:$0xff]
      %v379 = vld [vmem:[%s239 + $0x68] sm:$0xff]
      %v380 = vld [vmem:[%s239 + $0x70] sm:$0xff]
      %v381 = vld [vmem:[%s239 + $0x78] sm:$0xff]
      %v382 = vld [vmem:[%s239 + $0x80] sm:$0xff]
      %v383 = vld [vmem:[%s239 + $0x88] sm:$0xff]
      %v384 = vld [vmem:[%s239 + $0x90] sm:$0xff]
      %v385 = vld [vmem:[%s239 + $0x98] sm:$0xff]
      %v386 = vld [vmem:[%s239 + $0xa0] sm:$0xff]
      %v387 = vld [vmem:[%s239 + $0xa8] sm:$0xff]
      %v388 = vld [vmem:[%s239 + $0xb0] sm:$0xff]
      %v389 = vld [vmem:[%s239 + $0xb8] sm:$0xff]
      %v390 = vld [vmem:[%s239 + $0xc0] sm:$0xff]
      %v391 = vld [vmem:[%s239 + $0xc8] sm:$0xff]
      %v392 = vld [vmem:[%s239 + $0xd0] sm:$0xff]
      %v393 = vld [vmem:[%s239 + $0xd8] sm:$0xff]
      %v394 = vld [vmem:[%s239 + $0xe0] sm:$0xff]
      %v395 = vld [vmem:[%s239 + $0xe8] sm:$0xff]
      %v396 = vld [vmem:[%s239 + $0xf0] sm:$0xff]
      %v397 = vld [vmem:[%s239 + $0xf8] sm:$0xff]
      %v398 = vadd.f32 %v334, %v366
      %v399 = vadd.f32 %v335, %v367
      %v400 = vadd.f32 %v336, %v368
      %v401 = vadd.f32 %v337, %v369
      %v402 = vadd.f32 %v338, %v370
      %v403 = vadd.f32 %v339, %v371
      %v404 = vadd.f32 %v340, %v372
      %v405 = vadd.f32 %v341, %v373
      %v406 = vadd.f32 %v342, %v374
      %v407 = vadd.f32 %v343, %v375
      %v408 = vadd.f32 %v344, %v376
      %v409 = vadd.f32 %v345, %v377
      %v410 = vadd.f32 %v346, %v378
      %v411 = vadd.f32 %v347, %v379
      %v412 = vadd.f32 %v348, %v380
      %v413 = vadd.f32 %v349, %v381
      %v414 = vadd.f32 %v350, %v382
      %v415 = vadd.f32 %v351, %v383
      %v416 = vadd.f32 %v352, %v384
      %v417 = vadd.f32 %v353, %v385
      %v418 = vadd.f32 %v354, %v386
      %v419 = vadd.f32 %v355, %v387
      %v420 = vadd.f32 %v356, %v388
      %v421 = vadd.f32 %v357, %v389
      %v422 = vadd.f32 %v358, %v390
      %v423 = vadd.f32 %v359, %v391
      %v424 = vadd.f32 %v360, %v392
      %v425 = vadd.f32 %v361, %v393
      %v426 = vadd.f32 %v362, %v394
      %v427 = vadd.f32 %v363, %v395
      %v428 = vadd.f32 %v364, %v396
      %v429 = vadd.f32 %v365, %v397
      %v430 = vmax.f32 %v398, 0.0
      %v431 = vmax.f32 %v399, 0.0
      %v432 = vmax.f32 %v400, 0.0
      %v433 = vmax.f32 %v401, 0.0
      %v434 = vmax.f32 %v402, 0.0
      %v435 = vmax.f32 %v403, 0.0
      %v436 = vmax.f32 %v404, 0.0
      %v437 = vmax.f32 %v405, 0.0
      %v438 = vmax.f32 %v406, 0.0
      %v439 = vmax.f32 %v407, 0.0
      %v440 = vmax.f32 %v408, 0.0
      %v441 = vmax.f32 %v409, 0.0
      %v442 = vmax.f32 %v410, 0.0
      %v443 = vmax.f32 %v411, 0.0
      %v444 = vmax.f32 %v412, 0.0
      %v445 = vmax.f32 %v413, 0.0
      %v446 = vmax.f32 %v414, 0.0
      %v447 = vmax.f32 %v415, 0.0
      %v448 = vmax.f32 %v416, 0.0
      %v449 = vmax.f32 %v417, 0.0
      %v450 = vmax.f32 %v418, 0.0
      %v451 = vmax.f32 %v419, 0.0
      %v452 = vmax.f32 %v420, 0.0
      %v453 = vmax.f32 %v421, 0.0
      %v454 = vmax.f32 %v422, 0.0
      %v455 = vmax.f32 %v423, 0.0
      %v456 = vmax.f32 %v424, 0.0
      %v457 = vmax.f32 %v425, 0.0
      %v458 = vmax.f32 %v426, 0.0
      %v459 = vmax.f32 %v427, 0.0
      %v460 = vmax.f32 %v428, 0.0
      %v461 = vmax.f32 %v429, 0.0
      %462 = vst [vmem:[%s244] sm:$0xff] %v430
      %463 = vst [vmem:[%s244 + $0x8] sm:$0xff] %v431
      %464 = vst [vmem:[%s244 + $0x10] sm:$0xff] %v432
      %465 = vst [vmem:[%s244 + $0x18] sm:$0xff] %v433
      %466 = vst [vmem:[%s244 + $0x20] sm:$0xff] %v434
      %467 = vst [vmem:[%s244 + $0x28] sm:$0xff] %v435
      %468 = vst [vmem:[%s244 + $0x30] sm:$0xff] %v436
      %469 = vst [vmem:[%s244 + $0x38] sm:$0xff] %v437
      %470 = vst [vmem:[%s244 + $0x40] sm:$0xff] %v438
      %471 = vst [vmem:[%s244 + $0x48] sm:$0xff] %v439
      %472 = vst [vmem:[%s244 + $0x50] sm:$0xff] %v440
      %473 = vst [vmem:[%s244 + $0x58] sm:$0xff] %v441
      %474 = vst [vmem:[%s244 + $0x60] sm:$0xff] %v442
      %475 = vst [vmem:[%s244 + $0x68] sm:$0xff] %v443
      %476 = vst [vmem:[%s244 + $0x70] sm:$0xff] %v444
      %477 = vst [vmem:[%s244 + $0x78] sm:$0xff] %v445
      %478 = vst [vmem:[%s244 + $0x80] sm:$0xff] %v446
      %479 = vst [vmem:[%s244 + $0x88] sm:$0xff] %v447
      %480 = vst [vmem:[%s244 + $0x90] sm:$0xff] %v448
      %481 = vst [vmem:[%s244 + $0x98] sm:$0xff] %v449
      %482 = vst [vmem:[%s244 + $0xa0] sm:$0xff] %v450
      %483 = vst [vmem:[%s244 + $0xa8] sm:$0xff] %v451
      %484 = vst [vmem:[%s244 + $0xb0] sm:$0xff] %v452
      %485 = vst [vmem:[%s244 + $0xb8] sm:$0xff] %v453
      %486 = vst [vmem:[%s244 + $0xc0] sm:$0xff] %v454
      %487 = vst [vmem:[%s244 + $0xc8] sm:$0xff] %v455
      %488 = vst [vmem:[%s244 + $0xd0] sm:$0xff] %v456
      %489 = vst [vmem:[%s244 + $0xd8] sm:$0xff] %v457
      %490 = vst [vmem:[%s244 + $0xe0] sm:$0xff] %v458
      %491 = vst [vmem:[%s244 + $0xe8] sm:$0xff] %v459
      %492 = vst [vmem:[%s244 + $0xf0] sm:$0xff] %v460
      %493 = vst [vmem:[%s244 + $0xf8] sm:$0xff] %v461
      %p494 = scmp.lt.s32.totalorder %s16, 1
      %s495 = scalar_select %p494, %s16, 1
      %s496 = smul.addr %s495, 32
      %s497 = smul.addr %s496, 8
      %s498 = scalar_lea.vmem %s5, %s497
      // Predicated region
      $region41: #{residual_forward_nhwc.5} parent=39 // pred_check
        %p499 = pneg %p149
      $region42: #{residual_forward_nhwc.5} parent=39 // pred_check_branch
        %501 = sbr.rel (%p499) target = $region44
      $region43: #{residual_forward_nhwc.5} parent=39 // pred_region
        _
      $region44: #{residual_forward_nhwc.5} parent=39 // pred_fallthru
        _
    $region40: #{residual_forward_nhwc.5} parent=5 // pred_fallthru
      _
    %p502 = scmp.le.s32.totalorder 2, %s11
    // Predicated region
    $region45: #{residual_forward_nhwc.5} parent=5 // pred_check
      %p503 = pneg %p502
    $region46: #{residual_forward_nhwc.5} parent=5 // pred_check_branch
      %505 = sbr.rel (%p503) target = $region48
    $region47: #{residual_forward_nhwc.5} parent=5 // pred_region
      %s506 = ssub.s32 %s11, 2
      // Predicated region
      $region49: #{residual_forward_nhwc.5} parent=47 // pred_check
        %p507 = pneg %p155
      $region50: #{residual_forward_nhwc.5} parent=47 // pred_check_branch
        %509 = sbr.rel (%p507) target = $region52
      $region51: #{residual_forward_nhwc.5} parent=47 // pred_region
        %p510 = scmp.lt.s32.totalorder %s17, 1
        %s511 = scalar_select %p510, %s17, 1
        %s512 = smul.addr %s511, 32
        %s513 = smul.addr %s512, 8
        %s514 = scalar_lea.vmem %s5, %s513
      $region52: #{residual_forward_nhwc.5} parent=47 // pred_fallthru
        _
    $region48: #{residual_forward_nhwc.5} parent=5 // pred_fallthru
      _
  $region6: #{residual_forward_nhwc.5} parent=0 // loop_footer
    %s15 = sadd.s32 1, %s11
  $region7: #{residual_forward_nhwc.5} parent=0 // loop_footer_branch
    %10 = sbr.rel target = $region3
  $region8: #{residual_forward_nhwc.5} parent=0 // loop_exit
    _

// kernel: residual_forward_nhwc.4
$region0: #{residual_forward_nhwc.4}
  #allocation0 [shape = 'u32[]', space=smem, size = 0x4, offset = 0x4, fixed_abs, tag = 'smem constant byte address 0x4 - core index']
  #allocation1 [shape = 'u32[144,128]{1,0:T(1,128)}', space=vmem, size = 0x12000, scoped, tag = 'internal scratch']
  #allocation2 [shape = 'f32[1,18,18,128]{3,2,1,0:T(8,128)}', space=vmem, size = 0x36000, scoped, tag = 'scratch operand']
  %s0 = inlined_call_operand.vmem [shape: f32[2,16,16,128], index: 0, kind: input, shape index: {}]
  %s1 = inlined_call_operand.vmem [shape: f32[2,128], index: 1, kind: input, shape index: {}]
  %s2 = inlined_call_operand.vmem [shape: f32[1,128], index: 2, kind: input, shape index: {}]
  %s3 = inlined_call_operand.vmem [shape: f32[1,128], index: 3, kind: input, shape index: {}]
  %s4 = inlined_call_operand.vmem [shape: bf16[1152,128], index: 4, kind: input, shape index: {}]
  %s5 = inlined_call_operand.vmem [shape: f32[1,128], index: 5, kind: input, shape index: {}]
  %s6 = inlined_call_operand.vmem [shape: f32[2,16,16,128], index: 6, kind: output, shape index: {0}]
  %s7 = inlined_call_operand.vmem [shape: f32[2,128], index: 7, kind: output, shape index: {1}]
  %8 = xla_tuple %s6, %s7
  %s9 = sld [smem:[#allocation0]]
  $region73: #{residual_forward_nhwc.4} parent=0
    _
  %s11 = ssub.s32 1, %s9
  %s12 = scalar_select 0, %s11, %s9
  loop: start=0, step=1, limit=4
  $region2: #{residual_forward_nhwc.4} parent=0 // loop_pre_header
    _
  $region3: #{residual_forward_nhwc.4} parent=0 // loop_header
    %s14 = sphi 0, %s18
    %p15 = scmp.ge.s32.totalorder %s14, 4
    %s24 = sphi 0, %s26
    %s27 = sphi 0, %s24
    %s28 = sphi 0, %s27
    %s44 = sphi 0, %s28
    %s48 = sphi 0, %s48
    %s50 = sphi 0, %s48
    %s51 = sphi 0, %s50
    %s65 = sphi 0, %s51
    %s69 = sphi 0, %s69
    %s71 = sphi 0, %s69
    %s72 = sphi 0, %s71
    %s86 = sphi 0, %s72
    %s90 = sphi 0, %s90
    %s92 = sphi 0, %s90
    %s93 = sphi 0, %s92
    %s107 = sphi 0, %s93
    %s111 = sphi 0, %s111
    %s113 = sphi 0, %s111
    %s114 = sphi 0, %s113
    %s128 = sphi 0, %s114
    %s132 = sphi 0, %s132
    %s134 = sphi 0, %s132
    %s135 = sphi 0, %s134
    %s149 = sphi 0, %s135
    %s155 = sphi 0, %s157
    %s158 = sphi 0, %s155
    %s159 = sphi 0, %s158
    %s175 = sphi 0, %s159
    %s179 = sphi 0, %s179
    %s181 = sphi 0, %s179
    %s182 = sphi 0, %s181
    %s196 = sphi 0, %s182
  $region4: #{residual_forward_nhwc.4} parent=0 // loop_header_branch
    %17 = sbr.rel (%p15) target = $region8
  $region5: #{residual_forward_nhwc.4} parent=0 // loop_body
    %s19 = ssub.s32 %s14, 1
    %s20 = ssub.s32 %s14, 2
    %s21 = sadd.s32 %s14, 1
    %s22 = ssub.s32 %s14, %s21
    %p23 = scmp.eq.s32.totalorder %s22, 0
    %s25 = sadd.s32 %s24, 1
    %s26 = scalar_select %p23, %s24, %s25
    %p29 = pneg %p23
    %p30 = scmp.eq.s32.totalorder %s14, 1
    %p31 = por %p29, %p30
    %p32 = scmp.ne.s32.totalorder %s24, %s27
    %p33 = scmp.eq.s32.totalorder %s14, 0
    %p34 = por %p32, %p33
    %p35 = scmp.ne.s32.totalorder %s24, %s27
    %p36 = scmp.eq.s32.totalorder %s19, 1
    %p37 = por %p35, %p36
    %p38 = scmp.ne.s32.totalorder %s27, %s28
    %p39 = scmp.eq.s32.totalorder %s19, 0
    %p40 = por %p38, %p39
    %p41 = scmp.ne.s32.totalorder %s27, %s28
    %p42 = scmp.eq.s32.totalorder %s20, 1
    %p43 = por %p41, %p42
    %p45 = scmp.ne.s32.totalorder %s28, %s44
    %p46 = scmp.eq.s32.totalorder %s20, 0
    %p47 = por %p45, %p46
    %s49 = sadd.s32 %s48, 1
    %p52 = scmp.eq.s32.totalorder %s14, 1
    %p53 = scmp.ne.s32.totalorder %s48, %s50
    %p54 = scmp.eq.s32.totalorder %s14, 0
    %p55 = por %p53, %p54
    %p56 = scmp.ne.s32.totalorder %s48, %s50
    %p57 = scmp.eq.s32.totalorder %s19, 1
    %p58 = por %p56, %p57
    %p59 = scmp.ne.s32.totalorder %s50, %s51
    %p60 = scmp.eq.s32.totalorder %s19, 0
    %p61 = por %p59, %p60
    %p62 = scmp.ne.s32.totalorder %s50, %s51
    %p63 = scmp.eq.s32.totalorder %s20, 1
    %p64 = por %p62, %p63
    %p66 = scmp.ne.s32.totalorder %s51, %s65
    %p67 = scmp.eq.s32.totalorder %s20, 0
    %p68 = por %p66, %p67
    %s70 = sadd.s32 %s69, 1
    %p73 = scmp.eq.s32.totalorder %s14, 1
    %p74 = scmp.ne.s32.totalorder %s69, %s71
    %p75 = scmp.eq.s32.totalorder %s14, 0
    %p76 = por %p74, %p75
    %p77 = scmp.ne.s32.totalorder %s69, %s71
    %p78 = scmp.eq.s32.totalorder %s19, 1
    %p79 = por %p77, %p78
    %p80 = scmp.ne.s32.totalorder %s71, %s72
    %p81 = scmp.eq.s32.totalorder %s19, 0
    %p82 = por %p80, %p81
    %p83 = scmp.ne.s32.totalorder %s71, %s72
    %p84 = scmp.eq.s32.totalorder %s20, 1
    %p85 = por %p83, %p84
    %p87 = scmp.ne.s32.totalorder %s72, %s86
    %p88 = scmp.eq.s32.totalorder %s20, 0
    %p89 = por %p87, %p88
    %s91 = sadd.s32 %s90, 1
    %p94 = scmp.eq.s32.totalorder %s14, 1
    %p95 = scmp.ne.s32.totalorder %s90, %s92
    %p96 = scmp.eq.s32.totalorder %s14, 0
    %p97 = por %p95, %p96
    %p98 = scmp.ne.s32.totalorder %s90, %s92
    %p99 = scmp.eq.s32.totalorder %s19, 1
    %p100 = por %p98, %p99
    %p101 = scmp.ne.s32.totalorder %s92, %s93
    %p102 = scmp.eq.s32.totalorder %s19, 0
    %p103 = por %p101, %p102
    %p104 = scmp.ne.s32.totalorder %s92, %s93
    %p105 = scmp.eq.s32.totalorder %s20, 1
    %p106 = por %p104, %p105
    %p108 = scmp.ne.s32.totalorder %s93, %s107
    %p109 = scmp.eq.s32.totalorder %s20, 0
    %p110 = por %p108, %p109
    %s112 = sadd.s32 %s111, 1
    %p115 = scmp.eq.s32.totalorder %s14, 1
    %p116 = scmp.ne.s32.totalorder %s111, %s113
    %p117 = scmp.eq.s32.totalorder %s14, 0
    %p118 = por %p116, %p117
    %p119 = scmp.ne.s32.totalorder %s111, %s113
    %p120 = scmp.eq.s32.totalorder %s19, 1
    %p121 = por %p119, %p120
    %p122 = scmp.ne.s32.totalorder %s113, %s114
    %p123 = scmp.eq.s32.totalorder %s19, 0
    %p124 = por %p122, %p123
    %p125 = scmp.ne.s32.totalorder %s113, %s114
    %p126 = scmp.eq.s32.totalorder %s20, 1
    %p127 = por %p125, %p126
    %p129 = scmp.ne.s32.totalorder %s114, %s128
    %p130 = scmp.eq.s32.totalorder %s20, 0
    %p131 = por %p129, %p130
    %s133 = sadd.s32 %s132, 1
    %p136 = scmp.eq.s32.totalorder %s14, 1
    %p137 = scmp.ne.s32.totalorder %s132, %s134
    %p138 = scmp.eq.s32.totalorder %s14, 0
    %p139 = por %p137, %p138
    %p140 = scmp.ne.s32.totalorder %s132, %s134
    %p141 = scmp.eq.s32.totalorder %s19, 1
    %p142 = por %p140, %p141
    %p143 = scmp.ne.s32.totalorder %s134, %s135
    %p144 = scmp.eq.s32.totalorder %s19, 0
    %p145 = por %p143, %p144
    %p146 = scmp.ne.s32.totalorder %s134, %s135
    %p147 = scmp.eq.s32.totalorder %s20, 1
    %p148 = por %p146, %p147
    %p150 = scmp.ne.s32.totalorder %s135, %s149
    %p151 = scmp.eq.s32.totalorder %s20, 0
    %p152 = por %p150, %p151
    %s153 = ssub.s32 %s14, %s21
    %p154 = scmp.eq.s32.totalorder %s153, 0
    %s156 = sadd.s32 %s155, 1
    %s157 = scalar_select %p154, %s155, %s156
    %p160 = pneg %p154
    %p161 = scmp.eq.s32.totalorder %s14, 1
    %p162 = por %p160, %p161
    %p163 = scmp.ne.s32.totalorder %s155, %s158
    %p164 = scmp.eq.s32.totalorder %s14, 0
    %p165 = por %p163, %p164
    %p166 = scmp.ne.s32.totalorder %s155, %s158
    %p167 = scmp.eq.s32.totalorder %s19, 1
    %p168 = por %p166, %p167
    %p169 = scmp.ne.s32.totalorder %s158, %s159
    %p170 = scmp.eq.s32.totalorder %s19, 0
    %p171 = por %p169, %p170
    %p172 = scmp.ne.s32.totalorder %s158, %s159
    %p173 = scmp.eq.s32.totalorder %s20, 1
    %p174 = por %p172, %p173
    %p176 = scmp.ne.s32.totalorder %s159, %s175
    %p177 = scmp.eq.s32.totalorder %s20, 0
    %p178 = por %p176, %p177
    %s180 = sadd.s32 %s179, 1
    %p183 = scmp.eq.s32.totalorder %s14, 1
    %p184 = scmp.ne.s32.totalorder %s179, %s181
    %p185 = scmp.eq.s32.totalorder %s14, 0
    %p186 = por %p184, %p185
    %p187 = scmp.ne.s32.totalorder %s179, %s181
    %p188 = scmp.eq.s32.totalorder %s19, 1
    %p189 = por %p187, %p188
    %p190 = scmp.ne.s32.totalorder %s181, %s182
    %p191 = scmp.eq.s32.totalorder %s19, 0
    %p192 = por %p190, %p191
    %p193 = scmp.ne.s32.totalorder %s181, %s182
    %p194 = scmp.eq.s32.totalorder %s20, 1
    %p195 = por %p193, %p194
    %p197 = scmp.ne.s32.totalorder %s182, %s196
    %p198 = scmp.eq.s32.totalorder %s20, 0
    %p199 = por %p197, %p198
    %p200 = scmp.le.s32.totalorder 1, %s14
    %p201 = scmp.lt.s32.totalorder %s14, 3
    %p202 = pnand %p200, %p201
    %p203 = pneg %p202
    // Predicated region
    $region9: #{residual_forward_nhwc.4} parent=5 // pred_check
      _
    $region10: #{residual_forward_nhwc.4} parent=5 // pred_check_branch
      %205 = sbr.rel (%p202) target = $region12
    $region11: #{residual_forward_nhwc.4} parent=5 // pred_region
      %s206 = ssub.s32 %s14, 1
      // Predicated region
      $region13: #{residual_forward_nhwc.4} parent=11 // pred_check
        %p207 = pneg %p61
      $region14: #{residual_forward_nhwc.4} parent=11 // pred_check_branch
        %209 = sbr.rel (%p207) target = $region16
      $region15: #{residual_forward_nhwc.4} parent=11 // pred_region
        _
      $region16: #{residual_forward_nhwc.4} parent=11 // pred_fallthru
        _
      // Predicated region
      $region17: #{residual_forward_nhwc.4} parent=11 // pred_check
        %p210 = pneg %p82
      $region18: #{residual_forward_nhwc.4} parent=11 // pred_check_branch
        %212 = sbr.rel (%p210) target = $region20
      $region19: #{residual_forward_nhwc.4} parent=11 // pred_region
        _
      $region20: #{residual_forward_nhwc.4} parent=11 // pred_fallthru
        _
      // Predicated region
      $region21: #{residual_forward_nhwc.4} parent=11 // pred_check
        %p213 = pneg %p103
      $region22: #{residual_forward_nhwc.4} parent=11 // pred_check_branch
        %215 = sbr.rel (%p213) target = $region24
      $region23: #{residual_forward_nhwc.4} parent=11 // pred_region
        _
      $region24: #{residual_forward_nhwc.4} parent=11 // pred_fallthru
        _
      // Predicated region
      $region25: #{residual_forward_nhwc.4} parent=11 // pred_check
        %p216 = pneg %p124
      $region26: #{residual_forward_nhwc.4} parent=11 // pred_check_branch
        %218 = sbr.rel (%p216) target = $region28
      $region27: #{residual_forward_nhwc.4} parent=11 // pred_region
        _
      $region28: #{residual_forward_nhwc.4} parent=11 // pred_fallthru
        _
      // Predicated region
      $region29: #{residual_forward_nhwc.4} parent=11 // pred_check
        %p219 = pneg %p145
      $region30: #{residual_forward_nhwc.4} parent=11 // pred_check_branch
        %221 = sbr.rel (%p219) target = $region32
      $region31: #{residual_forward_nhwc.4} parent=11 // pred_region
        _
      $region32: #{residual_forward_nhwc.4} parent=11 // pred_fallthru
        _
    $region12: #{residual_forward_nhwc.4} parent=5 // pred_fallthru
      _
    %p222 = scmp.lt.s32.totalorder %s14, 2
    // Predicated region
    $region33: #{residual_forward_nhwc.4} parent=5 // pred_check
      %p223 = pneg %p222
    $region34: #{residual_forward_nhwc.4} parent=5 // pred_check_branch
      %225 = sbr.rel (%p223) target = $region36
    $region35: #{residual_forward_nhwc.4} parent=5 // pred_region
      // Predicated region
      $region37: #{residual_forward_nhwc.4} parent=35 // pred_check
        %p226 = pneg %p34
      $region38: #{residual_forward_nhwc.4} parent=35 // pred_check_branch
        %228 = sbr.rel (%p226) target = $region40
      $region39: #{residual_forward_nhwc.4} parent=35 // pred_region
        %p229 = scmp.lt.s32.totalorder %s14, 1
        %s230 = scalar_select %p229, %s14, 1
        %s231 = smul.addr %s230, 32
        %s232 = smul.addr %s231, 8
        %s233 = scalar_lea.vmem %s0, %s232
      $region40: #{residual_forward_nhwc.4} parent=35 // pred_fallthru
        _
    $region36: #{residual_forward_nhwc.4} parent=5 // pred_fallthru
      _
    %p234 = scmp.le.s32.totalorder 1, %s14
    %p235 = scmp.lt.s32.totalorder %s14, 3
    %p236 = pnand %p234, %p235
    %p237 = pneg %p236
    // Predicated region
    $region41: #{residual_forward_nhwc.4} parent=5 // pred_check
      _
    $region42: #{residual_forward_nhwc.4} parent=5 // pred_check_branch
      %239 = sbr.rel (%p236) target = $region44
    $region43: #{residual_forward_nhwc.4} parent=5 // pred_region
      %s240 = ssub.s32 %s14, 1
      %p241 = scmp.lt.s32.totalorder %s19, 1
      %s242 = scalar_select %p241, %s19, 1
      %s243 = smul.addr %s242, 32
      %s244 = smul.addr %s243, 8
      %s245 = scalar_lea.vmem %s0, %s244
      %p246 = pneg %p40
      %p247 = pneg %p37
      %p248 = pneg %p61
      %p249 = pneg %p58
      %p250 = pneg %p82
      %p251 = pneg %p79
      %p252 = pneg %p103
      %p253 = pneg %p100
      %p254 = pneg %p124
      %p255 = pneg %p121
      %p256 = pneg %p145
      %p257 = pneg %p142
      %p258 = pneg %p171
      %p259 = pneg %p168
      %p260 = scmp.lt.s32.totalorder %s19, 1
      %s261 = scalar_select %p260, %s19, 1
      %s262 = smul.addr %s261, 32
      %s263 = smul.addr %s262, 8
      %s264 = scalar_lea.vmem %s6, %s263
      %p265 = pneg %p192
      %p266 = pneg %p189
      %p267 = scmp.lt.s32.totalorder %s19, 1
      %s268 = scalar_select %p267, %s19, 1
      %s269 = smul.addr %s268, 32
      %s270 = smul.addr %s269, 8
      %s271 = scalar_lea.vmem %s0, %s270
      %p272 = scmp.lt.s32.totalorder %s19, 1
      %s273 = scalar_select %p272, %s19, 1
      %s274 = smul.addr %s273, 32
      %s275 = smul.addr %s274, 8
      %s276 = scalar_lea.vmem %s6, %s275
      %v278 = vld [vmem:[%s1] sm:$0x1]
      %v279 = vmul.f32 %v278, 0.001953125
      %v280 = vld [vmem:[%s1 + $0x1] sm:$0x1]
      %v281 = vmul.f32 %v280, 0.001953125
      %v282 = vmul.f32 %v279, %v279
      %v283 = vsub.f32 %v281, %v282
      %v284 = vld [vmem:[%s2] sm:$0x1]
      %v285 = vadd.f32 %v283, 1e-05
      %v286 = vrsqrt.pop %v285
      %v287 = vmul.f32 %v284, %v286
      %v288 = vld [vmem:[%s3] sm:$0x1]
      %v289 = vmul.f32 %v279, %v287
      %v290 = vsub.f32 %v288, %v289
      %v291 = vld [vmem:[%s271] sm:$0xff]
      %v292 = vld [vmem:[%s271 + $0x8] sm:$0xff]
      %v293 = vld [vmem:[%s271 + $0x10] sm:$0xff]
      %v294 = vld [vmem:[%s271 + $0x18] sm:$0xff]
      %v295 = vld [vmem:[%s271 + $0x20] sm:$0xff]
      %v296 = vld [vmem:[%s271 + $0x28] sm:$0xff]
      %v297 = vld [vmem:[%s271 + $0x30] sm:$0xff]
      %v298 = vld [vmem:[%s271 + $0x38] sm:$0xff]
      %v299 = vld [vmem:[%s271 + $0x40] sm:$0xff]
      %v300 = vld [vmem:[%s271 + $0x48] sm:$0xff]
      %v301 = vld [vmem:[%s271 + $0x50] sm:$0xff]
      %v302 = vld [vmem:[%s271 + $0x58] sm:$0xff]
      %v303 = vld [vmem:[%s271 + $0x60] sm:$0xff]
      %v304 = vld [vmem:[%s271 + $0x68] sm:$0xff]
      %v305 = vld [vmem:[%s271 + $0x70] sm:$0xff]
      %v306 = vld [vmem:[%s271 + $0x78] sm:$0xff]
      %v307 = vld [vmem:[%s271 + $0x80] sm:$0xff]
      %v308 = vld [vmem:[%s271 + $0x88] sm:$0xff]
      %v309 = vld [vmem:[%s271 + $0x90] sm:$0xff]
      %v310 = vld [vmem:[%s271 + $0x98] sm:$0xff]
      %v311 = vld [vmem:[%s271 + $0xa0] sm:$0xff]
      %v312 = vld [vmem:[%s271 + $0xa8] sm:$0xff]
      %v313 = vld [vmem:[%s271 + $0xb0] sm:$0xff]
      %v314 = vld [vmem:[%s271 + $0xb8] sm:$0xff]
      %v315 = vld [vmem:[%s271 + $0xc0] sm:$0xff]
      %v316 = vld [vmem:[%s271 + $0xc8] sm:$0xff]
      %v317 = vld [vmem:[%s271 + $0xd0] sm:$0xff]
      %v318 = vld [vmem:[%s271 + $0xd8] sm:$0xff]
      %v319 = vld [vmem:[%s271 + $0xe0] sm:$0xff]
      %v320 = vld [vmem:[%s271 + $0xe8] sm:$0xff]
      %v321 = vld [vmem:[%s271 + $0xf0] sm:$0xff]
      %v322 = vld [vmem:[%s271 + $0xf8] sm:$0xff]
      %v324 = vlaneseq
      %v325 = vshrl.u32 %v324, 7
      %v326 = vsub.s32 0, %v325
      %v327 = vrot.slane %v287, %v326
      %v329 = vmul.f32 %v291, %v327
      %v330 = vmul.f32 %v292, %v327
      %v331 = vmul.f32 %v293, %v327
      %v332 = vmul.f32 %v294, %v327
      %v333 = vmul.f32 %v295, %v327
      %v334 = vmul.f32 %v296, %v327
      %v335 = vmul.f32 %v297, %v327
      %v336 = vmul.f32 %v298, %v327
      %v337 = vmul.f32 %v299, %v327
      %v338 = vmul.f32 %v300, %v327
      %v339 = vmul.f32 %v301, %v327
      %v340 = vmul.f32 %v302, %v327
      %v341 = vmul.f32 %v303, %v327
      %v342 = vmul.f32 %v304, %v327
      %v343 = vmul.f32 %v305, %v327
      %v344 = vmul.f32 %v306, %v327
      %v345 = vmul.f32 %v307, %v327
      %v346 = vmul.f32 %v308, %v327
      %v347 = vmul.f32 %v309, %v327
      %v348 = vmul.f32 %v310, %v327
      %v349 = vmul.f32 %v311, %v327
      %v350 = vmul.f32 %v312, %v327
      %v351 = vmul.f32 %v313, %v327
      %v352 = vmul.f32 %v314, %v327
      %v353 = vmul.f32 %v315, %v327
      %v354 = vmul.f32 %v316, %v327
      %v355 = vmul.f32 %v317, %v327
      %v356 = vmul.f32 %v318, %v327
      %v357 = vmul.f32 %v319, %v327
      %v358 = vmul.f32 %v320, %v327
      %v359 = vmul.f32 %v321, %v327
      %v360 = vmul.f32 %v322, %v327
      %v362 = vlaneseq
      %v363 = vshrl.u32 %v362, 7
      %v364 = vsub.s32 0, %v363
      %v365 = vrot.slane %v290, %v364
      %v367 = vadd.f32 %v329, %v365
      %v368 = vadd.f32 %v330, %v365
      %v369 = vadd.f32 %v331, %v365
      %v370 = vadd.f32 %v332, %v365
      %v371 = vadd.f32 %v333, %v365
      %v372 = vadd.f32 %v334, %v365
      %v373 = vadd.f32 %v335, %v365
      %v374 = vadd.f32 %v336, %v365
      %v375 = vadd.f32 %v337, %v365
      %v376 = vadd.f32 %v338, %v365
      %v377 = vadd.f32 %v339, %v365
      %v378 = vadd.f32 %v340, %v365
      %v379 = vadd.f32 %v341, %v365
      %v380 = vadd.f32 %v342, %v365
      %v381 = vadd.f32 %v343, %v365
      %v382 = vadd.f32 %v344, %v365
      %v383 = vadd.f32 %v345, %v365
      %v384 = vadd.f32 %v346, %v365
      %v385 = vadd.f32 %v347, %v365
      %v386 = vadd.f32 %v348, %v365
      %v387 = vadd.f32 %v349, %v365
      %v388 = vadd.f32 %v350, %v365
      %v389 = vadd.f32 %v351, %v365
      %v390 = vadd.f32 %v352, %v365
      %v391 = vadd.f32 %v353, %v365
      %v392 = vadd.f32 %v354, %v365
      %v393 = vadd.f32 %v355, %v365
      %v394 = vadd.f32 %v356, %v365
      %v395 = vadd.f32 %v357, %v365
      %v396 = vadd.f32 %v358, %v365
      %v397 = vadd.f32 %v359, %v365
      %v398 = vadd.f32 %v360, %v365
      %v399 = vmax.f32 %v367, 0.0
      %v400 = vmax.f32 %v368, 0.0
      %v401 = vmax.f32 %v369, 0.0
      %v402 = vmax.f32 %v370, 0.0
      %v403 = vmax.f32 %v371, 0.0
      %v404 = vmax.f32 %v372, 0.0
      %v405 = vmax.f32 %v373, 0.0
      %v406 = vmax.f32 %v374, 0.0
      %v407 = vmax.f32 %v375, 0.0
      %v408 = vmax.f32 %v376, 0.0
      %v409 = vmax.f32 %v377, 0.0
      %v410 = vmax.f32 %v378, 0.0
      %v411 = vmax.f32 %v379, 0.0
      %v412 = vmax.f32 %v380, 0.0
      %v413 = vmax.f32 %v381, 0.0
      %v414 = vmax.f32 %v382, 0.0
      %v415 = vmax.f32 %v383, 0.0
      %v416 = vmax.f32 %v384, 0.0
      %v417 = vmax.f32 %v385, 0.0
      %v418 = vmax.f32 %v386, 0.0
      %v419 = vmax.f32 %v387, 0.0
      %v420 = vmax.f32 %v388, 0.0
      %v421 = vmax.f32 %v389, 0.0
      %v422 = vmax.f32 %v390, 0.0
      %v423 = vmax.f32 %v391, 0.0
      %v424 = vmax.f32 %v392, 0.0
      %v425 = vmax.f32 %v393, 0.0
      %v426 = vmax.f32 %v394, 0.0
      %v427 = vmax.f32 %v395, 0.0
      %v428 = vmax.f32 %v396, 0.0
      %v429 = vmax.f32 %v397, 0.0
      %v430 = vmax.f32 %v398, 0.0
      %p431 = scmp.eq.s32.totalorder %s19, 0
      // Predicated region
      $region45: #{residual_forward_nhwc.4} parent=43 // pred_check
        %p432 = pneg %p431
      $region46: #{residual_forward_nhwc.4} parent=43 // pred_check_branch
        %434 = sbr.rel (%p432) target = $region48
      $region47: #{residual_forward_nhwc.4} parent=43 // pred_region
        %435 = vst [vmem:[#allocation2] sm:$0xff] 0.0
        %436 = vst [vmem:[#allocation2 + $0x8] sm:$0xff] 0.0
        %437 = vst [vmem:[#allocation2 + $0x10] sm:$0x3] 0.0
        %s438 = scalar_lea.vmem [#allocation2], 408
        %439 = vst [vmem:[%s438] sm:$0xff] 0.0
        %440 = vst [vmem:[%s438 + $0x8] sm:$0xff] 0.0
        %441 = vst [vmem:[%s438 + $0x10] sm:$0x3] 0.0
        %s442 = scalar_lea.vmem [#allocation2], 24
        %443 = vst [vmem:[%s442] sm:$0x1] 0.0
        %444 = vst [vmem:[%s442 + $0x18] sm:$0x1] 0.0
        %445 = vst [vmem:[%s442 + $0x30] sm:$0x1] 0.0
        %446 = vst [vmem:[%s442 + $0x48] sm:$0x1] 0.0
        %447 = vst [vmem:[%s442 + $0x60] sm:$0x1] 0.0
        %448 = vst [vmem:[%s442 + $0x78] sm:$0x1] 0.0
        %449 = vst [vmem:[%s442 + $0x90] sm:$0x1] 0.0
        %450 = vst [vmem:[%s442 + $0xa8] sm:$0x1] 0.0
        %451 = vst [vmem:[%s442 + $0xc0] sm:$0x1] 0.0
        %452 = vst [vmem:[%s442 + $0xd8] sm:$0x1] 0.0
        %453 = vst [vmem:[%s442 + $0xf0] sm:$0x1] 0.0
        %454 = vst [vmem:[%s442 + $0x108] sm:$0x1] 0.0
        %455 = vst [vmem:[%s442 + $0x120] sm:$0x1] 0.0
        %456 = vst [vmem:[%s442 + $0x138] sm:$0x1] 0.0
        %457 = vst [vmem:[%s442 + $0x150] sm:$0x1] 0.0
        %458 = vst [vmem:[%s442 + $0x168] sm:$0x1] 0.0
        %459 = vst [vmem:[%s442 + $0x11] sm:$0x1] 0.0
        %460 = vst [vmem:[%s442 + $0x29] sm:$0x1] 0.0
        %461 = vst [vmem:[%s442 + $0x41] sm:$0x1] 0.0
        %462 = vst [vmem:[%s442 + $0x59] sm:$0x1] 0.0
        %463 = vst [vmem:[%s442 + $0x71] sm:$0x1] 0.0
        %464 = vst [vmem:[%s442 + $0x89] sm:$0x1] 0.0
        %465 = vst [vmem:[%s442 + $0xa1] sm:$0x1] 0.0
        %466 = vst [vmem:[%s442 + $0xb9] sm:$0x1] 0.0
        %467 = vst [vmem:[%s442 + $0xd1] sm:$0x1] 0.0
        %468 = vst [vmem:[%s442 + $0xe9] sm:$0x1] 0.0
        %469 = vst [vmem:[%s442 + $0x101] sm:$0x1] 0.0
        %470 = vst [vmem:[%s442 + $0x119] sm:$0x1] 0.0
        %471 = vst [vmem:[%s442 + $0x131] sm:$0x1] 0.0
        %472 = vst [vmem:[%s442 + $0x149] sm:$0x1] 0.0
        %473 = vst [vmem:[%s442 + $0x161] sm:$0x1] 0.0
        %474 = vst [vmem:[%s442 + $0x179] sm:$0x1] 0.0
      $region48: #{residual_forward_nhwc.4} parent=43 // pred_fallthru
        _
      %s475 = scalar_lea.vmem [#allocation2], 24
      %476 = vst [vmem:[%s475 + $0x1] sm:$0xff] %v399
      %477 = vst [vmem:[%s475 + $0x9] sm:$0xff] %v400
      %478 = vst [vmem:[%s475 + $0x19] sm:$0xff] %v401
      %479 = vst [vmem:[%s475 + $0x21] sm:$0xff] %v402
      %480 = vst [vmem:[%s475 + $0x31] sm:$0xff] %v403
      %481 = vst [vmem:[%s475 + $0x39] sm:$0xff] %v404
      %482 = vst [vmem:[%s475 + $0x49] sm:$0xff] %v405
      %483 = vst [vmem:[%s475 + $0x51] sm:$0xff] %v406
      %484 = vst [vmem:[%s475 + $0x61] sm:$0xff] %v407
      %485 = vst [vmem:[%s475 + $0x69] sm:$0xff] %v408
      %486 = vst [vmem:[%s475 + $0x79] sm:$0xff] %v409
      %487 = vst [vmem:[%s475 + $0x81] sm:$0xff] %v410
      %488 = vst [vmem:[%s475 + $0x91] sm:$0xff] %v411
      %489 = vst [vmem:[%s475 + $0x99] sm:$0xff] %v412
      %490 = vst [vmem:[%s475 + $0xa9] sm:$0xff] %v413
      %491 = vst [vmem:[%s475 + $0xb1] sm:$0xff] %v414
      %492 = vst [vmem:[%s475 + $0xc1] sm:$0xff] %v415
      %493 = vst [vmem:[%s475 + $0xc9] sm:$0xff] %v416
      %494 = vst [vmem:[%s475 + $0xd9] sm:$0xff] %v417
      %495 = vst [vmem:[%s475 + $0xe1] sm:$0xff] %v418
      %496 = vst [vmem:[%s475 + $0xf1] sm:$0xff] %v419
      %497 = vst [vmem:[%s475 + $0xf9] sm:$0xff] %v420
      %498 = vst [vmem:[%s475 + $0x109] sm:$0xff] %v421
      %499 = vst [vmem:[%s475 + $0x111] sm:$0xff] %v422
      %500 = vst [vmem:[%s475 + $0x121] sm:$0xff] %v423
      %501 = vst [vmem:[%s475 + $0x129] sm:$0xff] %v424
      %502 = vst [vmem:[%s475 + $0x139] sm:$0xff] %v425
      %503 = vst [vmem:[%s475 + $0x141] sm:$0xff] %v426
      %504 = vst [vmem:[%s475 + $0x151] sm:$0xff] %v427
      %505 = vst [vmem:[%s475 + $0x159] sm:$0xff] %v428
      %506 = vst [vmem:[%s475 + $0x169] sm:$0xff] %v429
      %507 = vst [vmem:[%s475 + $0x171] sm:$0xff] %v430
      %v508 = vld [vmem:[#allocation2] sm:$0xff]
      %v509 = vld [vmem:[#allocation2 + $0x8] sm:$0xff]
      %v510 = vld [vmem:[#allocation2 + $0x18] sm:$0xff]
      %v511 = vld [vmem:[#allocation2 + $0x20] sm:$0xff]
      %v512 = vld [vmem:[#allocation2 + $0x30] sm:$0xff]
      %v513 = vld [vmem:[#allocation2 + $0x38] sm:$0xff]
      %v514 = vld [vmem:[#allocation2 + $0x48] sm:$0xff]
      %v515 = vld [vmem:[#allocation2 + $0x50] sm:$0xff]
      %v516 = vld [vmem:[#allocation2 + $0x60] sm:$0xff]
      %v517 = vld [vmem:[#allocation2 + $0x68] sm:$0xff]
      %v518 = vld [vmem:[#allocation2 + $0x78] sm:$0xff]
      %v519 = vld [vmem:[#allocation2 + $0x80] sm:$0xff]
      %v520 = vld [vmem:[#allocation2 + $0x90] sm:$0xff]
      %v521 = vld [vmem:[#allocation2 + $0x98] sm:$0xff]
      %v522 = vld [vmem:[#allocation2 + $0xa8] sm:$0xff]
      %v523 = vld [vmem:[#allocation2 + $0xb0] sm:$0xff]
      %v524 = vld [vmem:[#allocation2 + $0xc0] sm:$0xff]
      %v525 = vld [vmem:[#allocation2 + $0xc8] sm:$0xff]
      %v526 = vld [vmem:[#allocation2 + $0xd8] sm:$0xff]
      %v527 = vld [vmem:[#allocation2 + $0xe0] sm:$0xff]
      %v528 = vld [vmem:[#allocation2 + $0xf0] sm:$0xff]
      %v529 = vld [vmem:[#allocation2 + $0xf8] sm:$0xff]
      %v530 = vld [vmem:[#allocation2 + $0x108] sm:$0xff]
      %v531 = vld [vmem:[#allocation2 + $0x110] sm:$0xff]
      %v532 = vld [vmem:[#allocation2 + $0x120] sm:$0xff]
      %v533 = vld [vmem:[#allocation2 + $0x128] sm:$0xff]
      %v534 = vld [vmem:[#allocation2 + $0x138] sm:$0xff]
      %v535 = vld [vmem:[#allocation2 + $0x140] sm:$0xff]
      %v536 = vld [vmem:[#allocation2 + $0x150] sm:$0xff]
      %v537 = vld [vmem:[#allocation2 + $0x158] sm:$0xff]
      %v538 = vld [vmem:[#allocation2 + $0x168] sm:$0xff]
      %v539 = vld [vmem:[#allocation2 + $0x170] sm:$0xff]
      %v540 = vld [vmem:[#allocation2 + $0x1] sm:$0xff]
      %v541 = vld [vmem:[#allocation2 + $0x9] sm:$0xff]
      %v542 = vld [vmem:[#allocation2 + $0x19] sm:$0xff]
      %v543 = vld [vmem:[#allocation2 + $0x21] sm:$0xff]
      %v544 = vld [vmem:[#allocation2 + $0x31] sm:$0xff]
      %v545 = vld [vmem:[#allocation2 + $0x39] sm:$0xff]
      %v546 = vld [vmem:[#allocation2 + $0x49] sm:$0xff]
      %v547 = vld [vmem:[#allocation2 + $0x51] sm:$0xff]
      %v548 = vld [vmem:[#allocation2 + $0x61] sm:$0xff]
      %v549 = vld [vmem:[#allocation2 + $0x69] sm:$0xff]
      %v550 = vld [vmem:[#allocation2 + $0x79] sm:$0xff]
      %v551 = vld [vmem:[#allocation2 + $0x81] sm:$0xff]
      %v552 = vld [vmem:[#allocation2 + $0x91] sm:$0xff]
      %v553 = vld [vmem:[#allocation2 + $0x99] sm:$0xff]
      %v554 = vld [vmem:[#allocation2 + $0xa9] sm:$0xff]
      %v555 = vld [vmem:[#allocation2 + $0xb1] sm:$0xff]
      %v556 = vld [vmem:[#allocation2 + $0xc1] sm:$0xff]
      %v557 = vld [vmem:[#allocation2 + $0xc9] sm:$0xff]
      %v558 = vld [vmem:[#allocation2 + $0xd9] sm:$0xff]
      %v559 = vld [vmem:[#allocation2 + $0xe1] sm:$0xff]
      %v560 = vld [vmem:[#allocation2 + $0xf1] sm:$0xff]
      %v561 = vld [vmem:[#allocation2 + $0xf9] sm:$0xff]
      %v562 = vld [vmem:[#allocation2 + $0x109] sm:$0xff]
      %v563 = vld [vmem:[#allocation2 + $0x111] sm:$0xff]
      %v564 = vld [vmem:[#allocation2 + $0x121] sm:$0xff]
      %v565 = vld [vmem:[#allocation2 + $0x129] sm:$0xff]
      %v566 = vld [vmem:[#allocation2 + $0x139] sm:$0xff]
      %v567 = vld [vmem:[#allocation2 + $0x141] sm:$0xff]
      %v568 = vld [vmem:[#allocation2 + $0x151] sm:$0xff]
      %v569 = vld [vmem:[#allocation2 + $0x159] sm:$0xff]
      %v570 = vld [vmem:[#allocation2 + $0x169] sm:$0xff]
      %v571 = vld [vmem:[#allocation2 + $0x171] sm:$0xff]
      %v572 = vld [vmem:[#allocation2 + $0x2] sm:$0xff]
      %v573 = vld [vmem:[#allocation2 + $0xa] sm:$0xff]
      %v574 = vld [vmem:[#allocation2 + $0x1a] sm:$0xff]
      %v575 = vld [vmem:[#allocation2 + $0x22] sm:$0xff]
      %v576 = vld [vmem:[#allocation2 + $0x32] sm:$0xff]
      %v577 = vld [vmem:[#allocation2 + $0x3a] sm:$0xff]
      %v578 = vld [vmem:[#allocation2 + $0x4a] sm:$0xff]
      %v579 = vld [vmem:[#allocation2 + $0x52] sm:$0xff]
      %v580 = vld [vmem:[#allocation2 + $0x62] sm:$0xff]
      %v581 = vld [vmem:[#allocation2 + $0x6a] sm:$0xff]
      %v582 = vld [vmem:[#allocation2 + $0x7a] sm:$0xff]
      %v583 = vld [vmem:[#allocation2 + $0x82] sm:$0xff]
      %v584 = vld [vmem:[#allocation2 + $0x92] sm:$0xff]
      %v585 = vld [vmem:[#allocation2 + $0x9a] sm:$0xff]
      %v586 = vld [vmem:[#allocation2 + $0xaa] sm:$0xff]
      %v587 = vld [vmem:[#allocation2 + $0xb2] sm:$0xff]
      %v588 = vld [vmem:[#allocation2 + $0xc2] sm:$0xff]
      %v589 = vld [vmem:[#allocation2 + $0xca] sm:$0xff]
      %v590 = vld [vmem:[#allocation2 + $0xda] sm:$0xff]
      %v591 = vld [vmem:[#allocation2 + $0xe2] sm:$0xff]
      %v592 = vld [vmem:[#allocation2 + $0xf2] sm:$0xff]
      %v593 = vld [vmem:[#allocation2 + $0xfa] sm:$0xff]
      %v594 = vld [vmem:[#allocation2 + $0x10a] sm:$0xff]
      %v595 = vld [vmem:[#allocation2 + $0x112] sm:$0xff]
      %v596 = vld [vmem:[#allocation2 + $0x122] sm:$0xff]
      %v597 = vld [vmem:[#allocation2 + $0x12a] sm:$0xff]
      %v598 = vld [vmem:[#allocation2 + $0x13a] sm:$0xff]
      %v599 = vld [vmem:[#allocation2 + $0x142] sm:$0xff]
      %v600 = vld [vmem:[#allocation2 + $0x152] sm:$0xff]
      %v601 = vld [vmem:[#allocation2 + $0x15a] sm:$0xff]
      %v602 = vld [vmem:[#allocation2 + $0x16a] sm:$0xff]
      %v603 = vld [vmem:[#allocation2 + $0x172] sm:$0xff]
      %v604 = vld [vmem:[%s475] sm:$0xff]
      %v605 = vld [vmem:[%s475 + $0x8] sm:$0xff]
      %v606 = vld [vmem:[%s475 + $0x18] sm:$0xff]
      %v607 = vld [vmem:[%s475 + $0x20] sm:$0xff]
      %v608 = vld [vmem:[%s475 + $0x30] sm:$0xff]
      %v609 = vld [vmem:[%s475 + $0x38] sm:$0xff]
      %v610 = vld [vmem:[%s475 + $0x48] sm:$0xff]
      %v611 = vld [vmem:[%s475 + $0x50] sm:$0xff]
      %v612 = vld [vmem:[%s475 + $0x60] sm:$0xff]
      %v613 = vld [vmem:[%s475 + $0x68] sm:$0xff]
      %v614 = vld [vmem:[%s475 + $0x78] sm:$0xff]
      %v615 = vld [vmem:[%s475 + $0x80] sm:$0xff]
      %v616 = vld [vmem:[%s475 + $0x90] sm:$0xff]
      %v617 = vld [vmem:[%s475 + $0x98] sm:$0xff]
      %v618 = vld [vmem:[%s475 + $0xa8] sm:$0xff]
      %v619 = vld [vmem:[%s475 + $0xb0] sm:$0xff]
      %v620 = vld [vmem:[%s475 + $0xc0] sm:$0xff]
      %v621 = vld [vmem:[%s475 + $0xc8] sm:$0xff]
      %v622 = vld [vmem:[%s475 + $0xd8] sm:$0xff]
      %v623 = vld [vmem:[%s475 + $0xe0] sm:$0xff]
      %v624 = vld [vmem:[%s475 + $0xf0] sm:$0xff]
      %v625 = vld [vmem:[%s475 + $0xf8] sm:$0xff]
      %v626 = vld [vmem:[%s475 + $0x108] sm:$0xff]
      %v627 = vld [vmem:[%s475 + $0x110] sm:$0xff]
      %v628 = vld [vmem:[%s475 + $0x120] sm:$0xff]
      %v629 = vld [vmem:[%s475 + $0x128] sm:$0xff]
      %v630 = vld [vmem:[%s475 + $0x138] sm:$0xff]
      %v631 = vld [vmem:[%s475 + $0x140] sm:$0xff]
      %v632 = vld [vmem:[%s475 + $0x150] sm:$0xff]
      %v633 = vld [vmem:[%s475 + $0x158] sm:$0xff]
      %v634 = vld [vmem:[%s475 + $0x168] sm:$0xff]
      %v635 = vld [vmem:[%s475 + $0x170] sm:$0xff]
      %v636 = vld [vmem:[%s475 + $0x1] sm:$0xff]
      %v637 = vld [vmem:[%s475 + $0x9] sm:$0xff]
      %v638 = vld [vmem:[%s475 + $0x19] sm:$0xff]
      %v639 = vld [vmem:[%s475 + $0x21] sm:$0xff]
      %v640 = vld [vmem:[%s475 + $0x31] sm:$0xff]
      %v641 = vld [vmem:[%s475 + $0x39] sm:$0xff]
      %v642 = vld [vmem:[%s475 + $0x49] sm:$0xff]
      %v643 = vld [vmem:[%s475 + $0x51] sm:$0xff]
      %v644 = vld [vmem:[%s475 + $0x61] sm:$0xff]
      %v645 = vld [vmem:[%s475 + $0x69] sm:$0xff]
      %v646 = vld [vmem:[%s475 + $0x79] sm:$0xff]
      %v647 = vld [vmem:[%s475 + $0x81] sm:$0xff]
      %v648 = vld [vmem:[%s475 + $0x91] sm:$0xff]
      %v649 = vld [vmem:[%s475 + $0x99] sm:$0xff]
      %v650 = vld [vmem:[%s475 + $0xa9] sm:$0xff]
      %v651 = vld [vmem:[%s475 + $0xb1] sm:$0xff]
      %v652 = vld [vmem:[%s475 + $0xc1] sm:$0xff]
      %v653 = vld [vmem:[%s475 + $0xc9] sm:$0xff]
      %v654 = vld [vmem:[%s475 + $0xd9] sm:$0xff]
      %v655 = vld [vmem:[%s475 + $0xe1] sm:$0xff]
      %v656 = vld [vmem:[%s475 + $0xf1] sm:$0xff]
      %v657 = vld [vmem:[%s475 + $0xf9] sm:$0xff]
      %v658 = vld [vmem:[%s475 + $0x109] sm:$0xff]
      %v659 = vld [vmem:[%s475 + $0x111] sm:$0xff]
      %v660 = vld [vmem:[%s475 + $0x121] sm:$0xff]
      %v661 = vld [vmem:[%s475 + $0x129] sm:$0xff]
      %v662 = vld [vmem:[%s475 + $0x139] sm:$0xff]
      %v663 = vld [vmem:[%s475 + $0x141] sm:$0xff]
      %v664 = vld [vmem:[%s475 + $0x151] sm:$0xff]
      %v665 = vld [vmem:[%s475 + $0x159] sm:$0xff]
      %v666 = vld [vmem:[%s475 + $0x169] sm:$0xff]
      %v667 = vld [vmem:[%s475 + $0x171] sm:$0xff]
      %v668 = vld [vmem:[%s475 + $0x2] sm:$0xff]
      %v669 = vld [vmem:[%s475 + $0xa] sm:$0xff]
      %v670 = vld [vmem:[%s475 + $0x1a] sm:$0xff]
      %v671 = vld [vmem:[%s475 + $0x22] sm:$0xff]
      %v672 = vld [vmem:[%s475 + $0x32] sm:$0xff]
      %v673 = vld [vmem:[%s475 + $0x3a] sm:$0xff]
      %v674 = vld [vmem:[%s475 + $0x4a] sm:$0xff]
      %v675 = vld [vmem:[%s475 + $0x52] sm:$0xff]
      %v676 = vld [vmem:[%s475 + $0x62] sm:$0xff]
      %v677 = vld [vmem:[%s475 + $0x6a] sm:$0xff]
      %v678 = vld [vmem:[%s475 + $0x7a] sm:$0xff]
      %v679 = vld [vmem:[%s475 + $0x82] sm:$0xff]
      %v680 = vld [vmem:[%s475 + $0x92] sm:$0xff]
      %v681 = vld [vmem:[%s475 + $0x9a] sm:$0xff]
      %v682 = vld [vmem:[%s475 + $0xaa] sm:$0xff]
      %v683 = vld [vmem:[%s475 + $0xb2] sm:$0xff]
      %v684 = vld [vmem:[%s475 + $0xc2] sm:$0xff]
      %v685 = vld [vmem:[%s475 + $0xca] sm:$0xff]
      %v686 = vld [vmem:[%s475 + $0xda] sm:$0xff]
      %v687 = vld [vmem:[%s475 + $0xe2] sm:$0xff]
      %v688 = vld [vmem:[%s475 + $0xf2] sm:$0xff]
      %v689 = vld [vmem:[%s475 + $0xfa] sm:$0xff]
      %v690 = vld [vmem:[%s475 + $0x10a] sm:$0xff]
      %v691 = vld [vmem:[%s475 + $0x112] sm:$0xff]
      %v692 = vld [vmem:[%s475 + $0x122] sm:$0xff]
      %v693 = vld [vmem:[%s475 + $0x12a] sm:$0xff]
      %v694 = vld [vmem:[%s475 + $0x13a] sm:$0xff]
      %v695 = vld [vmem:[%s475 + $0x142] sm:$0xff]
      %v696 = vld [vmem:[%s475 + $0x152] sm:$0xff]
      %v697 = vld [vmem:[%s475 + $0x15a] sm:$0xff]
      %v698 = vld [vmem:[%s475 + $0x16a] sm:$0xff]
      %v699 = vld [vmem:[%s475 + $0x172] sm:$0xff]
      %s700 = scalar_lea.vmem [#allocation2], 48
      %v701 = vld [vmem:[%s700] sm:$0xff]
      %v702 = vld [vmem:[%s700 + $0x8] sm:$0xff]
      %v703 = vld [vmem:[%s700 + $0x18] sm:$0xff]
      %v704 = vld [vmem:[%s700 + $0x20] sm:$0xff]
      %v705 = vld [vmem:[%s700 + $0x30] sm:$0xff]
      %v706 = vld [vmem:[%s700 + $0x38] sm:$0xff]
      %v707 = vld [vmem:[%s700 + $0x48] sm:$0xff]
      %v708 = vld [vmem:[%s700 + $0x50] sm:$0xff]
      %v709 = vld [vmem:[%s700 + $0x60] sm:$0xff]
      %v710 = vld [vmem:[%s700 + $0x68] sm:$0xff]
      %v711 = vld [vmem:[%s700 + $0x78] sm:$0xff]
      %v712 = vld [vmem:[%s700 + $0x80] sm:$0xff]
      %v713 = vld [vmem:[%s700 + $0x90] sm:$0xff]
      %v714 = vld [vmem:[%s700 + $0x98] sm:$0xff]
      %v715 = vld [vmem:[%s700 + $0xa8] sm:$0xff]
      %v716 = vld [vmem:[%s700 + $0xb0] sm:$0xff]
      %v717 = vld [vmem:[%s700 + $0xc0] sm:$0xff]
      %v718 = vld [vmem:[%s700 + $0xc8] sm:$0xff]
      %v719 = vld [vmem:[%s700 + $0xd8] sm:$0xff]
      %v720 = vld [vmem:[%s700 + $0xe0] sm:$0xff]
      %v721 = vld [vmem:[%s700 + $0xf0] sm:$0xff]
      %v722 = vld [vmem:[%s700 + $0xf8] sm:$0xff]
      %v723 = vld [vmem:[%s700 + $0x108] sm:$0xff]
      %v724 = vld [vmem:[%s700 + $0x110] sm:$0xff]
      %v725 = vld [vmem:[%s700 + $0x120] sm:$0xff]
      %v726 = vld [vmem:[%s700 + $0x128] sm:$0xff]
      %v727 = vld [vmem:[%s700 + $0x138] sm:$0xff]
      %v728 = vld [vmem:[%s700 + $0x140] sm:$0xff]
      %v729 = vld [vmem:[%s700 + $0x150] sm:$0xff]
      %v730 = vld [vmem:[%s700 + $0x158] sm:$0xff]
      %v731 = vld [vmem:[%s700 + $0x168] sm:$0xff]
      %v732 = vld [vmem:[%s700 + $0x170] sm:$0xff]
      %v733 = vld [vmem:[%s700 + $0x1] sm:$0xff]
      %v734 = vld [vmem:[%s700 + $0x9] sm:$0xff]
      %v735 = vld [vmem:[%s700 + $0x19] sm:$0xff]
      %v736 = vld [vmem:[%s700 + $0x21] sm:$0xff]
      %v737 = vld [vmem:[%s700 + $0x31] sm:$0xff]
      %v738 = vld [vmem:[%s700 + $0x39] sm:$0xff]
      %v739 = vld [vmem:[%s700 + $0x49] sm:$0xff]
      %v740 = vld [vmem:[%s700 + $0x51] sm:$0xff]
      %v741 = vld [vmem:[%s700 + $0x61] sm:$0xff]
      %v742 = vld [vmem:[%s700 + $0x69] sm:$0xff]
      %v743 = vld [vmem:[%s700 + $0x79] sm:$0xff]
      %v744 = vld [vmem:[%s700 + $0x81] sm:$0xff]
      %v745 = vld [vmem:[%s700 + $0x91] sm:$0xff]
      %v746 = vld [vmem:[%s700 + $0x99] sm:$0xff]
      %v747 = vld [vmem:[%s700 + $0xa9] sm:$0xff]
      %v748 = vld [vmem:[%s700 + $0xb1] sm:$0xff]
      %v749 = vld [vmem:[%s700 + $0xc1] sm:$0xff]
      %v750 = vld [vmem:[%s700 + $0xc9] sm:$0xff]
      %v751 = vld [vmem:[%s700 + $0xd9] sm:$0xff]
      %v752 = vld [vmem:[%s700 + $0xe1] sm:$0xff]
      %v753 = vld [vmem:[%s700 + $0xf1] sm:$0xff]
      %v754 = vld [vmem:[%s700 + $0xf9] sm:$0xff]
      %v755 = vld [vmem:[%s700 + $0x109] sm:$0xff]
      %v756 = vld [vmem:[%s700 + $0x111] sm:$0xff]
      %v757 = vld [vmem:[%s700 + $0x121] sm:$0xff]
      %v758 = vld [vmem:[%s700 + $0x129] sm:$0xff]
      %v759 = vld [vmem:[%s700 + $0x139] sm:$0xff]
      %v760 = vld [vmem:[%s700 + $0x141] sm:$0xff]
      %v761 = vld [vmem:[%s700 + $0x151] sm:$0xff]
      %v762 = vld [vmem:[%s700 + $0x159] sm:$0xff]
      %v763 = vld [vmem:[%s700 + $0x169] sm:$0xff]
      %v764 = vld [vmem:[%s700 + $0x171] sm:$0xff]
      %v765 = vld [vmem:[%s700 + $0x2] sm:$0xff]
      %v766 = vld [vmem:[%s700 + $0xa] sm:$0xff]
      %v767 = vld [vmem:[%s700 + $0x1a] sm:$0xff]
      %v768 = vld [vmem:[%s700 + $0x22] sm:$0xff]
      %v769 = vld [vmem:[%s700 + $0x32] sm:$0xff]
      %v770 = vld [vmem:[%s700 + $0x3a] sm:$0xff]
      %v771 = vld [vmem:[%s700 + $0x4a] sm:$0xff]
      %v772 = vld [vmem:[%s700 + $0x52] sm:$0xff]
      %v773 = vld [vmem:[%s700 + $0x62] sm:$0xff]
      %v774 = vld [vmem:[%s700 + $0x6a] sm:$0xff]
      %v775 = vld [vmem:[%s700 + $0x7a] sm:$0xff]
      %v776 = vld [vmem:[%s700 + $0x82] sm:$0xff]
      %v777 = vld [vmem:[%s700 + $0x92] sm:$0xff]
      %v778 = vld [vmem:[%s700 + $0x9a] sm:$0xff]
      %v779 = vld [vmem:[%s700 + $0xaa] sm:$0xff]
      %v780 = vld [vmem:[%s700 + $0xb2] sm:$0xff]
      %v781 = vld [vmem:[%s700 + $0xc2] sm:$0xff]
      %v782 = vld [vmem:[%s700 + $0xca] sm:$0xff]
      %v783 = vld [vmem:[%s700 + $0xda] sm:$0xff]
      %v784 = vld [vmem:[%s700 + $0xe2] sm:$0xff]
      %v785 = vld [vmem:[%s700 + $0xf2] sm:$0xff]
      %v786 = vld [vmem:[%s700 + $0xfa] sm:$0xff]
      %v787 = vld [vmem:[%s700 + $0x10a] sm:$0xff]
      %v788 = vld [vmem:[%s700 + $0x112] sm:$0xff]
      %v789 = vld [vmem:[%s700 + $0x122] sm:$0xff]
      %v790 = vld [vmem:[%s700 + $0x12a] sm:$0xff]
      %v791 = vld [vmem:[%s700 + $0x13a] sm:$0xff]
      %v792 = vld [vmem:[%s700 + $0x142] sm:$0xff]
      %v793 = vld [vmem:[%s700 + $0x152] sm:$0xff]
      %v794 = vld [vmem:[%s700 + $0x15a] sm:$0xff]
      %v795 = vld [vmem:[%s700 + $0x16a] sm:$0xff]
      %v796 = vld [vmem:[%s700 + $0x172] sm:$0xff]
      %v797 = vpack.c.bf16 %v509, %v508
      %v798 = vpack.c.bf16 %v541, %v540
      %v799 = vpack.c.bf16 %v573, %v572
      %v800 = vpack.c.bf16 %v605, %v604
      %v801 = vpack.c.bf16 %v637, %v636
      %v802 = vpack.c.bf16 %v669, %v668
      %v803 = vpack.c.bf16 %v702, %v701
      %v804 = vpack.c.bf16 %v734, %v733
      %v805 = vpack.c.bf16 %v766, %v765
      %v806 = vpack.c.bf16 %v511, %v510
      %v807 = vpack.c.bf16 %v543, %v542
      %v808 = vpack.c.bf16 %v575, %v574
      %v809 = vpack.c.bf16 %v607, %v606
      %v810 = vpack.c.bf16 %v639, %v638
      %v811 = vpack.c.bf16 %v671, %v670
      %v812 = vpack.c.bf16 %v704, %v703
      %v813 = vpack.c.bf16 %v736, %v735
      %v814 = vpack.c.bf16 %v768, %v767
      %v815 = vpack.c.bf16 %v513, %v512
      %v816 = vpack.c.bf16 %v545, %v544
      %v817 = vpack.c.bf16 %v577, %v576
      %v818 = vpack.c.bf16 %v609, %v608
      %v819 = vpack.c.bf16 %v641, %v640
      %v820 = vpack.c.bf16 %v673, %v672
      %v821 = vpack.c.bf16 %v706, %v705
      %v822 = vpack.c.bf16 %v738, %v737
      %v823 = vpack.c.bf16 %v770, %v769
      %v824 = vpack.c.bf16 %v515, %v514
      %v825 = vpack.c.bf16 %v547, %v546
      %v826 = vpack.c.bf16 %v579, %v578
      %v827 = vpack.c.bf16 %v611, %v610
      %v828 = vpack.c.bf16 %v643, %v642
      %v829 = vpack.c.bf16 %v675, %v674
      %v830 = vpack.c.bf16 %v708, %v707
      %v831 = vpack.c.bf16 %v740, %v739
      %v832 = vpack.c.bf16 %v772, %v771
      %v833 = vpack.c.bf16 %v517, %v516
      %v834 = vpack.c.bf16 %v549, %v548
      %v835 = vpack.c.bf16 %v581, %v580
      %v836 = vpack.c.bf16 %v613, %v612
      %v837 = vpack.c.bf16 %v645, %v644
      %v838 = vpack.c.bf16 %v677, %v676
      %v839 = vpack.c.bf16 %v710, %v709
      %v840 = vpack.c.bf16 %v742, %v741
      %v841 = vpack.c.bf16 %v774, %v773
      %v842 = vpack.c.bf16 %v519, %v518
      %v843 = vpack.c.bf16 %v551, %v550
      %v844 = vpack.c.bf16 %v583, %v582
      %v845 = vpack.c.bf16 %v615, %v614
      %v846 = vpack.c.bf16 %v647, %v646
      %v847 = vpack.c.bf16 %v679, %v678
      %v848 = vpack.c.bf16 %v712, %v711
      %v849 = vpack.c.bf16 %v744, %v743
      %v850 = vpack.c.bf16 %v776, %v775
      %v851 = vpack.c.bf16 %v521, %v520
      %v852 = vpack.c.bf16 %v553, %v552
      %v853 = vpack.c.bf16 %v585, %v584
      %v854 = vpack.c.bf16 %v617, %v616
      %v855 = vpack.c.bf16 %v649, %v648
      %v856 = vpack.c.bf16 %v681, %v680
      %v857 = vpack.c.bf16 %v714, %v713
      %v858 = vpack.c.bf16 %v746, %v745
      %v859 = vpack.c.bf16 %v778, %v777
      %v860 = vpack.c.bf16 %v523, %v522
      %v861 = vpack.c.bf16 %v555, %v554
      %v862 = vpack.c.bf16 %v587, %v586
      %v863 = vpack.c.bf16 %v619, %v618
      %v864 = vpack.c.bf16 %v651, %v650
      %v865 = vpack.c.bf16 %v683, %v682
      %v866 = vpack.c.bf16 %v716, %v715
      %v867 = vpack.c.bf16 %v748, %v747
      %v868 = vpack.c.bf16 %v780, %v779
      %v869 = vpack.c.bf16 %v525, %v524
      %v870 = vpack.c.bf16 %v557, %v556
      %v871 = vpack.c.bf16 %v589, %v588
      %v872 = vpack.c.bf16 %v621, %v620
      %v873 = vpack.c.bf16 %v653, %v652
      %v874 = vpack.c.bf16 %v685, %v684
      %v875 = vpack.c.bf16 %v718, %v717
      %v876 = vpack.c.bf16 %v750, %v749
      %v877 = vpack.c.bf16 %v782, %v781
      %v878 = vpack.c.bf16 %v527, %v526
      %v879 = vpack.c.bf16 %v559, %v558
      %v880 = vpack.c.bf16 %v591, %v590
      %v881 = vpack.c.bf16 %v623, %v622
      %v882 = vpack.c.bf16 %v655, %v654
      %v883 = vpack.c.bf16 %v687, %v686
      %v884 = vpack.c.bf16 %v720, %v719
      %v885 = vpack.c.bf16 %v752, %v751
      %v886 = vpack.c.bf16 %v784, %v783
      %v887 = vpack.c.bf16 %v529, %v528
      %v888 = vpack.c.bf16 %v561, %v560
      %v889 = vpack.c.bf16 %v593, %v592
      %v890 = vpack.c.bf16 %v625, %v624
      %v891 = vpack.c.bf16 %v657, %v656
      %v892 = vpack.c.bf16 %v689, %v688
      %v893 = vpack.c.bf16 %v722, %v721
      %v894 = vpack.c.bf16 %v754, %v753
      %v895 = vpack.c.bf16 %v786, %v785
      %v896 = vpack.c.bf16 %v531, %v530
      %v897 = vpack.c.bf16 %v563, %v562
      %v898 = vpack.c.bf16 %v595, %v594
      %v899 = vpack.c.bf16 %v627, %v626
      %v900 = vpack.c.bf16 %v659, %v658
      %v901 = vpack.c.bf16 %v691, %v690
      %v902 = vpack.c.bf16 %v724, %v723
      %v903 = vpack.c.bf16 %v756, %v755
      %v904 = vpack.c.bf16 %v788, %v787
      %v905 = vpack.c.bf16 %v533, %v532
      %v906 = vpack.c.bf16 %v565, %v564
      %v907 = vpack.c.bf16 %v597, %v596
      %v908 = vpack.c.bf16 %v629, %v628
      %v909 = vpack.c.bf16 %v661, %v660
      %v910 = vpack.c.bf16 %v693, %v692
      %v911 = vpack.c.bf16 %v726, %v725
      %v912 = vpack.c.bf16 %v758, %v757
      %v913 = vpack.c.bf16 %v790, %v789
      %v914 = vpack.c.bf16 %v535, %v534
      %v915 = vpack.c.bf16 %v567, %v566
      %v916 = vpack.c.bf16 %v599, %v598
      %v917 = vpack.c.bf16 %v631, %v630
      %v918 = vpack.c.bf16 %v663, %v662
      %v919 = vpack.c.bf16 %v695, %v694
      %v920 = vpack.c.bf16 %v728, %v727
      %v921 = vpack.c.bf16 %v760, %v759
      %v922 = vpack.c.bf16 %v792, %v791
      %v923 = vpack.c.bf16 %v537, %v536
      %v924 = vpack.c.bf16 %v569, %v568
      %v925 = vpack.c.bf16 %v601, %v600
      %v926 = vpack.c.bf16 %v633, %v632
      %v927 = vpack.c.bf16 %v665, %v664
      %v928 = vpack.c.bf16 %v697, %v696
      %v929 = vpack.c.bf16 %v730, %v729
      %v930 = vpack.c.bf16 %v762, %v761
      %v931 = vpack.c.bf16 %v794, %v793
      %v932 = vpack.c.bf16 %v539, %v538
      %v933 = vpack.c.bf16 %v571, %v570
      %v934 = vpack.c.bf16 %v603, %v602
      %v935 = vpack.c.bf16 %v635, %v634
      %v936 = vpack.c.bf16 %v667, %v666
      %v937 = vpack.c.bf16 %v699, %v698
      %v938 = vpack.c.bf16 %v732, %v731
      %v939 = vpack.c.bf16 %v764, %v763
      %v940 = vpack.c.bf16 %v796, %v795
      %v941 = vld [vmem:[%s4] sm:$0xf]
      %v942 = vld [vmem:[%s4 + $0x4] sm:$0xf]
      %v943 = vld [vmem:[%s4 + $0x8] sm:$0xf]
      %v944 = vld [vmem:[%s4 + $0xc] sm:$0xf]
      %v945 = vld [vmem:[%s4 + $0x10] sm:$0xf]
      %v946 = vld [vmem:[%s4 + $0x14] sm:$0xf]
      %v947 = vld [vmem:[%s4 + $0x18] sm:$0xf]
      %v948 = vld [vmem:[%s4 + $0x1c] sm:$0xf]
      %v949 = vld [vmem:[%s4 + $0x20] sm:$0xf]
      %v950 = vld [vmem:[%s4 + $0x24] sm:$0xf]
      %v951 = vld [vmem:[%s4 + $0x28] sm:$0xf]
      %v952 = vld [vmem:[%s4 + $0x2c] sm:$0xf]
      %v953 = vld [vmem:[%s4 + $0x30] sm:$0xf]
      %v954 = vld [vmem:[%s4 + $0x34] sm:$0xf]
      %v955 = vld [vmem:[%s4 + $0x38] sm:$0xf]
      %v956 = vld [vmem:[%s4 + $0x3c] sm:$0xf]
      %v957 = vld [vmem:[%s4 + $0x40] sm:$0xf]
      %v958 = vld [vmem:[%s4 + $0x44] sm:$0xf]
      %v959 = vld [vmem:[%s4 + $0x48] sm:$0xf]
      %v960 = vld [vmem:[%s4 + $0x4c] sm:$0xf]
      %v961 = vld [vmem:[%s4 + $0x50] sm:$0xf]
      %v962 = vld [vmem:[%s4 + $0x54] sm:$0xf]
      %v963 = vld [vmem:[%s4 + $0x58] sm:$0xf]
      %v964 = vld [vmem:[%s4 + $0x5c] sm:$0xf]
      %v965 = vld [vmem:[%s4 + $0x60] sm:$0xf]
      %v966 = vld [vmem:[%s4 + $0x64] sm:$0xf]
      %v967 = vld [vmem:[%s4 + $0x68] sm:$0xf]
      %v968 = vld [vmem:[%s4 + $0x6c] sm:$0xf]
      %v969 = vld [vmem:[%s4 + $0x70] sm:$0xf]
      %v970 = vld [vmem:[%s4 + $0x74] sm:$0xf]
      %v971 = vld [vmem:[%s4 + $0x78] sm:$0xf]
      %v972 = vld [vmem:[%s4 + $0x7c] sm:$0xf]
      %v973 = vld [vmem:[%s4 + $0x80] sm:$0xf]
      %v974 = vld [vmem:[%s4 + $0x84] sm:$0xf]
      %v975 = vld [vmem:[%s4 + $0x88] sm:$0xf]
      %v976 = vld [vmem:[%s4 + $0x8c] sm:$0xf]
      %v977 = vld [vmem:[%s4 + $0x90] sm:$0xf]
      %v978 = vld [vmem:[%s4 + $0x94] sm:$0xf]
      %v979 = vld [vmem:[%s4 + $0x98] sm:$0xf]
      %v980 = vld [vmem:[%s4 + $0x9c] sm:$0xf]
      %v981 = vld [vmem:[%s4 + $0xa0] sm:$0xf]
      %v982 = vld [vmem:[%s4 + $0xa4] sm:$0xf]
      %v983 = vld [vmem:[%s4 + $0xa8] sm:$0xf]
      %v984 = vld [vmem:[%s4 + $0xac] sm:$0xf]
      %v985 = vld [vmem:[%s4 + $0xb0] sm:$0xf]
      %v986 = vld [vmem:[%s4 + $0xb4] sm:$0xf]
      %v987 = vld [vmem:[%s4 + $0xb8] sm:$0xf]
      %v988 = vld [vmem:[%s4 + $0xbc] sm:$0xf]
      %v989 = vld [vmem:[%s4 + $0xc0] sm:$0xf]
      %v990 = vld [vmem:[%s4 + $0xc4] sm:$0xf]
      %v991 = vld [vmem:[%s4 + $0xc8] sm:$0xf]
      %v992 = vld [vmem:[%s4 + $0xcc] sm:$0xf]
      %v993 = vld [vmem:[%s4 + $0xd0] sm:$0xf]
      %v994 = vld [vmem:[%s4 + $0xd4] sm:$0xf]
      %v995 = vld [vmem:[%s4 + $0xd8] sm:$0xf]
      %v996 = vld [vmem:[%s4 + $0xdc] sm:$0xf]
      %v997 = vld [vmem:[%s4 + $0xe0] sm:$0xf]
      %v998 = vld [vmem:[%s4 + $0xe4] sm:$0xf]
      %v999 = vld [vmem:[%s4 + $0xe8] sm:$0xf]
      %v1000 = vld [vmem:[%s4 + $0xec] sm:$0xf]
      %v1001 = vld [vmem:[%s4 + $0xf0] sm:$0xf]
      %v1002 = vld [vmem:[%s4 + $0xf4] sm:$0xf]
      %v1003 = vld [vmem:[%s4 + $0xf8] sm:$0xf]
      %v1004 = vld [vmem:[%s4 + $0xfc] sm:$0xf]
      %v1005 = vld [vmem:[%s4 + $0x100] sm:$0xf]
      %v1006 = vld [vmem:[%s4 + $0x104] sm:$0xf]
      %v1007 = vld [vmem:[%s4 + $0x108] sm:$0xf]
      %v1008 = vld [vmem:[%s4 + $0x10c] sm:$0xf]
      %v1009 = vld [vmem:[%s4 + $0x110] sm:$0xf]
      %v1010 = vld [vmem:[%s4 + $0x114] sm:$0xf]
      %v1011 = vld [vmem:[%s4 + $0x118] sm:$0xf]
      %v1012 = vld [vmem:[%s4 + $0x11c] sm:$0xf]
      %v1013 = vld [vmem:[%s4 + $0x120] sm:$0xf]
      %v1014 = vld [vmem:[%s4 + $0x124] sm:$0xf]
      %v1015 = vld [vmem:[%s4 + $0x128] sm:$0xf]
      %v1016 = vld [vmem:[%s4 + $0x12c] sm:$0xf]
      %v1017 = vld [vmem:[%s4 + $0x130] sm:$0xf]
      %v1018 = vld [vmem:[%s4 + $0x134] sm:$0xf]
      %v1019 = vld [vmem:[%s4 + $0x138] sm:$0xf]
      %v1020 = vld [vmem:[%s4 + $0x13c] sm:$0xf]
      %v1021 = vld [vmem:[%s4 + $0x140] sm:$0xf]
      %v1022 = vld [vmem:[%s4 + $0x144] sm:$0xf]
      %v1023 = vld [vmem:[%s4 + $0x148] sm:$0xf]
      %v1024 = vld [vmem:[%s4 + $0x14c] sm:$0xf]
      %v1025 = vld [vmem:[%s4 + $0x150] sm:$0xf]
      %v1026 = vld [vmem:[%s4 + $0x154] sm:$0xf]
      %v1027 = vld [vmem:[%s4 + $0x158] sm:$0xf]
      %v1028 = vld [vmem:[%s4 + $0x15c] sm:$0xf]
      %v1029 = vld [vmem:[%s4 + $0x160] sm:$0xf]
      %v1030 = vld [vmem:[%s4 + $0x164] sm:$0xf]
      %v1031 = vld [vmem:[%s4 + $0x168] sm:$0xf]
      %v1032 = vld [vmem:[%s4 + $0x16c] sm:$0xf]
      %v1033 = vld [vmem:[%s4 + $0x170] sm:$0xf]
      %v1034 = vld [vmem:[%s4 + $0x174] sm:$0xf]
      %v1035 = vld [vmem:[%s4 + $0x178] sm:$0xf]
      %v1036 = vld [vmem:[%s4 + $0x17c] sm:$0xf]
      %v1037 = vld [vmem:[%s4 + $0x180] sm:$0xf]
      %v1038 = vld [vmem:[%s4 + $0x184] sm:$0xf]
      %v1039 = vld [vmem:[%s4 + $0x188] sm:$0xf]
      %v1040 = vld [vmem:[%s4 + $0x18c] sm:$0xf]
      %v1041 = vld [vmem:[%s4 + $0x190] sm:$0xf]
      %v1042 = vld [vmem:[%s4 + $0x194] sm:$0xf]
      %v1043 = vld [vmem:[%s4 + $0x198] sm:$0xf]
      %v1044 = vld [vmem:[%s4 + $0x19c] sm:$0xf]
      %v1045 = vld [vmem:[%s4 + $0x1a0] sm:$0xf]
      %v1046 = vld [vmem:[%s4 + $0x1a4] sm:$0xf]
      %v1047 = vld [vmem:[%s4 + $0x1a8] sm:$0xf]
      %v1048 = vld [vmem:[%s4 + $0x1ac] sm:$0xf]
      %v1049 = vld [vmem:[%s4 + $0x1b0] sm:$0xf]
      %v1050 = vld [vmem:[%s4 + $0x1b4] sm:$0xf]
      %v1051 = vld [vmem:[%s4 + $0x1b8] sm:$0xf]
      %v1052 = vld [vmem:[%s4 + $0x1bc] sm:$0xf]
      %v1053 = vld [vmem:[%s4 + $0x1c0] sm:$0xf]
      %v1054 = vld [vmem:[%s4 + $0x1c4] sm:$0xf]
      %v1055 = vld [vmem:[%s4 + $0x1c8] sm:$0xf]
      %v1056 = vld [vmem:[%s4 + $0x1cc] sm:$0xf]
      %v1057 = vld [vmem:[%s4 + $0x1d0] sm:$0xf]
      %v1058 = vld [vmem:[%s4 + $0x1d4] sm:$0xf]
      %v1059 = vld [vmem:[%s4 + $0x1d8] sm:$0xf]
      %v1060 = vld [vmem:[%s4 + $0x1dc] sm:$0xf]
      %v1061 = vld [vmem:[%s4 + $0x1e0] sm:$0xf]
      %v1062 = vld [vmem:[%s4 + $0x1e4] sm:$0xf]
      %v1063 = vld [vmem:[%s4 + $0x1e8] sm:$0xf]
      %v1064 = vld [vmem:[%s4 + $0x1ec] sm:$0xf]
      %v1065 = vld [vmem:[%s4 + $0x1f0] sm:$0xf]
      %v1066 = vld [vmem:[%s4 + $0x1f4] sm:$0xf]
      %v1067 = vld [vmem:[%s4 + $0x1f8] sm:$0xf]
      %v1068 = vld [vmem:[%s4 + $0x1fc] sm:$0xf]
      %v1069 = vld [vmem:[%s4 + $0x200] sm:$0xf]
      %v1070 = vld [vmem:[%s4 + $0x204] sm:$0xf]
      %v1071 = vld [vmem:[%s4 + $0x208] sm:$0xf]
      %v1072 = vld [vmem:[%s4 + $0x20c] sm:$0xf]
      %v1073 = vld [vmem:[%s4 + $0x210] sm:$0xf]
      %v1074 = vld [vmem:[%s4 + $0x214] sm:$0xf]
      %v1075 = vld [vmem:[%s4 + $0x218] sm:$0xf]
      %v1076 = vld [vmem:[%s4 + $0x21c] sm:$0xf]
      %v1077 = vld [vmem:[%s4 + $0x220] sm:$0xf]
      %v1078 = vld [vmem:[%s4 + $0x224] sm:$0xf]
      %v1079 = vld [vmem:[%s4 + $0x228] sm:$0xf]
      %v1080 = vld [vmem:[%s4 + $0x22c] sm:$0xf]
      %v1081 = vld [vmem:[%s4 + $0x230] sm:$0xf]
      %v1082 = vld [vmem:[%s4 + $0x234] sm:$0xf]
      %v1083 = vld [vmem:[%s4 + $0x238] sm:$0xf]
      %v1084 = vld [vmem:[%s4 + $0x23c] sm:$0xf]
      %v1085 = vld [vmem:[%s5] sm:$0x1]
      %v1087 = vlaneseq
      %v1088 = vshrl.u32 %v1087, 7
      %v1089 = vsub.s32 0, %v1088
      %v1090 = vrot.slane %v1085, %v1089
      %v1236 = vunpack.c.l.b16 %v941
      %v1237 = vunpack.c.l.b16 %v942
      %v1238 = vunpack.c.l.b16 %v943
      %v1239 = vunpack.c.l.b16 %v944
      %v1240 = vunpack.c.l.b16 %v945
      %v1241 = vunpack.c.l.b16 %v946
      %v1242 = vunpack.c.l.b16 %v947
      %v1243 = vunpack.c.l.b16 %v948
      %v1244 = vunpack.c.l.b16 %v949
      %v1245 = vunpack.c.l.b16 %v950
      %v1246 = vunpack.c.l.b16 %v951
      %v1247 = vunpack.c.l.b16 %v952
      %v1248 = vunpack.c.l.b16 %v953
      %v1249 = vunpack.c.l.b16 %v954
      %v1250 = vunpack.c.l.b16 %v955
      %v1251 = vunpack.c.l.b16 %v956
      %v1252 = vunpack.c.l.b16 %v957
      %v1253 = vunpack.c.l.b16 %v958
      %v1254 = vunpack.c.l.b16 %v959
      %v1255 = vunpack.c.l.b16 %v960
      %v1256 = vunpack.c.l.b16 %v961
      %v1257 = vunpack.c.l.b16 %v962
      %v1258 = vunpack.c.l.b16 %v963
      %v1259 = vunpack.c.l.b16 %v964
      %v1260 = vunpack.c.l.b16 %v965
      %v1261 = vunpack.c.l.b16 %v966
      %v1262 = vunpack.c.l.b16 %v967
      %v1263 = vunpack.c.l.b16 %v968
      %v1264 = vunpack.c.l.b16 %v969
      %v1265 = vunpack.c.l.b16 %v970
      %v1266 = vunpack.c.l.b16 %v971
      %v1267 = vunpack.c.l.b16 %v972
      %v1268 = vunpack.c.l.b16 %v973
      %v1269 = vunpack.c.l.b16 %v974
      %v1270 = vunpack.c.l.b16 %v975
      %v1271 = vunpack.c.l.b16 %v976
      %v1272 = vunpack.c.l.b16 %v977
      %v1273 = vunpack.c.l.b16 %v978
      %v1274 = vunpack.c.l.b16 %v979
      %v1275 = vunpack.c.l.b16 %v980
      %v1276 = vunpack.c.l.b16 %v981
      %v1277 = vunpack.c.l.b16 %v982
      %v1278 = vunpack.c.l.b16 %v983
      %v1279 = vunpack.c.l.b16 %v984
      %v1280 = vunpack.c.l.b16 %v985
      %v1281 = vunpack.c.l.b16 %v986
      %v1282 = vunpack.c.l.b16 %v987
      %v1283 = vunpack.c.l.b16 %v988
      %v1284 = vunpack.c.l.b16 %v989
      %v1285 = vunpack.c.l.b16 %v990
      %v1286 = vunpack.c.l.b16 %v991
      %v1287 = vunpack.c.l.b16 %v992
      %v1288 = vunpack.c.l.b16 %v993
      %v1289 = vunpack.c.l.b16 %v994
      %v1290 = vunpack.c.l.b16 %v995
      %v1291 = vunpack.c.l.b16 %v996
      %v1292 = vunpack.c.l.b16 %v997
      %v1293 = vunpack.c.l.b16 %v998
      %v1294 = vunpack.c.l.b16 %v999
      %v1295 = vunpack.c.l.b16 %v1000
      %v1296 = vunpack.c.l.b16 %v1001
      %v1297 = vunpack.c.l.b16 %v1002
      %v1298 = vunpack.c.l.b16 %v1003
      %v1299 = vunpack.c.l.b16 %v1004
      %v1300 = vunpack.c.l.b16 %v1005
      %v1301 = vunpack.c.l.b16 %v1006
      %v1302 = vunpack.c.l.b16 %v1007
      %v1303 = vunpack.c.l.b16 %v1008
      %v1304 = vunpack.c.l.b16 %v1009
      %v1305 = vunpack.c.l.b16 %v1010
      %v1306 = vunpack.c.l.b16 %v1011
      %v1307 = vunpack.c.l.b16 %v1012
      %v1308 = vunpack.c.l.b16 %v1013
      %v1309 = vunpack.c.l.b16 %v1014
      %v1310 = vunpack.c.l.b16 %v1015
      %v1311 = vunpack.c.l.b16 %v1016
      %v1312 = vunpack.c.l.b16 %v1017
      %v1313 = vunpack.c.l.b16 %v1018
      %v1314 = vunpack.c.l.b16 %v1019
      %v1315 = vunpack.c.l.b16 %v1020
      %v1316 = vunpack.c.l.b16 %v1021
      %v1317 = vunpack.c.l.b16 %v1022
      %v1318 = vunpack.c.l.b16 %v1023
      %v1319 = vunpack.c.l.b16 %v1024
      %v1320 = vunpack.c.l.b16 %v1025
      %v1321 = vunpack.c.l.b16 %v1026
      %v1322 = vunpack.c.l.b16 %v1027
      %v1323 = vunpack.c.l.b16 %v1028
      %v1324 = vunpack.c.l.b16 %v1029
      %v1325 = vunpack.c.l.b16 %v1030
      %v1326 = vunpack.c.l.b16 %v1031
      %v1327 = vunpack.c.l.b16 %v1032
      %v1328 = vunpack.c.l.b16 %v1033
      %v1329 = vunpack.c.l.b16 %v1034
      %v1330 = vunpack.c.l.b16 %v1035
      %v1331 = vunpack.c.l.b16 %v1036
      %v1332 = vunpack.c.l.b16 %v1037
      %v1333 = vunpack.c.l.b16 %v1038
      %v1334 = vunpack.c.l.b16 %v1039
      %v1335 = vunpack.c.l.b16 %v1040
      %v1336 = vunpack.c.l.b16 %v1041
      %v1337 = vunpack.c.l.b16 %v1042
      %v1338 = vunpack.c.l.b16 %v1043
      %v1339 = vunpack.c.l.b16 %v1044
      %v1340 = vunpack.c.l.b16 %v1045
      %v1341 = vunpack.c.l.b16 %v1046
      %v1342 = vunpack.c.l.b16 %v1047
      %v1343 = vunpack.c.l.b16 %v1048
      %v1344 = vunpack.c.l.b16 %v1049
      %v1345 = vunpack.c.l.b16 %v1050
      %v1346 = vunpack.c.l.b16 %v1051
      %v1347 = vunpack.c.l.b16 %v1052
      %v1348 = vunpack.c.l.b16 %v1053
      %v1349 = vunpack.c.l.b16 %v1054
      %v1350 = vunpack.c.l.b16 %v1055
      %v1351 = vunpack.c.l.b16 %v1056
      %v1352 = vunpack.c.l.b16 %v1057
      %v1353 = vunpack.c.l.b16 %v1058
      %v1354 = vunpack.c.l.b16 %v1059
      %v1355 = vunpack.c.l.b16 %v1060
      %v1356 = vunpack.c.l.b16 %v1061
      %v1357 = vunpack.c.l.b16 %v1062
      %v1358 = vunpack.c.l.b16 %v1063
      %v1359 = vunpack.c.l.b16 %v1064
      %v1360 = vunpack.c.l.b16 %v1065
      %v1361 = vunpack.c.l.b16 %v1066
      %v1362 = vunpack.c.l.b16 %v1067
      %v1363 = vunpack.c.l.b16 %v1068
      %v1364 = vunpack.c.l.b16 %v1069
      %v1365 = vunpack.c.l.b16 %v1070
      %v1366 = vunpack.c.l.b16 %v1071
      %v1367 = vunpack.c.l.b16 %v1072
      %v1368 = vunpack.c.l.b16 %v1073
      %v1369 = vunpack.c.l.b16 %v1074
      %v1370 = vunpack.c.l.b16 %v1075
      %v1371 = vunpack.c.l.b16 %v1076
      %v1372 = vunpack.c.l.b16 %v1077
      %v1373 = vunpack.c.l.b16 %v1078
      %v1374 = vunpack.c.l.b16 %v1079
      %v1375 = vunpack.c.l.b16 %v1080
      %v1376 = vunpack.c.l.b16 %v1081
      %v1377 = vunpack.c.l.b16 %v1082
      %v1378 = vunpack.c.l.b16 %v1083
      %v1379 = vunpack.c.l.b16 %v1084
      %v1380 = vpack.c.b16 %v1237, %v1236
      %v1381 = vpack.c.b16 %v1239, %v1238
      %v1382 = vpack.c.b16 %v1241, %v1240
      %v1383 = vpack.c.b16 %v1243, %v1242
      %v1384 = vpack.c.b16 %v1245, %v1244
      %v1385 = vpack.c.b16 %v1247, %v1246
      %v1386 = vpack.c.b16 %v1249, %v1248
      %v1387 = vpack.c.b16 %v1251, %v1250
      %v1388 = vpack.c.b16 %v1253, %v1252
      %v1389 = vpack.c.b16 %v1255, %v1254
      %v1390 = vpack.c.b16 %v1257, %v1256
      %v1391 = vpack.c.b16 %v1259, %v1258
      %v1392 = vpack.c.b16 %v1261, %v1260
      %v1393 = vpack.c.b16 %v1263, %v1262
      %v1394 = vpack.c.b16 %v1265, %v1264
      %v1395 = vpack.c.b16 %v1267, %v1266
      %v1396 = vpack.c.b16 %v1269, %v1268
      %v1397 = vpack.c.b16 %v1271, %v1270
      %v1398 = vpack.c.b16 %v1273, %v1272
      %v1399 = vpack.c.b16 %v1275, %v1274
      %v1400 = vpack.c.b16 %v1277, %v1276
      %v1401 = vpack.c.b16 %v1279, %v1278
      %v1402 = vpack.c.b16 %v1281, %v1280
      %v1403 = vpack.c.b16 %v1283, %v1282
      %v1404 = vpack.c.b16 %v1285, %v1284
      %v1405 = vpack.c.b16 %v1287, %v1286
      %v1406 = vpack.c.b16 %v1289, %v1288
      %v1407 = vpack.c.b16 %v1291, %v1290
      %v1408 = vpack.c.b16 %v1293, %v1292
      %v1409 = vpack.c.b16 %v1295, %v1294
      %v1410 = vpack.c.b16 %v1297, %v1296
      %v1411 = vpack.c.b16 %v1299, %v1298
      %v1412 = vpack.c.b16 %v1301, %v1300
      %v1413 = vpack.c.b16 %v1303, %v1302
      %v1414 = vpack.c.b16 %v1305, %v1304
      %v1415 = vpack.c.b16 %v1307, %v1306
      %v1416 = vpack.c.b16 %v1309, %v1308
      %v1417 = vpack.c.b16 %v1311, %v1310
      %v1418 = vpack.c.b16 %v1313, %v1312
      %v1419 = vpack.c.b16 %v1315, %v1314
      %v1420 = vpack.c.b16 %v1317, %v1316
      %v1421 = vpack.c.b16 %v1319, %v1318
      %v1422 = vpack.c.b16 %v1321, %v1320
      %v1423 = vpack.c.b16 %v1323, %v1322
      %v1424 = vpack.c.b16 %v1325, %v1324
      %v1425 = vpack.c.b16 %v1327, %v1326
      %v1426 = vpack.c.b16 %v1329, %v1328
      %v1427 = vpack.c.b16 %v1331, %v1330
      %v1428 = vpack.c.b16 %v1333, %v1332
      %v1429 = vpack.c.b16 %v1335, %v1334
      %v1430 = vpack.c.b16 %v1337, %v1336
      %v1431 = vpack.c.b16 %v1339, %v1338
      %v1432 = vpack.c.b16 %v1341, %v1340
      %v1433 = vpack.c.b16 %v1343, %v1342
      %v1434 = vpack.c.b16 %v1345, %v1344
      %v1435 = vpack.c.b16 %v1347, %v1346
      %v1436 = vpack.c.b16 %v1349, %v1348
      %v1437 = vpack.c.b16 %v1351, %v1350
      %v1438 = vpack.c.b16 %v1353, %v1352
      %v1439 = vpack.c.b16 %v1355, %v1354
      %v1440 = vpack.c.b16 %v1357, %v1356
      %v1441 = vpack.c.b16 %v1359, %v1358
      %v1442 = vpack.c.b16 %v1361, %v1360
      %v1443 = vpack.c.b16 %v1363, %v1362
      %v1444 = vpack.c.b16 %v1365, %v1364
      %v1445 = vpack.c.b16 %v1367, %v1366
      %v1446 = vpack.c.b16 %v1369, %v1368
      %v1447 = vpack.c.b16 %v1371, %v1370
      %v1448 = vpack.c.b16 %v1373, %v1372
      %v1449 = vpack.c.b16 %v1375, %v1374
      %v1450 = vpack.c.b16 %v1377, %v1376
      %v1451 = vpack.c.b16 %v1379, %v1378
      %1524 = vmatprep.subr.bf16.mxu0 0
      %1525 = vmatpush1.bf16.msra.mxu0 %v1387
      %1526 = vmatprep.subr.bf16.mxu0 0
      %1527 = vmatpush1.bf16.msra.mxu0 %v1386
      %1528 = vmatprep.subr.bf16.mxu0 0
      %1529 = vmatpush1.bf16.msra.mxu0 %v1385
      %1530 = vmatprep.subr.bf16.mxu0 0
      %1531 = vmatpush1.bf16.msra.mxu0 %v1384
      %1532 = vmatprep.subr.bf16.mxu0 0
      %1533 = vmatpush1.bf16.msra.mxu0 %v1383
      %1534 = vmatprep.subr.bf16.mxu0 0
      %1535 = vmatpush1.bf16.msra.mxu0 %v1382
      %1536 = vmatprep.subr.bf16.mxu0 0
      %1537 = vmatpush1.bf16.msra.mxu0 %v1381
      %1538 = vmatprep.subr.bf16.mxu0 0
      %1539 = vmatpush1.bf16.msra.mxu0 %v1380
      %1540 = vmatprep.subr.bf16.mxu0 0
      %1541 = vmatpush2.bf16.msra.mxu0 %v1395
      %1542 = vmatprep.subr.bf16.mxu0 0
      %1543 = vmatpush2.bf16.msra.mxu0 %v1394
      %1544 = vmatprep.subr.bf16.mxu0 0
      %1545 = vmatpush2.bf16.msra.mxu0 %v1393
      %1546 = vmatprep.subr.bf16.mxu0 0
      %1547 = vmatpush2.bf16.msra.mxu0 %v1392
      %1548 = vmatprep.subr.bf16.mxu0 0
      %1549 = vmatpush2.bf16.msra.mxu0 %v1391
      %1550 = vmatprep.subr.bf16.mxu0 0
      %1551 = vmatpush2.bf16.msra.mxu0 %v1390
      %1552 = vmatprep.subr.bf16.mxu0 0
      %1553 = vmatpush2.bf16.msra.mxu0 %v1389
      %1554 = vmatprep.subr.bf16.mxu0 0
      %1555 = vmatpush2.bf16.msra.mxu0 %v1388
      %1556 = vmatprep.mubr.bf16.mxu0 %v798
      %1557 = vmatmul.mubr.bf16.gmra.mxu0 %v797
      %v1558 = vpop.f32.mrf.mxu0
      %v1559 = vadd.f32 %v1090, %v1558
      %v1560 = vpop.f32.mrf.mxu0
      %v1561 = vpop.f32.mrf.mxu0
      %v1562 = vadd.f32 %v1090, %v1561
      %v1563 = vpop.f32.mrf.mxu0
      %1564 = vmatprep.mubr.bf16.mxu0 %v807
      %1565 = vmatmul.mubr.bf16.gmra.mxu0 %v806
      %v1566 = vpop.f32.mrf.mxu0
      %v1567 = vadd.f32 %v1090, %v1566
      %v1568 = vpop.f32.mrf.mxu0
      %v1569 = vpop.f32.mrf.mxu0
      %v1570 = vadd.f32 %v1090, %v1569
      %v1571 = vpop.f32.mrf.mxu0
      %1572 = vmatprep.mubr.bf16.mxu0 %v816
      %1573 = vmatmul.mubr.bf16.gmra.mxu0 %v815
      %v1574 = vpop.f32.mrf.mxu0
      %v1575 = vadd.f32 %v1090, %v1574
      %v1576 = vpop.f32.mrf.mxu0
      %v1577 = vpop.f32.mrf.mxu0
      %v1578 = vadd.f32 %v1090, %v1577
      %v1579 = vpop.f32.mrf.mxu0
      %1580 = vmatprep.mubr.bf16.mxu0 %v825
      %1581 = vmatmul.mubr.bf16.gmra.mxu0 %v824
      %v1582 = vpop.f32.mrf.mxu0
      %v1583 = vadd.f32 %v1090, %v1582
      %v1584 = vpop.f32.mrf.mxu0
      %v1585 = vpop.f32.mrf.mxu0
      %v1586 = vadd.f32 %v1090, %v1585
      %v1587 = vpop.f32.mrf.mxu0
      %1588 = vmatprep.mubr.bf16.mxu0 %v834
      %1589 = vmatmul.mubr.bf16.gmra.mxu0 %v833
      %v1590 = vpop.f32.mrf.mxu0
      %v1591 = vadd.f32 %v1090, %v1590
      %v1592 = vpop.f32.mrf.mxu0
      %v1593 = vpop.f32.mrf.mxu0
      %v1594 = vadd.f32 %v1090, %v1593
      %v1595 = vpop.f32.mrf.mxu0
      %1596 = vmatprep.mubr.bf16.mxu0 %v843
      %1597 = vmatmul.mubr.bf16.gmra.mxu0 %v842
      %v1598 = vpop.f32.mrf.mxu0
      %v1599 = vadd.f32 %v1090, %v1598
      %v1600 = vpop.f32.mrf.mxu0
      %v1601 = vpop.f32.mrf.mxu0
      %v1602 = vadd.f32 %v1090, %v1601
      %v1603 = vpop.f32.mrf.mxu0
      %1604 = vmatprep.mubr.bf16.mxu0 %v852
      %1605 = vmatmul.mubr.bf16.gmra.mxu0 %v851
      %v1606 = vpop.f32.mrf.mxu0
      %v1607 = vadd.f32 %v1090, %v1606
      %v1608 = vpop.f32.mrf.mxu0
      %v1609 = vpop.f32.mrf.mxu0
      %v1610 = vadd.f32 %v1090, %v1609
      %v1611 = vpop.f32.mrf.mxu0
      %1612 = vmatprep.mubr.bf16.mxu0 %v861
      %1613 = vmatmul.mubr.bf16.gmra.mxu0 %v860
      %v1614 = vpop.f32.mrf.mxu0
      %v1615 = vadd.f32 %v1090, %v1614
      %v1616 = vpop.f32.mrf.mxu0
      %v1617 = vpop.f32.mrf.mxu0
      %v1618 = vadd.f32 %v1090, %v1617
      %v1619 = vpop.f32.mrf.mxu0
      %1620 = vmatprep.mubr.bf16.mxu0 %v870
      %1621 = vmatmul.mubr.bf16.gmra.mxu0 %v869
      %v1622 = vpop.f32.mrf.mxu0
      %v1623 = vadd.f32 %v1090, %v1622
      %v1624 = vpop.f32.mrf.mxu0
      %v1625 = vpop.f32.mrf.mxu0
      %v1626 = vadd.f32 %v1090, %v1625
      %v1627 = vpop.f32.mrf.mxu0
      %1628 = vmatprep.mubr.bf16.mxu0 %v879
      %1629 = vmatmul.mubr.bf16.gmra.mxu0 %v878
      %v1630 = vpop.f32.mrf.mxu0
      %v1631 = vadd.f32 %v1090, %v1630
      %v1632 = vpop.f32.mrf.mxu0
      %v1633 = vpop.f32.mrf.mxu0
      %v1634 = vadd.f32 %v1090, %v1633
      %v1635 = vpop.f32.mrf.mxu0
      %1636 = vmatprep.mubr.bf16.mxu0 %v888
      %1637 = vmatmul.mubr.bf16.gmra.mxu0 %v887
      %v1638 = vpop.f32.mrf.mxu0
      %v1639 = vadd.f32 %v1090, %v1638
      %v1640 = vpop.f32.mrf.mxu0
      %v1641 = vpop.f32.mrf.mxu0
      %v1642 = vadd.f32 %v1090, %v1641
      %v1643 = vpop.f32.mrf.mxu0
      %1644 = vmatprep.mubr.bf16.mxu0 %v897
      %1645 = vmatmul.mubr.bf16.gmra.mxu0 %v896
      %v1646 = vpop.f32.mrf.mxu0
      %v1647 = vadd.f32 %v1090, %v1646
      %v1648 = vpop.f32.mrf.mxu0
      %v1649 = vpop.f32.mrf.mxu0
      %v1650 = vadd.f32 %v1090, %v1649
      %v1651 = vpop.f32.mrf.mxu0
      %1652 = vmatprep.mubr.bf16.mxu0 %v906
      %1653 = vmatmul.mubr.bf16.gmra.mxu0 %v905
      %v1654 = vpop.f32.mrf.mxu0
      %v1655 = vadd.f32 %v1090, %v1654
      %v1656 = vpop.f32.mrf.mxu0
      %v1657 = vpop.f32.mrf.mxu0
      %v1658 = vadd.f32 %v1090, %v1657
      %v1659 = vpop.f32.mrf.mxu0
      %1660 = vmatprep.mubr.bf16.mxu0 %v915
      %1661 = vmatmul.mubr.bf16.gmra.mxu0 %v914
      %v1662 = vpop.f32.mrf.mxu0
      %v1663 = vadd.f32 %v1090, %v1662
      %v1664 = vpop.f32.mrf.mxu0
      %v1665 = vpop.f32.mrf.mxu0
      %v1666 = vadd.f32 %v1090, %v1665
      %v1667 = vpop.f32.mrf.mxu0
      %1668 = vmatprep.mubr.bf16.mxu0 %v924
      %1669 = vmatmul.mubr.bf16.gmra.mxu0 %v923
      %v1670 = vpop.f32.mrf.mxu0
      %v1671 = vadd.f32 %v1090, %v1670
      %v1672 = vpop.f32.mrf.mxu0
      %v1673 = vpop.f32.mrf.mxu0
      %v1674 = vadd.f32 %v1090, %v1673
      %v1675 = vpop.f32.mrf.mxu0
      %1676 = vmatprep.mubr.bf16.mxu0 %v933
      %1677 = vmatmul.mubr.bf16.gmra.mxu0 %v932
      %v1678 = vpop.f32.mrf.mxu0
      %v1679 = vadd.f32 %v1090, %v1678
      %v1680 = vpop.f32.mrf.mxu0
      %v1681 = vpop.f32.mrf.mxu0
      %v1682 = vadd.f32 %v1090, %v1681
      %v1683 = vpop.f32.mrf.mxu0
      %1684 = vdwg.mxu0
      %1685 = vmatprep.subr.bf16.mxu0 0
      %1686 = vmatpush1.bf16.msra.mxu0 %v1403
      %1687 = vmatprep.subr.bf16.mxu0 0
      %1688 = vmatpush1.bf16.msra.mxu0 %v1402
      %1689 = vmatprep.subr.bf16.mxu0 0
      %1690 = vmatpush1.bf16.msra.mxu0 %v1401
      %1691 = vmatprep.subr.bf16.mxu0 0
      %1692 = vmatpush1.bf16.msra.mxu0 %v1400
      %1693 = vmatprep.subr.bf16.mxu0 0
      %1694 = vmatpush1.bf16.msra.mxu0 %v1399
      %1695 = vmatprep.subr.bf16.mxu0 0
      %1696 = vmatpush1.bf16.msra.mxu0 %v1398
      %1697 = vmatprep.subr.bf16.mxu0 0
      %1698 = vmatpush1.bf16.msra.mxu0 %v1397
      %1699 = vmatprep.subr.bf16.mxu0 0
      %1700 = vmatpush1.bf16.msra.mxu0 %v1396
      %1701 = vmatprep.subr.bf16.mxu0 0
      %1702 = vmatpush2.bf16.msra.mxu0 %v1411
      %1703 = vmatprep.subr.bf16.mxu0 0
      %1704 = vmatpush2.bf16.msra.mxu0 %v1410
      %1705 = vmatprep.subr.bf16.mxu0 0
      %1706 = vmatpush2.bf16.msra.mxu0 %v1409
      %1707 = vmatprep.subr.bf16.mxu0 0
      %1708 = vmatpush2.bf16.msra.mxu0 %v1408
      %1709 = vmatprep.subr.bf16.mxu0 0
      %1710 = vmatpush2.bf16.msra.mxu0 %v1407
      %1711 = vmatprep.subr.bf16.mxu0 0
      %1712 = vmatpush2.bf16.msra.mxu0 %v1406
      %1713 = vmatprep.subr.bf16.mxu0 0
      %1714 = vmatpush2.bf16.msra.mxu0 %v1405
      %1715 = vmatprep.subr.bf16.mxu0 0
      %1716 = vmatpush2.bf16.msra.mxu0 %v1404
      %1717 = vmatprep.mubr.bf16.mxu0 %v800
      %1718 = vmatmul.mubr.bf16.gmra.mxu0 %v799
      %v1719 = vpop.f32.mrf.mxu0
      %v1720 = vadd.f32 %v1559, %v1719
      %v1721 = vpop.f32.mrf.mxu0
      %v1722 = vpop.f32.mrf.mxu0
      %v1723 = vadd.f32 %v1562, %v1722
      %v1724 = vpop.f32.mrf.mxu0
      %1725 = vmatprep.mubr.bf16.mxu0 %v809
      %1726 = vmatmul.mubr.bf16.gmra.mxu0 %v808
      %v1727 = vpop.f32.mrf.mxu0
      %v1728 = vadd.f32 %v1567, %v1727
      %v1729 = vpop.f32.mrf.mxu0
      %v1730 = vpop.f32.mrf.mxu0
      %v1731 = vadd.f32 %v1570, %v1730
      %v1732 = vpop.f32.mrf.mxu0
      %1733 = vmatprep.mubr.bf16.mxu0 %v818
      %1734 = vmatmul.mubr.bf16.gmra.mxu0 %v817
      %v1735 = vpop.f32.mrf.mxu0
      %v1736 = vadd.f32 %v1575, %v1735
      %v1737 = vpop.f32.mrf.mxu0
      %v1738 = vpop.f32.mrf.mxu0
      %v1739 = vadd.f32 %v1578, %v1738
      %v1740 = vpop.f32.mrf.mxu0
      %1741 = vmatprep.mubr.bf16.mxu0 %v827
      %1742 = vmatmul.mubr.bf16.gmra.mxu0 %v826
      %v1743 = vpop.f32.mrf.mxu0
      %v1744 = vadd.f32 %v1583, %v1743
      %v1745 = vpop.f32.mrf.mxu0
      %v1746 = vpop.f32.mrf.mxu0
      %v1747 = vadd.f32 %v1586, %v1746
      %v1748 = vpop.f32.mrf.mxu0
      %1749 = vmatprep.mubr.bf16.mxu0 %v836
      %1750 = vmatmul.mubr.bf16.gmra.mxu0 %v835
      %v1751 = vpop.f32.mrf.mxu0
      %v1752 = vadd.f32 %v1591, %v1751
      %v1753 = vpop.f32.mrf.mxu0
      %v1754 = vpop.f32.mrf.mxu0
      %v1755 = vadd.f32 %v1594, %v1754
      %v1756 = vpop.f32.mrf.mxu0
      %1757 = vmatprep.mubr.bf16.mxu0 %v845
      %1758 = vmatmul.mubr.bf16.gmra.mxu0 %v844
      %v1759 = vpop.f32.mrf.mxu0
      %v1760 = vadd.f32 %v1599, %v1759
      %v1761 = vpop.f32.mrf.mxu0
      %v1762 = vpop.f32.mrf.mxu0
      %v1763 = vadd.f32 %v1602, %v1762
      %v1764 = vpop.f32.mrf.mxu0
      %1765 = vmatprep.mubr.bf16.mxu0 %v854
      %1766 = vmatmul.mubr.bf16.gmra.mxu0 %v853
      %v1767 = vpop.f32.mrf.mxu0
      %v1768 = vadd.f32 %v1607, %v1767
      %v1769 = vpop.f32.mrf.mxu0
      %v1770 = vpop.f32.mrf.mxu0
      %v1771 = vadd.f32 %v1610, %v1770
      %v1772 = vpop.f32.mrf.mxu0
      %1773 = vmatprep.mubr.bf16.mxu0 %v863
      %1774 = vmatmul.mubr.bf16.gmra.mxu0 %v862
      %v1775 = vpop.f32.mrf.mxu0
      %v1776 = vadd.f32 %v1615, %v1775
      %v1777 = vpop.f32.mrf.mxu0
      %v1778 = vpop.f32.mrf.mxu0
      %v1779 = vadd.f32 %v1618, %v1778
      %v1780 = vpop.f32.mrf.mxu0
      %1781 = vmatprep.mubr.bf16.mxu0 %v872
      %1782 = vmatmul.mubr.bf16.gmra.mxu0 %v871
      %v1783 = vpop.f32.mrf.mxu0
      %v1784 = vadd.f32 %v1623, %v1783
      %v1785 = vpop.f32.mrf.mxu0
      %v1786 = vpop.f32.mrf.mxu0
      %v1787 = vadd.f32 %v1626, %v1786
      %v1788 = vpop.f32.mrf.mxu0
      %1789 = vmatprep.mubr.bf16.mxu0 %v881
      %1790 = vmatmul.mubr.bf16.gmra.mxu0 %v880
      %v1791 = vpop.f32.mrf.mxu0
      %v1792 = vadd.f32 %v1631, %v1791
      %v1793 = vpop.f32.mrf.mxu0
      %v1794 = vpop.f32.mrf.mxu0
      %v1795 = vadd.f32 %v1634, %v1794
      %v1796 = vpop.f32.mrf.mxu0
      %1797 = vmatprep.mubr.bf16.mxu0 %v890
      %1798 = vmatmul.mubr.bf16.gmra.mxu0 %v889
      %v1799 = vpop.f32.mrf.mxu0
      %v1800 = vadd.f32 %v1639, %v1799
      %v1801 = vpop.f32.mrf.mxu0
      %v1802 = vpop.f32.mrf.mxu0
      %v1803 = vadd.f32 %v1642, %v1802
      %v1804 = vpop.f32.mrf.mxu0
      %1805 = vmatprep.mubr.bf16.mxu0 %v899
      %1806 = vmatmul.mubr.bf16.gmra.mxu0 %v898
      %v1807 = vpop.f32.mrf.mxu0
      %v1808 = vadd.f32 %v1647, %v1807
      %v1809 = vpop.f32.mrf.mxu0
      %v1810 = vpop.f32.mrf.mxu0
      %v1811 = vadd.f32 %v1650, %v1810
      %v1812 = vpop.f32.mrf.mxu0
      %1813 = vmatprep.mubr.bf16.mxu0 %v908
      %1814 = vmatmul.mubr.bf16.gmra.mxu0 %v907
      %v1815 = vpop.f32.mrf.mxu0
      %v1816 = vadd.f32 %v1655, %v1815
      %v1817 = vpop.f32.mrf.mxu0
      %v1818 = vpop.f32.mrf.mxu0
      %v1819 = vadd.f32 %v1658, %v1818
      %v1820 = vpop.f32.mrf.mxu0
      %1821 = vmatprep.mubr.bf16.mxu0 %v917
      %1822 = vmatmul.mubr.bf16.gmra.mxu0 %v916
      %v1823 = vpop.f32.mrf.mxu0
      %v1824 = vadd.f32 %v1663, %v1823
      %v1825 = vpop.f32.mrf.mxu0
      %v1826 = vpop.f32.mrf.mxu0
      %v1827 = vadd.f32 %v1666, %v1826
      %v1828 = vpop.f32.mrf.mxu0
      %1829 = vmatprep.mubr.bf16.mxu0 %v926
      %1830 = vmatmul.mubr.bf16.gmra.mxu0 %v925
      %v1831 = vpop.f32.mrf.mxu0
      %v1832 = vadd.f32 %v1671, %v1831
      %v1833 = vpop.f32.mrf.mxu0
      %v1834 = vpop.f32.mrf.mxu0
      %v1835 = vadd.f32 %v1674, %v1834
      %v1836 = vpop.f32.mrf.mxu0
      %1837 = vmatprep.mubr.bf16.mxu0 %v935
      %1838 = vmatmul.mubr.bf16.gmra.mxu0 %v934
      %v1839 = vpop.f32.mrf.mxu0
      %v1840 = vadd.f32 %v1679, %v1839
      %v1841 = vpop.f32.mrf.mxu0
      %v1842 = vpop.f32.mrf.mxu0
      %v1843 = vadd.f32 %v1682, %v1842
      %v1844 = vpop.f32.mrf.mxu0
      %1845 = vdwg.mxu0
      %1846 = vmatprep.subr.bf16.mxu0 0
      %1847 = vmatpush1.bf16.msra.mxu0 %v1419
      %1848 = vmatprep.subr.bf16.mxu0 0
      %1849 = vmatpush1.bf16.msra.mxu0 %v1418
      %1850 = vmatprep.subr.bf16.mxu0 0
      %1851 = vmatpush1.bf16.msra.mxu0 %v1417
      %1852 = vmatprep.subr.bf16.mxu0 0
      %1853 = vmatpush1.bf16.msra.mxu0 %v1416
      %1854 = vmatprep.subr.bf16.mxu0 0
      %1855 = vmatpush1.bf16.msra.mxu0 %v1415
      %1856 = vmatprep.subr.bf16.mxu0 0
      %1857 = vmatpush1.bf16.msra.mxu0 %v1414
      %1858 = vmatprep.subr.bf16.mxu0 0
      %1859 = vmatpush1.bf16.msra.mxu0 %v1413
      %1860 = vmatprep.subr.bf16.mxu0 0
      %1861 = vmatpush1.bf16.msra.mxu0 %v1412
      %1862 = vmatprep.subr.bf16.mxu0 0
      %1863 = vmatpush2.bf16.msra.mxu0 %v1427
      %1864 = vmatprep.subr.bf16.mxu0 0
      %1865 = vmatpush2.bf16.msra.mxu0 %v1426
      %1866 = vmatprep.subr.bf16.mxu0 0
      %1867 = vmatpush2.bf16.msra.mxu0 %v1425
      %1868 = vmatprep.subr.bf16.mxu0 0
      %1869 = vmatpush2.bf16.msra.mxu0 %v1424
      %1870 = vmatprep.subr.bf16.mxu0 0
      %1871 = vmatpush2.bf16.msra.mxu0 %v1423
      %1872 = vmatprep.subr.bf16.mxu0 0
      %1873 = vmatpush2.bf16.msra.mxu0 %v1422
      %1874 = vmatprep.subr.bf16.mxu0 0
      %1875 = vmatpush2.bf16.msra.mxu0 %v1421
      %1876 = vmatprep.subr.bf16.mxu0 0
      %1877 = vmatpush2.bf16.msra.mxu0 %v1420
      %1878 = vmatprep.mubr.bf16.mxu0 %v802
      %1879 = vmatmul.mubr.bf16.gmra.mxu0 %v801
      %v1880 = vpop.f32.mrf.mxu0
      %v1881 = vadd.f32 %v1720, %v1880
      %v1882 = vpop.f32.mrf.mxu0
      %v1883 = vpop.f32.mrf.mxu0
      %v1884 = vadd.f32 %v1723, %v1883
      %v1885 = vpop.f32.mrf.mxu0
      %1886 = vmatprep.mubr.bf16.mxu0 %v811
      %1887 = vmatmul.mubr.bf16.gmra.mxu0 %v810
      %v1888 = vpop.f32.mrf.mxu0
      %v1889 = vadd.f32 %v1728, %v1888
      %v1890 = vpop.f32.mrf.mxu0
      %v1891 = vpop.f32.mrf.mxu0
      %v1892 = vadd.f32 %v1731, %v1891
      %v1893 = vpop.f32.mrf.mxu0
      %1894 = vmatprep.mubr.bf16.mxu0 %v820
      %1895 = vmatmul.mubr.bf16.gmra.mxu0 %v819
      %v1896 = vpop.f32.mrf.mxu0
      %v1897 = vadd.f32 %v1736, %v1896
      %v1898 = vpop.f32.mrf.mxu0
      %v1899 = vpop.f32.mrf.mxu0
      %v1900 = vadd.f32 %v1739, %v1899
      %v1901 = vpop.f32.mrf.mxu0
      %1902 = vmatprep.mubr.bf16.mxu0 %v829
      %1903 = vmatmul.mubr.bf16.gmra.mxu0 %v828
      %v1904 = vpop.f32.mrf.mxu0
      %v1905 = vadd.f32 %v1744, %v1904
      %v1906 = vpop.f32.mrf.mxu0
      %v1907 = vpop.f32.mrf.mxu0
      %v1908 = vadd.f32 %v1747, %v1907
      %v1909 = vpop.f32.mrf.mxu0
      %1910 = vmatprep.mubr.bf16.mxu0 %v838
      %1911 = vmatmul.mubr.bf16.gmra.mxu0 %v837
      %v1912 = vpop.f32.mrf.mxu0
      %v1913 = vadd.f32 %v1752, %v1912
      %v1914 = vpop.f32.mrf.mxu0
      %v1915 = vpop.f32.mrf.mxu0
      %v1916 = vadd.f32 %v1755, %v1915
      %v1917 = vpop.f32.mrf.mxu0
      %1918 = vmatprep.mubr.bf16.mxu0 %v847
      %1919 = vmatmul.mubr.bf16.gmra.mxu0 %v846
      %v1920 = vpop.f32.mrf.mxu0
      %v1921 = vadd.f32 %v1760, %v1920
      %v1922 = vpop.f32.mrf.mxu0
      %v1923 = vpop.f32.mrf.mxu0
      %v1924 = vadd.f32 %v1763, %v1923
      %v1925 = vpop.f32.mrf.mxu0
      %1926 = vmatprep.mubr.bf16.mxu0 %v856
      %1927 = vmatmul.mubr.bf16.gmra.mxu0 %v855
      %v1928 = vpop.f32.mrf.mxu0
      %v1929 = vadd.f32 %v1768, %v1928
      %v1930 = vpop.f32.mrf.mxu0
      %v1931 = vpop.f32.mrf.mxu0
      %v1932 = vadd.f32 %v1771, %v1931
      %v1933 = vpop.f32.mrf.mxu0
      %1934 = vmatprep.mubr.bf16.mxu0 %v865
      %1935 = vmatmul.mubr.bf16.gmra.mxu0 %v864
      %v1936 = vpop.f32.mrf.mxu0
      %v1937 = vadd.f32 %v1776, %v1936
      %v1938 = vpop.f32.mrf.mxu0
      %v1939 = vpop.f32.mrf.mxu0
      %v1940 = vadd.f32 %v1779, %v1939
      %v1941 = vpop.f32.mrf.mxu0
      %1942 = vmatprep.mubr.bf16.mxu0 %v874
      %1943 = vmatmul.mubr.bf16.gmra.mxu0 %v873
      %v1944 = vpop.f32.mrf.mxu0
      %v1945 = vadd.f32 %v1784, %v1944
      %v1946 = vpop.f32.mrf.mxu0
      %v1947 = vpop.f32.mrf.mxu0
      %v1948 = vadd.f32 %v1787, %v1947
      %v1949 = vpop.f32.mrf.mxu0
      %1950 = vmatprep.mubr.bf16.mxu0 %v883
      %1951 = vmatmul.mubr.bf16.gmra.mxu0 %v882
      %v1952 = vpop.f32.mrf.mxu0
      %v1953 = vadd.f32 %v1792, %v1952
      %v1954 = vpop.f32.mrf.mxu0
      %v1955 = vpop.f32.mrf.mxu0
      %v1956 = vadd.f32 %v1795, %v1955
      %v1957 = vpop.f32.mrf.mxu0
      %1958 = vmatprep.mubr.bf16.mxu0 %v892
      %1959 = vmatmul.mubr.bf16.gmra.mxu0 %v891
      %v1960 = vpop.f32.mrf.mxu0
      %v1961 = vadd.f32 %v1800, %v1960
      %v1962 = vpop.f32.mrf.mxu0
      %v1963 = vpop.f32.mrf.mxu0
      %v1964 = vadd.f32 %v1803, %v1963
      %v1965 = vpop.f32.mrf.mxu0
      %1966 = vmatprep.mubr.bf16.mxu0 %v901
      %1967 = vmatmul.mubr.bf16.gmra.mxu0 %v900
      %v1968 = vpop.f32.mrf.mxu0
      %v1969 = vadd.f32 %v1808, %v1968
      %v1970 = vpop.f32.mrf.mxu0
      %v1971 = vpop.f32.mrf.mxu0
      %v1972 = vadd.f32 %v1811, %v1971
      %v1973 = vpop.f32.mrf.mxu0
      %1974 = vmatprep.mubr.bf16.mxu0 %v910
      %1975 = vmatmul.mubr.bf16.gmra.mxu0 %v909
      %v1976 = vpop.f32.mrf.mxu0
      %v1977 = vadd.f32 %v1816, %v1976
      %v1978 = vpop.f32.mrf.mxu0
      %v1979 = vpop.f32.mrf.mxu0
      %v1980 = vadd.f32 %v1819, %v1979
      %v1981 = vpop.f32.mrf.mxu0
      %1982 = vmatprep.mubr.bf16.mxu0 %v919
      %1983 = vmatmul.mubr.bf16.gmra.mxu0 %v918
      %v1984 = vpop.f32.mrf.mxu0
      %v1985 = vadd.f32 %v1824, %v1984
      %v1986 = vpop.f32.mrf.mxu0
      %v1987 = vpop.f32.mrf.mxu0
      %v1988 = vadd.f32 %v1827, %v1987
      %v1989 = vpop.f32.mrf.mxu0
      %1990 = vmatprep.mubr.bf16.mxu0 %v928
      %1991 = vmatmul.mubr.bf16.gmra.mxu0 %v927
      %v1992 = vpop.f32.mrf.mxu0
      %v1993 = vadd.f32 %v1832, %v1992
      %v1994 = vpop.f32.mrf.mxu0
      %v1995 = vpop.f32.mrf.mxu0
      %v1996 = vadd.f32 %v1835, %v1995
      %v1997 = vpop.f32.mrf.mxu0
      %1998 = vmatprep.mubr.bf16.mxu0 %v937
      %1999 = vmatmul.mubr.bf16.gmra.mxu0 %v936
      %v2000 = vpop.f32.mrf.mxu0
      %v2001 = vadd.f32 %v1840, %v2000
      %v2002 = vpop.f32.mrf.mxu0
      %v2003 = vpop.f32.mrf.mxu0
      %v2004 = vadd.f32 %v1843, %v2003
      %v2005 = vpop.f32.mrf.mxu0
      %2006 = vdwg.mxu0
      %2007 = vmatprep.subr.bf16.mxu0 0
      %2008 = vmatpush1.bf16.msra.mxu0 %v1435
      %2009 = vmatprep.subr.bf16.mxu0 0
      %2010 = vmatpush1.bf16.msra.mxu0 %v1434
      %2011 = vmatprep.subr.bf16.mxu0 0
      %2012 = vmatpush1.bf16.msra.mxu0 %v1433
      %2013 = vmatprep.subr.bf16.mxu0 0
      %2014 = vmatpush1.bf16.msra.mxu0 %v1432
      %2015 = vmatprep.subr.bf16.mxu0 0
      %2016 = vmatpush1.bf16.msra.mxu0 %v1431
      %2017 = vmatprep.subr.bf16.mxu0 0
      %2018 = vmatpush1.bf16.msra.mxu0 %v1430
      %2019 = vmatprep.subr.bf16.mxu0 0
      %2020 = vmatpush1.bf16.msra.mxu0 %v1429
      %2021 = vmatprep.subr.bf16.mxu0 0
      %2022 = vmatpush1.bf16.msra.mxu0 %v1428
      %2023 = vmatprep.subr.bf16.mxu0 0
      %2024 = vmatpush2.bf16.msra.mxu0 %v1443
      %2025 = vmatprep.subr.bf16.mxu0 0
      %2026 = vmatpush2.bf16.msra.mxu0 %v1442
      %2027 = vmatprep.subr.bf16.mxu0 0
      %2028 = vmatpush2.bf16.msra.mxu0 %v1441
      %2029 = vmatprep.subr.bf16.mxu0 0
      %2030 = vmatpush2.bf16.msra.mxu0 %v1440
      %2031 = vmatprep.subr.bf16.mxu0 0
      %2032 = vmatpush2.bf16.msra.mxu0 %v1439
      %2033 = vmatprep.subr.bf16.mxu0 0
      %2034 = vmatpush2.bf16.msra.mxu0 %v1438
      %2035 = vmatprep.subr.bf16.mxu0 0
      %2036 = vmatpush2.bf16.msra.mxu0 %v1437
      %2037 = vmatprep.subr.bf16.mxu0 0
      %2038 = vmatpush2.bf16.msra.mxu0 %v1436
      %2039 = vmatprep.mubr.bf16.mxu0 %v804
      %2040 = vmatmul.mubr.bf16.gmra.mxu0 %v803
      %v2041 = vpop.f32.mrf.mxu0
      %v2042 = vadd.f32 %v1881, %v2041
      %v2043 = vpop.f32.mrf.mxu0
      %v2044 = vpop.f32.mrf.mxu0
      %v2045 = vadd.f32 %v1884, %v2044
      %v2046 = vpop.f32.mrf.mxu0
      %2047 = vmatprep.mubr.bf16.mxu0 %v813
      %2048 = vmatmul.mubr.bf16.gmra.mxu0 %v812
      %v2049 = vpop.f32.mrf.mxu0
      %v2050 = vadd.f32 %v1889, %v2049
      %v2051 = vpop.f32.mrf.mxu0
      %v2052 = vpop.f32.mrf.mxu0
      %v2053 = vadd.f32 %v1892, %v2052
      %v2054 = vpop.f32.mrf.mxu0
      %2055 = vmatprep.mubr.bf16.mxu0 %v822
      %2056 = vmatmul.mubr.bf16.gmra.mxu0 %v821
      %v2057 = vpop.f32.mrf.mxu0
      %v2058 = vadd.f32 %v1897, %v2057
      %v2059 = vpop.f32.mrf.mxu0
      %v2060 = vpop.f32.mrf.mxu0
      %v2061 = vadd.f32 %v1900, %v2060
      %v2062 = vpop.f32.mrf.mxu0
      %2063 = vmatprep.mubr.bf16.mxu0 %v831
      %2064 = vmatmul.mubr.bf16.gmra.mxu0 %v830
      %v2065 = vpop.f32.mrf.mxu0
      %v2066 = vadd.f32 %v1905, %v2065
      %v2067 = vpop.f32.mrf.mxu0
      %v2068 = vpop.f32.mrf.mxu0
      %v2069 = vadd.f32 %v1908, %v2068
      %v2070 = vpop.f32.mrf.mxu0
      %2071 = vmatprep.mubr.bf16.mxu0 %v840
      %2072 = vmatmul.mubr.bf16.gmra.mxu0 %v839
      %v2073 = vpop.f32.mrf.mxu0
      %v2074 = vadd.f32 %v1913, %v2073
      %v2075 = vpop.f32.mrf.mxu0
      %v2076 = vpop.f32.mrf.mxu0
      %v2077 = vadd.f32 %v1916, %v2076
      %v2078 = vpop.f32.mrf.mxu0
      %2079 = vmatprep.mubr.bf16.mxu0 %v849
      %2080 = vmatmul.mubr.bf16.gmra.mxu0 %v848
      %v2081 = vpop.f32.mrf.mxu0
      %v2082 = vadd.f32 %v1921, %v2081
      %v2083 = vpop.f32.mrf.mxu0
      %v2084 = vpop.f32.mrf.mxu0
      %v2085 = vadd.f32 %v1924, %v2084
      %v2086 = vpop.f32.mrf.mxu0
      %2087 = vmatprep.mubr.bf16.mxu0 %v858
      %2088 = vmatmul.mubr.bf16.gmra.mxu0 %v857
      %v2089 = vpop.f32.mrf.mxu0
      %v2090 = vadd.f32 %v1929, %v2089
      %v2091 = vpop.f32.mrf.mxu0
      %v2092 = vpop.f32.mrf.mxu0
      %v2093 = vadd.f32 %v1932, %v2092
      %v2094 = vpop.f32.mrf.mxu0
      %2095 = vmatprep.mubr.bf16.mxu0 %v867
      %2096 = vmatmul.mubr.bf16.gmra.mxu0 %v866
      %v2097 = vpop.f32.mrf.mxu0
      %v2098 = vadd.f32 %v1937, %v2097
      %v2099 = vpop.f32.mrf.mxu0
      %v2100 = vpop.f32.mrf.mxu0
      %v2101 = vadd.f32 %v1940, %v2100
      %v2102 = vpop.f32.mrf.mxu0
      %2103 = vmatprep.mubr.bf16.mxu0 %v876
      %2104 = vmatmul.mubr.bf16.gmra.mxu0 %v875
      %v2105 = vpop.f32.mrf.mxu0
      %v2106 = vadd.f32 %v1945, %v2105
      %v2107 = vpop.f32.mrf.mxu0
      %v2108 = vpop.f32.mrf.mxu0
      %v2109 = vadd.f32 %v1948, %v2108
      %v2110 = vpop.f32.mrf.mxu0
      %2111 = vmatprep.mubr.bf16.mxu0 %v885
      %2112 = vmatmul.mubr.bf16.gmra.mxu0 %v884
      %v2113 = vpop.f32.mrf.mxu0
      %v2114 = vadd.f32 %v1953, %v2113
      %v2115 = vpop.f32.mrf.mxu0
      %v2116 = vpop.f32.mrf.mxu0
      %v2117 = vadd.f32 %v1956, %v2116
      %v2118 = vpop.f32.mrf.mxu0
      %2119 = vmatprep.mubr.bf16.mxu0 %v894
      %2120 = vmatmul.mubr.bf16.gmra.mxu0 %v893
      %v2121 = vpop.f32.mrf.mxu0
      %v2122 = vadd.f32 %v1961, %v2121
      %v2123 = vpop.f32.mrf.mxu0
      %v2124 = vpop.f32.mrf.mxu0
      %v2125 = vadd.f32 %v1964, %v2124
      %v2126 = vpop.f32.mrf.mxu0
      %2127 = vmatprep.mubr.bf16.mxu0 %v903
      %2128 = vmatmul.mubr.bf16.gmra.mxu0 %v902
      %v2129 = vpop.f32.mrf.mxu0
      %v2130 = vadd.f32 %v1969, %v2129
      %v2131 = vpop.f32.mrf.mxu0
      %v2132 = vpop.f32.mrf.mxu0
      %v2133 = vadd.f32 %v1972, %v2132
      %v2134 = vpop.f32.mrf.mxu0
      %2135 = vmatprep.mubr.bf16.mxu0 %v912
      %2136 = vmatmul.mubr.bf16.gmra.mxu0 %v911
      %v2137 = vpop.f32.mrf.mxu0
      %v2138 = vadd.f32 %v1977, %v2137
      %v2139 = vpop.f32.mrf.mxu0
      %v2140 = vpop.f32.mrf.mxu0
      %v2141 = vadd.f32 %v1980, %v2140
      %v2142 = vpop.f32.mrf.mxu0
      %2143 = vmatprep.mubr.bf16.mxu0 %v921
      %2144 = vmatmul.mubr.bf16.gmra.mxu0 %v920
      %v2145 = vpop.f32.mrf.mxu0
      %v2146 = vadd.f32 %v1985, %v2145
      %v2147 = vpop.f32.mrf.mxu0
      %v2148 = vpop.f32.mrf.mxu0
      %v2149 = vadd.f32 %v1988, %v2148
      %v2150 = vpop.f32.mrf.mxu0
      %2151 = vmatprep.mubr.bf16.mxu0 %v930
      %2152 = vmatmul.mubr.bf16.gmra.mxu0 %v929
      %v2153 = vpop.f32.mrf.mxu0
      %v2154 = vadd.f32 %v1993, %v2153
      %v2155 = vpop.f32.mrf.mxu0
      %v2156 = vpop.f32.mrf.mxu0
      %v2157 = vadd.f32 %v1996, %v2156
      %v2158 = vpop.f32.mrf.mxu0
      %2159 = vmatprep.mubr.bf16.mxu0 %v939
      %2160 = vmatmul.mubr.bf16.gmra.mxu0 %v938
      %v2161 = vpop.f32.mrf.mxu0
      %v2162 = vadd.f32 %v2001, %v2161
      %v2163 = vpop.f32.mrf.mxu0
      %v2164 = vpop.f32.mrf.mxu0
      %v2165 = vadd.f32 %v2004, %v2164
      %v2166 = vpop.f32.mrf.mxu0
      %2167 = vdwg.mxu0
      %2168 = vmatprep.subr.bf16.mxu0 0
      %2169 = vmatpush1.bf16.msra.mxu0 %v1451
      %2170 = vmatprep.subr.bf16.mxu0 0
      %2171 = vmatpush1.bf16.msra.mxu0 %v1450
      %2172 = vmatprep.subr.bf16.mxu0 0
      %2173 = vmatpush1.bf16.msra.mxu0 %v1449
      %2174 = vmatprep.subr.bf16.mxu0 0
      %2175 = vmatpush1.bf16.msra.mxu0 %v1448
      %2176 = vmatprep.subr.bf16.mxu0 0
      %2177 = vmatpush1.bf16.msra.mxu0 %v1447
      %2178 = vmatprep.subr.bf16.mxu0 0
      %2179 = vmatpush1.bf16.msra.mxu0 %v1446
      %2180 = vmatprep.subr.bf16.mxu0 0
      %2181 = vmatpush1.bf16.msra.mxu0 %v1445
      %2182 = vmatprep.subr.bf16.mxu0 0
      %2183 = vmatpush1.bf16.msra.mxu0 %v1444
      %2184 = vmatprep.subr.bf16.mxu0 0
      %2185 = vmatpush2.bf16.msra.mxu0 0
      %2186 = vmatprep.subr.bf16.mxu0 0
      %2187 = vmatpush2.bf16.msra.mxu0 0
      %2188 = vmatprep.subr.bf16.mxu0 0
      %2189 = vmatpush2.bf16.msra.mxu0 0
      %2190 = vmatprep.subr.bf16.mxu0 0
      %2191 = vmatpush2.bf16.msra.mxu0 0
      %2192 = vmatprep.subr.bf16.mxu0 0
      %2193 = vmatpush2.bf16.msra.mxu0 0
      %2194 = vmatprep.subr.bf16.mxu0 0
      %2195 = vmatpush2.bf16.msra.mxu0 0
      %2196 = vmatprep.subr.bf16.mxu0 0
      %2197 = vmatpush2.bf16.msra.mxu0 0
      %2198 = vmatprep.subr.bf16.mxu0 0
      %2199 = vmatpush2.bf16.msra.mxu0 0
      %2200 = vmatprep.mubr.bf16.mxu0 0
      %2201 = vmatmul.mubr.bf16.gmra.mxu0 %v805
      %v2202 = vpop.f32.mrf.mxu0
      %v2203 = vadd.f32 %v2042, %v2202
      %v2204 = vpop.f32.mrf.mxu0
      %v2205 = vpop.f32.mrf.mxu0
      %v2206 = vadd.f32 %v2045, %v2205
      %v2207 = vpop.f32.mrf.mxu0
      %2208 = vmatprep.mubr.bf16.mxu0 0
      %2209 = vmatmul.mubr.bf16.gmra.mxu0 %v814
      %v2210 = vpop.f32.mrf.mxu0
      %v2211 = vadd.f32 %v2050, %v2210
      %v2212 = vpop.f32.mrf.mxu0
      %v2213 = vpop.f32.mrf.mxu0
      %v2214 = vadd.f32 %v2053, %v2213
      %v2215 = vpop.f32.mrf.mxu0
      %2216 = vmatprep.mubr.bf16.mxu0 0
      %2217 = vmatmul.mubr.bf16.gmra.mxu0 %v823
      %v2218 = vpop.f32.mrf.mxu0
      %v2219 = vadd.f32 %v2058, %v2218
      %v2220 = vpop.f32.mrf.mxu0
      %v2221 = vpop.f32.mrf.mxu0
      %v2222 = vadd.f32 %v2061, %v2221
      %v2223 = vpop.f32.mrf.mxu0
      %2224 = vmatprep.mubr.bf16.mxu0 0
      %2225 = vmatmul.mubr.bf16.gmra.mxu0 %v832
      %v2226 = vpop.f32.mrf.mxu0
      %v2227 = vadd.f32 %v2066, %v2226
      %v2228 = vpop.f32.mrf.mxu0
      %v2229 = vpop.f32.mrf.mxu0
      %v2230 = vadd.f32 %v2069, %v2229
      %v2231 = vpop.f32.mrf.mxu0
      %2232 = vmatprep.mubr.bf16.mxu0 0
      %2233 = vmatmul.mubr.bf16.gmra.mxu0 %v841
      %v2234 = vpop.f32.mrf.mxu0
      %v2235 = vadd.f32 %v2074, %v2234
      %v2236 = vpop.f32.mrf.mxu0
      %v2237 = vpop.f32.mrf.mxu0
      %v2238 = vadd.f32 %v2077, %v2237
      %v2239 = vpop.f32.mrf.mxu0
      %2240 = vmatprep.mubr.bf16.mxu0 0
      %2241 = vmatmul.mubr.bf16.gmra.mxu0 %v850
      %v2242 = vpop.f32.mrf.mxu0
      %v2243 = vadd.f32 %v2082, %v2242
      %v2244 = vpop.f32.mrf.mxu0
      %v2245 = vpop.f32.mrf.mxu0
      %v2246 = vadd.f32 %v2085, %v2245
      %v2247 = vpop.f32.mrf.mxu0
      %2248 = vmatprep.mubr.bf16.mxu0 0
      %2249 = vmatmul.mubr.bf16.gmra.mxu0 %v859
      %v2250 = vpop.f32.mrf.mxu0
      %v2251 = vadd.f32 %v2090, %v2250
      %v2252 = vpop.f32.mrf.mxu0
      %v2253 = vpop.f32.mrf.mxu0
      %v2254 = vadd.f32 %v2093, %v2253
      %v2255 = vpop.f32.mrf.mxu0
      %2256 = vmatprep.mubr.bf16.mxu0 0
      %2257 = vmatmul.mubr.bf16.gmra.mxu0 %v868
      %v2258 = vpop.f32.mrf.mxu0
      %v2259 = vadd.f32 %v2098, %v2258
      %v2260 = vpop.f32.mrf.mxu0
      %v2261 = vpop.f32.mrf.mxu0
      %v2262 = vadd.f32 %v2101, %v2261
      %v2263 = vpop.f32.mrf.mxu0
      %2264 = vmatprep.mubr.bf16.mxu0 0
      %2265 = vmatmul.mubr.bf16.gmra.mxu0 %v877
      %v2266 = vpop.f32.mrf.mxu0
      %v2267 = vadd.f32 %v2106, %v2266
      %v2268 = vpop.f32.mrf.mxu0
      %v2269 = vpop.f32.mrf.mxu0
      %v2270 = vadd.f32 %v2109, %v2269
      %v2271 = vpop.f32.mrf.mxu0
      %2272 = vmatprep.mubr.bf16.mxu0 0
      %2273 = vmatmul.mubr.bf16.gmra.mxu0 %v886
      %v2274 = vpop.f32.mrf.mxu0
      %v2275 = vadd.f32 %v2114, %v2274
      %v2276 = vpop.f32.mrf.mxu0
      %v2277 = vpop.f32.mrf.mxu0
      %v2278 = vadd.f32 %v2117, %v2277
      %v2279 = vpop.f32.mrf.mxu0
      %2280 = vmatprep.mubr.bf16.mxu0 0
      %2281 = vmatmul.mubr.bf16.gmra.mxu0 %v895
      %v2282 = vpop.f32.mrf.mxu0
      %v2283 = vadd.f32 %v2122, %v2282
      %v2284 = vpop.f32.mrf.mxu0
      %v2285 = vpop.f32.mrf.mxu0
      %v2286 = vadd.f32 %v2125, %v2285
      %v2287 = vpop.f32.mrf.mxu0
      %2288 = vmatprep.mubr.bf16.mxu0 0
      %2289 = vmatmul.mubr.bf16.gmra.mxu0 %v904
      %v2290 = vpop.f32.mrf.mxu0
      %v2291 = vadd.f32 %v2130, %v2290
      %v2292 = vpop.f32.mrf.mxu0
      %v2293 = vpop.f32.mrf.mxu0
      %v2294 = vadd.f32 %v2133, %v2293
      %v2295 = vpop.f32.mrf.mxu0
      %2296 = vmatprep.mubr.bf16.mxu0 0
      %2297 = vmatmul.mubr.bf16.gmra.mxu0 %v913
      %v2298 = vpop.f32.mrf.mxu0
      %v2299 = vadd.f32 %v2138, %v2298
      %v2300 = vpop.f32.mrf.mxu0
      %v2301 = vpop.f32.mrf.mxu0
      %v2302 = vadd.f32 %v2141, %v2301
      %v2303 = vpop.f32.mrf.mxu0
      %2304 = vmatprep.mubr.bf16.mxu0 0
      %2305 = vmatmul.mubr.bf16.gmra.mxu0 %v922
      %v2306 = vpop.f32.mrf.mxu0
      %v2307 = vadd.f32 %v2146, %v2306
      %v2308 = vpop.f32.mrf.mxu0
      %v2309 = vpop.f32.mrf.mxu0
      %v2310 = vadd.f32 %v2149, %v2309
      %v2311 = vpop.f32.mrf.mxu0
      %2312 = vmatprep.mubr.bf16.mxu0 0
      %2313 = vmatmul.mubr.bf16.gmra.mxu0 %v931
      %v2314 = vpop.f32.mrf.mxu0
      %v2315 = vadd.f32 %v2154, %v2314
      %v2316 = vpop.f32.mrf.mxu0
      %v2317 = vpop.f32.mrf.mxu0
      %v2318 = vadd.f32 %v2157, %v2317
      %v2319 = vpop.f32.mrf.mxu0
      %2320 = vmatprep.mubr.bf16.mxu0 0
      %2321 = vmatmul.mubr.bf16.gmra.mxu0 %v940
      %v2322 = vpop.f32.mrf.mxu0
      %v2323 = vadd.f32 %v2162, %v2322
      %v2324 = vpop.f32.mrf.mxu0
      %v2325 = vpop.f32.mrf.mxu0
      %v2326 = vadd.f32 %v2165, %v2325
      %v2327 = vpop.f32.mrf.mxu0
      %2328 = vdwg.mxu0
      %2329 = vst [vmem:[%s276] sm:$0xff] %v2203
      %2330 = vst [vmem:[%s276 + $0x8] sm:$0xff] %v2206
      %2331 = vst [vmem:[%s276 + $0x10] sm:$0xff] %v2211
      %2332 = vst [vmem:[%s276 + $0x18] sm:$0xff] %v2214
      %2333 = vst [vmem:[%s276 + $0x20] sm:$0xff] %v2219
      %2334 = vst [vmem:[%s276 + $0x28] sm:$0xff] %v2222
      %2335 = vst [vmem:[%s276 + $0x30] sm:$0xff] %v2227
      %2336 = vst [vmem:[%s276 + $0x38] sm:$0xff] %v2230
      %2337 = vst [vmem:[%s276 + $0x40] sm:$0xff] %v2235
      %2338 = vst [vmem:[%s276 + $0x48] sm:$0xff] %v2238
      %2339 = vst [vmem:[%s276 + $0x50] sm:$0xff] %v2243
      %2340 = vst [vmem:[%s276 + $0x58] sm:$0xff] %v2246
      %2341 = vst [vmem:[%s276 + $0x60] sm:$0xff] %v2251
      %2342 = vst [vmem:[%s276 + $0x68] sm:$0xff] %v2254
      %2343 = vst [vmem:[%s276 + $0x70] sm:$0xff] %v2259
      %2344 = vst [vmem:[%s276 + $0x78] sm:$0xff] %v2262
      %2345 = vst [vmem:[%s276 + $0x80] sm:$0xff] %v2267
      %2346 = vst [vmem:[%s276 + $0x88] sm:$0xff] %v2270
      %2347 = vst [vmem:[%s276 + $0x90] sm:$0xff] %v2275
      %2348 = vst [vmem:[%s276 + $0x98] sm:$0xff] %v2278
      %2349 = vst [vmem:[%s276 + $0xa0] sm:$0xff] %v2283
      %2350 = vst [vmem:[%s276 + $0xa8] sm:$0xff] %v2286
      %2351 = vst [vmem:[%s276 + $0xb0] sm:$0xff] %v2291
      %2352 = vst [vmem:[%s276 + $0xb8] sm:$0xff] %v2294
      %2353 = vst [vmem:[%s276 + $0xc0] sm:$0xff] %v2299
      %2354 = vst [vmem:[%s276 + $0xc8] sm:$0xff] %v2302
      %2355 = vst [vmem:[%s276 + $0xd0] sm:$0xff] %v2307
      %2356 = vst [vmem:[%s276 + $0xd8] sm:$0xff] %v2310
      %2357 = vst [vmem:[%s276 + $0xe0] sm:$0xff] %v2315
      %2358 = vst [vmem:[%s276 + $0xe8] sm:$0xff] %v2318
      %2359 = vst [vmem:[%s276 + $0xf0] sm:$0xff] %v2323
      %2360 = vst [vmem:[%s276 + $0xf8] sm:$0xff] %v2326
      %v2361 = vadd.f32 %v2203, %v2206
      %v2362 = vadd.f32 %v2361, %v2211
      %v2363 = vadd.f32 %v2362, %v2214
      %v2364 = vadd.f32 %v2363, %v2219
      %v2365 = vadd.f32 %v2364, %v2222
      %v2366 = vadd.f32 %v2365, %v2227
      %v2367 = vadd.f32 %v2366, %v2230
      %v2368 = vadd.f32 %v2367, %v2235
      %v2369 = vadd.f32 %v2368, %v2238
      %v2370 = vadd.f32 %v2369, %v2243
      %v2371 = vadd.f32 %v2370, %v2246
      %v2372 = vadd.f32 %v2371, %v2251
      %v2373 = vadd.f32 %v2372, %v2254
      %v2374 = vadd.f32 %v2373, %v2259
      %v2375 = vadd.f32 %v2374, %v2262
      %v2376 = vadd.f32 %v2375, %v2267
      %v2377 = vadd.f32 %v2376, %v2270
      %v2378 = vadd.f32 %v2377, %v2275
      %v2379 = vadd.f32 %v2378, %v2278
      %v2380 = vadd.f32 %v2379, %v2283
      %v2381 = vadd.f32 %v2380, %v2286
      %v2382 = vadd.f32 %v2381, %v2291
      %v2383 = vadd.f32 %v2382, %v2294
      %v2384 = vadd.f32 %v2383, %v2299
      %v2385 = vadd.f32 %v2384, %v2302
      %v2386 = vadd.f32 %v2385, %v2307
      %v2387 = vadd.f32 %v2386, %v2310
      %v2388 = vadd.f32 %v2387, %v2315
      %v2389 = vadd.f32 %v2388, %v2318
      %v2390 = vadd.f32 %v2389, %v2323
      %v2391 = vadd.f32 %v2390, %v2326
      %v2392 = vrot.slane %v2391, 4
      %v2393 = vadd.f32 %v2391, %v2392
      %v2394 = vrot.slane %v2393, 2
      %v2395 = vadd.f32 %v2393, %v2394
      %v2396 = vrot.slane %v2395, 1
      %v2397 = vadd.f32 %v2395, %v2396
      %v2398 = vmul.f32 %v2203, %v2203
      %v2399 = vmul.f32 %v2206, %v2206
      %v2400 = vmul.f32 %v2211, %v2211
      %v2401 = vmul.f32 %v2214, %v2214
      %v2402 = vmul.f32 %v2219, %v2219
      %v2403 = vmul.f32 %v2222, %v2222
      %v2404 = vmul.f32 %v2227, %v2227
      %v2405 = vmul.f32 %v2230, %v2230
      %v2406 = vmul.f32 %v2235, %v2235
      %v2407 = vmul.f32 %v2238, %v2238
      %v2408 = vmul.f32 %v2243, %v2243
      %v2409 = vmul.f32 %v2246, %v2246
      %v2410 = vmul.f32 %v2251, %v2251
      %v2411 = vmul.f32 %v2254, %v2254
      %v2412 = vmul.f32 %v2259, %v2259
      %v2413 = vmul.f32 %v2262, %v2262
      %v2414 = vmul.f32 %v2267, %v2267
      %v2415 = vmul.f32 %v2270, %v2270
      %v2416 = vmul.f32 %v2275, %v2275
      %v2417 = vmul.f32 %v2278, %v2278
      %v2418 = vmul.f32 %v2283, %v2283
      %v2419 = vmul.f32 %v2286, %v2286
      %v2420 = vmul.f32 %v2291, %v2291
      %v2421 = vmul.f32 %v2294, %v2294
      %v2422 = vmul.f32 %v2299, %v2299
      %v2423 = vmul.f32 %v2302, %v2302
      %v2424 = vmul.f32 %v2307, %v2307
      %v2425 = vmul.f32 %v2310, %v2310
      %v2426 = vmul.f32 %v2315, %v2315
      %v2427 = vmul.f32 %v2318, %v2318
      %v2428 = vmul.f32 %v2323, %v2323
      %v2429 = vmul.f32 %v2326, %v2326
      %v2430 = vadd.f32 %v2398, %v2399
      %v2431 = vadd.f32 %v2430, %v2400
      %v2432 = vadd.f32 %v2431, %v2401
      %v2433 = vadd.f32 %v2432, %v2402
      %v2434 = vadd.f32 %v2433, %v2403
      %v2435 = vadd.f32 %v2434, %v2404
      %v2436 = vadd.f32 %v2435, %v2405
      %v2437 = vadd.f32 %v2436, %v2406
      %v2438 = vadd.f32 %v2437, %v2407
      %v2439 = vadd.f32 %v2438, %v2408
      %v2440 = vadd.f32 %v2439, %v2409
      %v2441 = vadd.f32 %v2440, %v2410
      %v2442 = vadd.f32 %v2441, %v2411
      %v2443 = vadd.f32 %v2442, %v2412
      %v2444 = vadd.f32 %v2443, %v2413
      %v2445 = vadd.f32 %v2444, %v2414
      %v2446 = vadd.f32 %v2445, %v2415
      %v2447 = vadd.f32 %v2446, %v2416
      %v2448 = vadd.f32 %v2447, %v2417
      %v2449 = vadd.f32 %v2448, %v2418
      %v2450 = vadd.f32 %v2449, %v2419
      %v2451 = vadd.f32 %v2450, %v2420
      %v2452 = vadd.f32 %v2451, %v2421
      %v2453 = vadd.f32 %v2452, %v2422
      %v2454 = vadd.f32 %v2453, %v2423
      %v2455 = vadd.f32 %v2454, %v2424
      %v2456 = vadd.f32 %v2455, %v2425
      %v2457 = vadd.f32 %v2456, %v2426
      %v2458 = vadd.f32 %v2457, %v2427
      %v2459 = vadd.f32 %v2458, %v2428
      %v2460 = vadd.f32 %v2459, %v2429
      %v2461 = vrot.slane %v2460, 4
      %v2462 = vadd.f32 %v2460, %v2461
      %v2463 = vrot.slane %v2462, 2
      %v2464 = vadd.f32 %v2462, %v2463
      %v2465 = vrot.slane %v2464, 1
      %v2466 = vadd.f32 %v2464, %v2465
      %vm2467 = vcmask 1040384
      %v2468 = vsel %vm2467, %v2397, %v2466
      // Predicated region
      $region49: #{residual_forward_nhwc.4} parent=43 // pred_check
        %p2469 = pneg %p431
      $region50: #{residual_forward_nhwc.4} parent=43 // pred_check_branch
        %2471 = sbr.rel (%p2469) target = $region52
      $region51: #{residual_forward_nhwc.4} parent=43 // pred_region
        %2472 = vst [vmem:[%s7] sm:$0x3] 0.0
      $region52: #{residual_forward_nhwc.4} parent=43 // pred_fallthru
        _
      %v2473 = vld [vmem:[%s7] sm:$0x3]
      %v2474 = vadd.f32 %v2473, %v2468
      %2475 = vst [vmem:[%s7] sm:$0x3] %v2474
      %p2476 = scmp.lt.s32.totalorder %s19, 1
      %s2477 = scalar_select %p2476, %s19, 1
      %s2478 = smul.addr %s2477, 32
      %s2479 = smul.addr %s2478, 8
      %s2480 = scalar_lea.vmem %s6, %s2479
      // Predicated region
      $region53: #{residual_forward_nhwc.4} parent=43 // pred_check
        %p2481 = pneg %p168
      $region54: #{residual_forward_nhwc.4} parent=43 // pred_check_branch
        %2483 = sbr.rel (%p2481) target = $region56
      $region55: #{residual_forward_nhwc.4} parent=43 // pred_region
        _
      $region56: #{residual_forward_nhwc.4} parent=43 // pred_fallthru
        _
      // Predicated region
      $region57: #{residual_forward_nhwc.4} parent=43 // pred_check
        %p2484 = pneg %p189
      $region58: #{residual_forward_nhwc.4} parent=43 // pred_check_branch
        %2486 = sbr.rel (%p2484) target = $region60
      $region59: #{residual_forward_nhwc.4} parent=43 // pred_region
        _
      $region60: #{residual_forward_nhwc.4} parent=43 // pred_fallthru
        _
      // Predicated region
      $region61: #{residual_forward_nhwc.4} parent=43 // pred_check
        %p2487 = pneg %p189
      $region62: #{residual_forward_nhwc.4} parent=43 // pred_check_branch
        %2489 = sbr.rel (%p2487) target = $region64
      $region63: #{residual_forward_nhwc.4} parent=43 // pred_region
        _
      $region64: #{residual_forward_nhwc.4} parent=43 // pred_fallthru
        _
    $region44: #{residual_forward_nhwc.4} parent=5 // pred_fallthru
      _
    %p2490 = scmp.le.s32.totalorder 2, %s14
    // Predicated region
    $region65: #{residual_forward_nhwc.4} parent=5 // pred_check
      %p2491 = pneg %p2490
    $region66: #{residual_forward_nhwc.4} parent=5 // pred_check_branch
      %2493 = sbr.rel (%p2491) target = $region68
    $region67: #{residual_forward_nhwc.4} parent=5 // pred_region
      %s2494 = ssub.s32 %s14, 2
      // Predicated region
      $region69: #{residual_forward_nhwc.4} parent=67 // pred_check
        %p2495 = pneg %p174
      $region70: #{residual_forward_nhwc.4} parent=67 // pred_check_branch
        %2497 = sbr.rel (%p2495) target = $region72
      $region71: #{residual_forward_nhwc.4} parent=67 // pred_region
        %p2498 = scmp.lt.s32.totalorder %s20, 1
        %s2499 = scalar_select %p2498, %s20, 1
        %s2500 = smul.addr %s2499, 32
        %s2501 = smul.addr %s2500, 8
        %s2502 = scalar_lea.vmem %s6, %s2501
      $region72: #{residual_forward_nhwc.4} parent=67 // pred_fallthru
        _
    $region68: #{residual_forward_nhwc.4} parent=5 // pred_fallthru
      _
  $region6: #{residual_forward_nhwc.4} parent=0 // loop_footer
    %s18 = sadd.s32 1, %s14
  $region7: #{residual_forward_nhwc.4} parent=0 // loop_footer_branch
    %13 = sbr.rel target = $region3
  $region8: #{residual_forward_nhwc.4} parent=0 // loop_exit
    _

// kernel: residual_forward_nhwc.3
$region0: #{residual_forward_nhwc.3}
  #allocation0 [shape = 'u32[]', space=smem, size = 0x4, offset = 0x4, fixed_abs, tag = 'smem constant byte address 0x4 - core index']
  #allocation1 [shape = 'u32[144,128]{1,0:T(1,128)}', space=vmem, size = 0x12000, scoped, tag = 'internal scratch']
  #allocation2 [shape = 'f32[1,18,18,128]{3,2,1,0:T(8,128)}', space=vmem, size = 0x36000, scoped, tag = 'scratch operand']
  %s0 = inlined_call_operand.vmem [shape: f32[2,16,16,128], index: 0, kind: input, shape index: {}]
  %s1 = inlined_call_operand.vmem [shape: bf16[1152,128], index: 1, kind: input, shape index: {}]
  %s2 = inlined_call_operand.vmem [shape: f32[1,128], index: 2, kind: input, shape index: {}]
  %s3 = inlined_call_operand.vmem [shape: f32[2,16,16,128], index: 3, kind: output, shape index: {0}]
  %s4 = inlined_call_operand.vmem [shape: f32[2,128], index: 4, kind: output, shape index: {1}]
  %5 = xla_tuple %s3, %s4
  %s6 = sld [smem:[#allocation0]]
  $region61: #{residual_forward_nhwc.3} parent=0
    _
  %s8 = ssub.s32 1, %s6
  %s9 = scalar_select 0, %s8, %s6
  loop: start=0, step=1, limit=4
  $region2: #{residual_forward_nhwc.3} parent=0 // loop_pre_header
    _
  $region3: #{residual_forward_nhwc.3} parent=0 // loop_header
    %s11 = sphi 0, %s15
    %p12 = scmp.ge.s32.totalorder %s11, 4
    %s21 = sphi 0, %s23
    %s24 = sphi 0, %s21
    %s25 = sphi 0, %s24
    %s41 = sphi 0, %s25
    %s45 = sphi 0, %s45
    %s47 = sphi 0, %s45
    %s48 = sphi 0, %s47
    %s62 = sphi 0, %s48
    %s66 = sphi 0, %s66
    %s68 = sphi 0, %s66
    %s69 = sphi 0, %s68
    %s83 = sphi 0, %s69
    %s89 = sphi 0, %s91
    %s92 = sphi 0, %s89
    %s93 = sphi 0, %s92
    %s109 = sphi 0, %s93
    %s113 = sphi 0, %s113
    %s115 = sphi 0, %s113
    %s116 = sphi 0, %s115
    %s130 = sphi 0, %s116
  $region4: #{residual_forward_nhwc.3} parent=0 // loop_header_branch
    %14 = sbr.rel (%p12) target = $region8
  $region5: #{residual_forward_nhwc.3} parent=0 // loop_body
    %s16 = ssub.s32 %s11, 1
    %s17 = ssub.s32 %s11, 2
    %s18 = sadd.s32 %s11, 1
    %s19 = ssub.s32 %s11, %s18
    %p20 = scmp.eq.s32.totalorder %s19, 0
    %s22 = sadd.s32 %s21, 1
    %s23 = scalar_select %p20, %s21, %s22
    %p26 = pneg %p20
    %p27 = scmp.eq.s32.totalorder %s11, 1
    %p28 = por %p26, %p27
    %p29 = scmp.ne.s32.totalorder %s21, %s24
    %p30 = scmp.eq.s32.totalorder %s11, 0
    %p31 = por %p29, %p30
    %p32 = scmp.ne.s32.totalorder %s21, %s24
    %p33 = scmp.eq.s32.totalorder %s16, 1
    %p34 = por %p32, %p33
    %p35 = scmp.ne.s32.totalorder %s24, %s25
    %p36 = scmp.eq.s32.totalorder %s16, 0
    %p37 = por %p35, %p36
    %p38 = scmp.ne.s32.totalorder %s24, %s25
    %p39 = scmp.eq.s32.totalorder %s17, 1
    %p40 = por %p38, %p39
    %p42 = scmp.ne.s32.totalorder %s25, %s41
    %p43 = scmp.eq.s32.totalorder %s17, 0
    %p44 = por %p42, %p43
    %s46 = sadd.s32 %s45, 1
    %p49 = scmp.eq.s32.totalorder %s11, 1
    %p50 = scmp.ne.s32.totalorder %s45, %s47
    %p51 = scmp.eq.s32.totalorder %s11, 0
    %p52 = por %p50, %p51
    %p53 = scmp.ne.s32.totalorder %s45, %s47
    %p54 = scmp.eq.s32.totalorder %s16, 1
    %p55 = por %p53, %p54
    %p56 = scmp.ne.s32.totalorder %s47, %s48
    %p57 = scmp.eq.s32.totalorder %s16, 0
    %p58 = por %p56, %p57
    %p59 = scmp.ne.s32.totalorder %s47, %s48
    %p60 = scmp.eq.s32.totalorder %s17, 1
    %p61 = por %p59, %p60
    %p63 = scmp.ne.s32.totalorder %s48, %s62
    %p64 = scmp.eq.s32.totalorder %s17, 0
    %p65 = por %p63, %p64
    %s67 = sadd.s32 %s66, 1
    %p70 = scmp.eq.s32.totalorder %s11, 1
    %p71 = scmp.ne.s32.totalorder %s66, %s68
    %p72 = scmp.eq.s32.totalorder %s11, 0
    %p73 = por %p71, %p72
    %p74 = scmp.ne.s32.totalorder %s66, %s68
    %p75 = scmp.eq.s32.totalorder %s16, 1
    %p76 = por %p74, %p75
    %p77 = scmp.ne.s32.totalorder %s68, %s69
    %p78 = scmp.eq.s32.totalorder %s16, 0
    %p79 = por %p77, %p78
    %p80 = scmp.ne.s32.totalorder %s68, %s69
    %p81 = scmp.eq.s32.totalorder %s17, 1
    %p82 = por %p80, %p81
    %p84 = scmp.ne.s32.totalorder %s69, %s83
    %p85 = scmp.eq.s32.totalorder %s17, 0
    %p86 = por %p84, %p85
    %s87 = ssub.s32 %s11, %s18
    %p88 = scmp.eq.s32.totalorder %s87, 0
    %s90 = sadd.s32 %s89, 1
    %s91 = scalar_select %p88, %s89, %s90
    %p94 = pneg %p88
    %p95 = scmp.eq.s32.totalorder %s11, 1
    %p96 = por %p94, %p95
    %p97 = scmp.ne.s32.totalorder %s89, %s92
    %p98 = scmp.eq.s32.totalorder %s11, 0
    %p99 = por %p97, %p98
    %p100 = scmp.ne.s32.totalorder %s89, %s92
    %p101 = scmp.eq.s32.totalorder %s16, 1
    %p102 = por %p100, %p101
    %p103 = scmp.ne.s32.totalorder %s92, %s93
    %p104 = scmp.eq.s32.totalorder %s16, 0
    %p105 = por %p103, %p104
    %p106 = scmp.ne.s32.totalorder %s92, %s93
    %p107 = scmp.eq.s32.totalorder %s17, 1
    %p108 = por %p106, %p107
    %p110 = scmp.ne.s32.totalorder %s93, %s109
    %p111 = scmp.eq.s32.totalorder %s17, 0
    %p112 = por %p110, %p111
    %s114 = sadd.s32 %s113, 1
    %p117 = scmp.eq.s32.totalorder %s11, 1
    %p118 = scmp.ne.s32.totalorder %s113, %s115
    %p119 = scmp.eq.s32.totalorder %s11, 0
    %p120 = por %p118, %p119
    %p121 = scmp.ne.s32.totalorder %s113, %s115
    %p122 = scmp.eq.s32.totalorder %s16, 1
    %p123 = por %p121, %p122
    %p124 = scmp.ne.s32.totalorder %s115, %s116
    %p125 = scmp.eq.s32.totalorder %s16, 0
    %p126 = por %p124, %p125
    %p127 = scmp.ne.s32.totalorder %s115, %s116
    %p128 = scmp.eq.s32.totalorder %s17, 1
    %p129 = por %p127, %p128
    %p131 = scmp.ne.s32.totalorder %s116, %s130
    %p132 = scmp.eq.s32.totalorder %s17, 0
    %p133 = por %p131, %p132
    %p134 = scmp.le.s32.totalorder 1, %s11
    %p135 = scmp.lt.s32.totalorder %s11, 3
    %p136 = pnand %p134, %p135
    %p137 = pneg %p136
    // Predicated region
    $region9: #{residual_forward_nhwc.3} parent=5 // pred_check
      _
    $region10: #{residual_forward_nhwc.3} parent=5 // pred_check_branch
      %139 = sbr.rel (%p136) target = $region12
    $region11: #{residual_forward_nhwc.3} parent=5 // pred_region
      %s140 = ssub.s32 %s11, 1
      // Predicated region
      $region13: #{residual_forward_nhwc.3} parent=11 // pred_check
        %p141 = pneg %p58
      $region14: #{residual_forward_nhwc.3} parent=11 // pred_check_branch
        %143 = sbr.rel (%p141) target = $region16
      $region15: #{residual_forward_nhwc.3} parent=11 // pred_region
        _
      $region16: #{residual_forward_nhwc.3} parent=11 // pred_fallthru
        _
      // Predicated region
      $region17: #{residual_forward_nhwc.3} parent=11 // pred_check
        %p144 = pneg %p79
      $region18: #{residual_forward_nhwc.3} parent=11 // pred_check_branch
        %146 = sbr.rel (%p144) target = $region20
      $region19: #{residual_forward_nhwc.3} parent=11 // pred_region
        _
      $region20: #{residual_forward_nhwc.3} parent=11 // pred_fallthru
        _
    $region12: #{residual_forward_nhwc.3} parent=5 // pred_fallthru
      _
    %p147 = scmp.lt.s32.totalorder %s11, 2
    // Predicated region
    $region21: #{residual_forward_nhwc.3} parent=5 // pred_check
      %p148 = pneg %p147
    $region22: #{residual_forward_nhwc.3} parent=5 // pred_check_branch
      %150 = sbr.rel (%p148) target = $region24
    $region23: #{residual_forward_nhwc.3} parent=5 // pred_region
      // Predicated region
      $region25: #{residual_forward_nhwc.3} parent=23 // pred_check
        %p151 = pneg %p31
      $region26: #{residual_forward_nhwc.3} parent=23 // pred_check_branch
        %153 = sbr.rel (%p151) target = $region28
      $region27: #{residual_forward_nhwc.3} parent=23 // pred_region
        %p154 = scmp.lt.s32.totalorder %s11, 1
        %s155 = scalar_select %p154, %s11, 1
        %s156 = smul.addr %s155, 32
        %s157 = smul.addr %s156, 8
        %s158 = scalar_lea.vmem %s0, %s157
      $region28: #{residual_forward_nhwc.3} parent=23 // pred_fallthru
        _
    $region24: #{residual_forward_nhwc.3} parent=5 // pred_fallthru
      _
    %p159 = scmp.le.s32.totalorder 1, %s11
    %p160 = scmp.lt.s32.totalorder %s11, 3
    %p161 = pnand %p159, %p160
    %p162 = pneg %p161
    // Predicated region
    $region29: #{residual_forward_nhwc.3} parent=5 // pred_check
      _
    $region30: #{residual_forward_nhwc.3} parent=5 // pred_check_branch
      %164 = sbr.rel (%p161) target = $region32
    $region31: #{residual_forward_nhwc.3} parent=5 // pred_region
      %s165 = ssub.s32 %s11, 1
      %p166 = scmp.lt.s32.totalorder %s16, 1
      %s167 = scalar_select %p166, %s16, 1
      %s168 = smul.addr %s167, 32
      %s169 = smul.addr %s168, 8
      %s170 = scalar_lea.vmem %s0, %s169
      %p171 = pneg %p37
      %p172 = pneg %p34
      %p173 = pneg %p58
      %p174 = pneg %p55
      %p175 = pneg %p79
      %p176 = pneg %p76
      %p177 = pneg %p105
      %p178 = pneg %p102
      %p179 = scmp.lt.s32.totalorder %s16, 1
      %s180 = scalar_select %p179, %s16, 1
      %s181 = smul.addr %s180, 32
      %s182 = smul.addr %s181, 8
      %s183 = scalar_lea.vmem %s3, %s182
      %p184 = pneg %p126
      %p185 = pneg %p123
      %p186 = scmp.lt.s32.totalorder %s16, 1
      %s187 = scalar_select %p186, %s16, 1
      %s188 = smul.addr %s187, 32
      %s189 = smul.addr %s188, 8
      %s190 = scalar_lea.vmem %s0, %s189
      %p191 = scmp.lt.s32.totalorder %s16, 1
      %s192 = scalar_select %p191, %s16, 1
      %s193 = smul.addr %s192, 32
      %s194 = smul.addr %s193, 8
      %s195 = scalar_lea.vmem %s3, %s194
      %v197 = vld [vmem:[%s190] sm:$0xff]
      %v198 = vld [vmem:[%s190 + $0x8] sm:$0xff]
      %v199 = vld [vmem:[%s190 + $0x10] sm:$0xff]
      %v200 = vld [vmem:[%s190 + $0x18] sm:$0xff]
      %v201 = vld [vmem:[%s190 + $0x20] sm:$0xff]
      %v202 = vld [vmem:[%s190 + $0x28] sm:$0xff]
      %v203 = vld [vmem:[%s190 + $0x30] sm:$0xff]
      %v204 = vld [vmem:[%s190 + $0x38] sm:$0xff]
      %v205 = vld [vmem:[%s190 + $0x40] sm:$0xff]
      %v206 = vld [vmem:[%s190 + $0x48] sm:$0xff]
      %v207 = vld [vmem:[%s190 + $0x50] sm:$0xff]
      %v208 = vld [vmem:[%s190 + $0x58] sm:$0xff]
      %v209 = vld [vmem:[%s190 + $0x60] sm:$0xff]
      %v210 = vld [vmem:[%s190 + $0x68] sm:$0xff]
      %v211 = vld [vmem:[%s190 + $0x70] sm:$0xff]
      %v212 = vld [vmem:[%s190 + $0x78] sm:$0xff]
      %v213 = vld [vmem:[%s190 + $0x80] sm:$0xff]
      %v214 = vld [vmem:[%s190 + $0x88] sm:$0xff]
      %v215 = vld [vmem:[%s190 + $0x90] sm:$0xff]
      %v216 = vld [vmem:[%s190 + $0x98] sm:$0xff]
      %v217 = vld [vmem:[%s190 + $0xa0] sm:$0xff]
      %v218 = vld [vmem:[%s190 + $0xa8] sm:$0xff]
      %v219 = vld [vmem:[%s190 + $0xb0] sm:$0xff]
      %v220 = vld [vmem:[%s190 + $0xb8] sm:$0xff]
      %v221 = vld [vmem:[%s190 + $0xc0] sm:$0xff]
      %v222 = vld [vmem:[%s190 + $0xc8] sm:$0xff]
      %v223 = vld [vmem:[%s190 + $0xd0] sm:$0xff]
      %v224 = vld [vmem:[%s190 + $0xd8] sm:$0xff]
      %v225 = vld [vmem:[%s190 + $0xe0] sm:$0xff]
      %v226 = vld [vmem:[%s190 + $0xe8] sm:$0xff]
      %v227 = vld [vmem:[%s190 + $0xf0] sm:$0xff]
      %v228 = vld [vmem:[%s190 + $0xf8] sm:$0xff]
      %p229 = scmp.eq.s32.totalorder %s16, 0
      // Predicated region
      $region33: #{residual_forward_nhwc.3} parent=31 // pred_check
        %p230 = pneg %p229
      $region34: #{residual_forward_nhwc.3} parent=31 // pred_check_branch
        %232 = sbr.rel (%p230) target = $region36
      $region35: #{residual_forward_nhwc.3} parent=31 // pred_region
        %233 = vst [vmem:[#allocation2] sm:$0xff] 0.0
        %234 = vst [vmem:[#allocation2 + $0x8] sm:$0xff] 0.0
        %235 = vst [vmem:[#allocation2 + $0x10] sm:$0x3] 0.0
        %s236 = scalar_lea.vmem [#allocation2], 408
        %237 = vst [vmem:[%s236] sm:$0xff] 0.0
        %238 = vst [vmem:[%s236 + $0x8] sm:$0xff] 0.0
        %239 = vst [vmem:[%s236 + $0x10] sm:$0x3] 0.0
        %s240 = scalar_lea.vmem [#allocation2], 24
        %241 = vst [vmem:[%s240] sm:$0x1] 0.0
        %242 = vst [vmem:[%s240 + $0x18] sm:$0x1] 0.0
        %243 = vst [vmem:[%s240 + $0x30] sm:$0x1] 0.0
        %244 = vst [vmem:[%s240 + $0x48] sm:$0x1] 0.0
        %245 = vst [vmem:[%s240 + $0x60] sm:$0x1] 0.0
        %246 = vst [vmem:[%s240 + $0x78] sm:$0x1] 0.0
        %247 = vst [vmem:[%s240 + $0x90] sm:$0x1] 0.0
        %248 = vst [vmem:[%s240 + $0xa8] sm:$0x1] 0.0
        %249 = vst [vmem:[%s240 + $0xc0] sm:$0x1] 0.0
        %250 = vst [vmem:[%s240 + $0xd8] sm:$0x1] 0.0
        %251 = vst [vmem:[%s240 + $0xf0] sm:$0x1] 0.0
        %252 = vst [vmem:[%s240 + $0x108] sm:$0x1] 0.0
        %253 = vst [vmem:[%s240 + $0x120] sm:$0x1] 0.0
        %254 = vst [vmem:[%s240 + $0x138] sm:$0x1] 0.0
        %255 = vst [vmem:[%s240 + $0x150] sm:$0x1] 0.0
        %256 = vst [vmem:[%s240 + $0x168] sm:$0x1] 0.0
        %257 = vst [vmem:[%s240 + $0x11] sm:$0x1] 0.0
        %258 = vst [vmem:[%s240 + $0x29] sm:$0x1] 0.0
        %259 = vst [vmem:[%s240 + $0x41] sm:$0x1] 0.0
        %260 = vst [vmem:[%s240 + $0x59] sm:$0x1] 0.0
        %261 = vst [vmem:[%s240 + $0x71] sm:$0x1] 0.0
        %262 = vst [vmem:[%s240 + $0x89] sm:$0x1] 0.0
        %263 = vst [vmem:[%s240 + $0xa1] sm:$0x1] 0.0
        %264 = vst [vmem:[%s240 + $0xb9] sm:$0x1] 0.0
        %265 = vst [vmem:[%s240 + $0xd1] sm:$0x1] 0.0
        %266 = vst [vmem:[%s240 + $0xe9] sm:$0x1] 0.0
        %267 = vst [vmem:[%s240 + $0x101] sm:$0x1] 0.0
        %268 = vst [vmem:[%s240 + $0x119] sm:$0x1] 0.0
        %269 = vst [vmem:[%s240 + $0x131] sm:$0x1] 0.0
        %270 = vst [vmem:[%s240 + $0x149] sm:$0x1] 0.0
        %271 = vst [vmem:[%s240 + $0x161] sm:$0x1] 0.0
        %272 = vst [vmem:[%s240 + $0x179] sm:$0x1] 0.0
      $region36: #{residual_forward_nhwc.3} parent=31 // pred_fallthru
        _
      %s273 = scalar_lea.vmem [#allocation2], 24
      %274 = vst [vmem:[%s273 + $0x1] sm:$0xff] %v197
      %275 = vst [vmem:[%s273 + $0x9] sm:$0xff] %v198
      %276 = vst [vmem:[%s273 + $0x19] sm:$0xff] %v199
      %277 = vst [vmem:[%s273 + $0x21] sm:$0xff] %v200
      %278 = vst [vmem:[%s273 + $0x31] sm:$0xff] %v201
      %279 = vst [vmem:[%s273 + $0x39] sm:$0xff] %v202
      %280 = vst [vmem:[%s273 + $0x49] sm:$0xff] %v203
      %281 = vst [vmem:[%s273 + $0x51] sm:$0xff] %v204
      %282 = vst [vmem:[%s273 + $0x61] sm:$0xff] %v205
      %283 = vst [vmem:[%s273 + $0x69] sm:$0xff] %v206
      %284 = vst [vmem:[%s273 + $0x79] sm:$0xff] %v207
      %285 = vst [vmem:[%s273 + $0x81] sm:$0xff] %v208
      %286 = vst [vmem:[%s273 + $0x91] sm:$0xff] %v209
      %287 = vst [vmem:[%s273 + $0x99] sm:$0xff] %v210
      %288 = vst [vmem:[%s273 + $0xa9] sm:$0xff] %v211
      %289 = vst [vmem:[%s273 + $0xb1] sm:$0xff] %v212
      %290 = vst [vmem:[%s273 + $0xc1] sm:$0xff] %v213
      %291 = vst [vmem:[%s273 + $0xc9] sm:$0xff] %v214
      %292 = vst [vmem:[%s273 + $0xd9] sm:$0xff] %v215
      %293 = vst [vmem:[%s273 + $0xe1] sm:$0xff] %v216
      %294 = vst [vmem:[%s273 + $0xf1] sm:$0xff] %v217
      %295 = vst [vmem:[%s273 + $0xf9] sm:$0xff] %v218
      %296 = vst [vmem:[%s273 + $0x109] sm:$0xff] %v219
      %297 = vst [vmem:[%s273 + $0x111] sm:$0xff] %v220
      %298 = vst [vmem:[%s273 + $0x121] sm:$0xff] %v221
      %299 = vst [vmem:[%s273 + $0x129] sm:$0xff] %v222
      %300 = vst [vmem:[%s273 + $0x139] sm:$0xff] %v223
      %301 = vst [vmem:[%s273 + $0x141] sm:$0xff] %v224
      %302 = vst [vmem:[%s273 + $0x151] sm:$0xff] %v225
      %303 = vst [vmem:[%s273 + $0x159] sm:$0xff] %v226
      %304 = vst [vmem:[%s273 + $0x169] sm:$0xff] %v227
      %305 = vst [vmem:[%s273 + $0x171] sm:$0xff] %v228
      %v306 = vld [vmem:[#allocation2] sm:$0xff]
      %v307 = vld [vmem:[#allocation2 + $0x8] sm:$0xff]
      %v308 = vld [vmem:[#allocation2 + $0x18] sm:$0xff]
      %v309 = vld [vmem:[#allocation2 + $0x20] sm:$0xff]
      %v310 = vld [vmem:[#allocation2 + $0x30] sm:$0xff]
      %v311 = vld [vmem:[#allocation2 + $0x38] sm:$0xff]
      %v312 = vld [vmem:[#allocation2 + $0x48] sm:$0xff]
      %v313 = vld [vmem:[#allocation2 + $0x50] sm:$0xff]
      %v314 = vld [vmem:[#allocation2 + $0x60] sm:$0xff]
      %v315 = vld [vmem:[#allocation2 + $0x68] sm:$0xff]
      %v316 = vld [vmem:[#allocation2 + $0x78] sm:$0xff]
      %v317 = vld [vmem:[#allocation2 + $0x80] sm:$0xff]
      %v318 = vld [vmem:[#allocation2 + $0x90] sm:$0xff]
      %v319 = vld [vmem:[#allocation2 + $0x98] sm:$0xff]
      %v320 = vld [vmem:[#allocation2 + $0xa8] sm:$0xff]
      %v321 = vld [vmem:[#allocation2 + $0xb0] sm:$0xff]
      %v322 = vld [vmem:[#allocation2 + $0xc0] sm:$0xff]
      %v323 = vld [vmem:[#allocation2 + $0xc8] sm:$0xff]
      %v324 = vld [vmem:[#allocation2 + $0xd8] sm:$0xff]
      %v325 = vld [vmem:[#allocation2 + $0xe0] sm:$0xff]
      %v326 = vld [vmem:[#allocation2 + $0xf0] sm:$0xff]
      %v327 = vld [vmem:[#allocation2 + $0xf8] sm:$0xff]
      %v328 = vld [vmem:[#allocation2 + $0x108] sm:$0xff]
      %v329 = vld [vmem:[#allocation2 + $0x110] sm:$0xff]
      %v330 = vld [vmem:[#allocation2 + $0x120] sm:$0xff]
      %v331 = vld [vmem:[#allocation2 + $0x128] sm:$0xff]
      %v332 = vld [vmem:[#allocation2 + $0x138] sm:$0xff]
      %v333 = vld [vmem:[#allocation2 + $0x140] sm:$0xff]
      %v334 = vld [vmem:[#allocation2 + $0x150] sm:$0xff]
      %v335 = vld [vmem:[#allocation2 + $0x158] sm:$0xff]
      %v336 = vld [vmem:[#allocation2 + $0x168] sm:$0xff]
      %v337 = vld [vmem:[#allocation2 + $0x170] sm:$0xff]
      %v338 = vld [vmem:[#allocation2 + $0x1] sm:$0xff]
      %v339 = vld [vmem:[#allocation2 + $0x9] sm:$0xff]
      %v340 = vld [vmem:[#allocation2 + $0x19] sm:$0xff]
      %v341 = vld [vmem:[#allocation2 + $0x21] sm:$0xff]
      %v342 = vld [vmem:[#allocation2 + $0x31] sm:$0xff]
      %v343 = vld [vmem:[#allocation2 + $0x39] sm:$0xff]
      %v344 = vld [vmem:[#allocation2 + $0x49] sm:$0xff]
      %v345 = vld [vmem:[#allocation2 + $0x51] sm:$0xff]
      %v346 = vld [vmem:[#allocation2 + $0x61] sm:$0xff]
      %v347 = vld [vmem:[#allocation2 + $0x69] sm:$0xff]
      %v348 = vld [vmem:[#allocation2 + $0x79] sm:$0xff]
      %v349 = vld [vmem:[#allocation2 + $0x81] sm:$0xff]
      %v350 = vld [vmem:[#allocation2 + $0x91] sm:$0xff]
      %v351 = vld [vmem:[#allocation2 + $0x99] sm:$0xff]
      %v352 = vld [vmem:[#allocation2 + $0xa9] sm:$0xff]
      %v353 = vld [vmem:[#allocation2 + $0xb1] sm:$0xff]
      %v354 = vld [vmem:[#allocation2 + $0xc1] sm:$0xff]
      %v355 = vld [vmem:[#allocation2 + $0xc9] sm:$0xff]
      %v356 = vld [vmem:[#allocation2 + $0xd9] sm:$0xff]
      %v357 = vld [vmem:[#allocation2 + $0xe1] sm:$0xff]
      %v358 = vld [vmem:[#allocation2 + $0xf1] sm:$0xff]
      %v359 = vld [vmem:[#allocation2 + $0xf9] sm:$0xff]
      %v360 = vld [vmem:[#allocation2 + $0x109] sm:$0xff]
      %v361 = vld [vmem:[#allocation2 + $0x111] sm:$0xff]
      %v362 = vld [vmem:[#allocation2 + $0x121] sm:$0xff]
      %v363 = vld [vmem:[#allocation2 + $0x129] sm:$0xff]
      %v364 = vld [vmem:[#allocation2 + $0x139] sm:$0xff]
      %v365 = vld [vmem:[#allocation2 + $0x141] sm:$0xff]
      %v366 = vld [vmem:[#allocation2 + $0x151] sm:$0xff]
      %v367 = vld [vmem:[#allocation2 + $0x159] sm:$0xff]
      %v368 = vld [vmem:[#allocation2 + $0x169] sm:$0xff]
      %v369 = vld [vmem:[#allocation2 + $0x171] sm:$0xff]
      %v370 = vld [vmem:[#allocation2 + $0x2] sm:$0xff]
      %v371 = vld [vmem:[#allocation2 + $0xa] sm:$0xff]
      %v372 = vld [vmem:[#allocation2 + $0x1a] sm:$0xff]
      %v373 = vld [vmem:[#allocation2 + $0x22] sm:$0xff]
      %v374 = vld [vmem:[#allocation2 + $0x32] sm:$0xff]
      %v375 = vld [vmem:[#allocation2 + $0x3a] sm:$0xff]
      %v376 = vld [vmem:[#allocation2 + $0x4a] sm:$0xff]
      %v377 = vld [vmem:[#allocation2 + $0x52] sm:$0xff]
      %v378 = vld [vmem:[#allocation2 + $0x62] sm:$0xff]
      %v379 = vld [vmem:[#allocation2 + $0x6a] sm:$0xff]
      %v380 = vld [vmem:[#allocation2 + $0x7a] sm:$0xff]
      %v381 = vld [vmem:[#allocation2 + $0x82] sm:$0xff]
      %v382 = vld [vmem:[#allocation2 + $0x92] sm:$0xff]
      %v383 = vld [vmem:[#allocation2 + $0x9a] sm:$0xff]
      %v384 = vld [vmem:[#allocation2 + $0xaa] sm:$0xff]
      %v385 = vld [vmem:[#allocation2 + $0xb2] sm:$0xff]
      %v386 = vld [vmem:[#allocation2 + $0xc2] sm:$0xff]
      %v387 = vld [vmem:[#allocation2 + $0xca] sm:$0xff]
      %v388 = vld [vmem:[#allocation2 + $0xda] sm:$0xff]
      %v389 = vld [vmem:[#allocation2 + $0xe2] sm:$0xff]
      %v390 = vld [vmem:[#allocation2 + $0xf2] sm:$0xff]
      %v391 = vld [vmem:[#allocation2 + $0xfa] sm:$0xff]
      %v392 = vld [vmem:[#allocation2 + $0x10a] sm:$0xff]
      %v393 = vld [vmem:[#allocation2 + $0x112] sm:$0xff]
      %v394 = vld [vmem:[#allocation2 + $0x122] sm:$0xff]
      %v395 = vld [vmem:[#allocation2 + $0x12a] sm:$0xff]
      %v396 = vld [vmem:[#allocation2 + $0x13a] sm:$0xff]
      %v397 = vld [vmem:[#allocation2 + $0x142] sm:$0xff]
      %v398 = vld [vmem:[#allocation2 + $0x152] sm:$0xff]
      %v399 = vld [vmem:[#allocation2 + $0x15a] sm:$0xff]
      %v400 = vld [vmem:[#allocation2 + $0x16a] sm:$0xff]
      %v401 = vld [vmem:[#allocation2 + $0x172] sm:$0xff]
      %v402 = vld [vmem:[%s273] sm:$0xff]
      %v403 = vld [vmem:[%s273 + $0x8] sm:$0xff]
      %v404 = vld [vmem:[%s273 + $0x18] sm:$0xff]
      %v405 = vld [vmem:[%s273 + $0x20] sm:$0xff]
      %v406 = vld [vmem:[%s273 + $0x30] sm:$0xff]
      %v407 = vld [vmem:[%s273 + $0x38] sm:$0xff]
      %v408 = vld [vmem:[%s273 + $0x48] sm:$0xff]
      %v409 = vld [vmem:[%s273 + $0x50] sm:$0xff]
      %v410 = vld [vmem:[%s273 + $0x60] sm:$0xff]
      %v411 = vld [vmem:[%s273 + $0x68] sm:$0xff]
      %v412 = vld [vmem:[%s273 + $0x78] sm:$0xff]
      %v413 = vld [vmem:[%s273 + $0x80] sm:$0xff]
      %v414 = vld [vmem:[%s273 + $0x90] sm:$0xff]
      %v415 = vld [vmem:[%s273 + $0x98] sm:$0xff]
      %v416 = vld [vmem:[%s273 + $0xa8] sm:$0xff]
      %v417 = vld [vmem:[%s273 + $0xb0] sm:$0xff]
      %v418 = vld [vmem:[%s273 + $0xc0] sm:$0xff]
      %v419 = vld [vmem:[%s273 + $0xc8] sm:$0xff]
      %v420 = vld [vmem:[%s273 + $0xd8] sm:$0xff]
      %v421 = vld [vmem:[%s273 + $0xe0] sm:$0xff]
      %v422 = vld [vmem:[%s273 + $0xf0] sm:$0xff]
      %v423 = vld [vmem:[%s273 + $0xf8] sm:$0xff]
      %v424 = vld [vmem:[%s273 + $0x108] sm:$0xff]
      %v425 = vld [vmem:[%s273 + $0x110] sm:$0xff]
      %v426 = vld [vmem:[%s273 + $0x120] sm:$0xff]
      %v427 = vld [vmem:[%s273 + $0x128] sm:$0xff]
      %v428 = vld [vmem:[%s273 + $0x138] sm:$0xff]
      %v429 = vld [vmem:[%s273 + $0x140] sm:$0xff]
      %v430 = vld [vmem:[%s273 + $0x150] sm:$0xff]
      %v431 = vld [vmem:[%s273 + $0x158] sm:$0xff]
      %v432 = vld [vmem:[%s273 + $0x168] sm:$0xff]
      %v433 = vld [vmem:[%s273 + $0x170] sm:$0xff]
      %v434 = vld [vmem:[%s273 + $0x1] sm:$0xff]
      %v435 = vld [vmem:[%s273 + $0x9] sm:$0xff]
      %v436 = vld [vmem:[%s273 + $0x19] sm:$0xff]
      %v437 = vld [vmem:[%s273 + $0x21] sm:$0xff]
      %v438 = vld [vmem:[%s273 + $0x31] sm:$0xff]
      %v439 = vld [vmem:[%s273 + $0x39] sm:$0xff]
      %v440 = vld [vmem:[%s273 + $0x49] sm:$0xff]
      %v441 = vld [vmem:[%s273 + $0x51] sm:$0xff]
      %v442 = vld [vmem:[%s273 + $0x61] sm:$0xff]
      %v443 = vld [vmem:[%s273 + $0x69] sm:$0xff]
      %v444 = vld [vmem:[%s273 + $0x79] sm:$0xff]
      %v445 = vld [vmem:[%s273 + $0x81] sm:$0xff]
      %v446 = vld [vmem:[%s273 + $0x91] sm:$0xff]
      %v447 = vld [vmem:[%s273 + $0x99] sm:$0xff]
      %v448 = vld [vmem:[%s273 + $0xa9] sm:$0xff]
      %v449 = vld [vmem:[%s273 + $0xb1] sm:$0xff]
      %v450 = vld [vmem:[%s273 + $0xc1] sm:$0xff]
      %v451 = vld [vmem:[%s273 + $0xc9] sm:$0xff]
      %v452 = vld [vmem:[%s273 + $0xd9] sm:$0xff]
      %v453 = vld [vmem:[%s273 + $0xe1] sm:$0xff]
      %v454 = vld [vmem:[%s273 + $0xf1] sm:$0xff]
      %v455 = vld [vmem:[%s273 + $0xf9] sm:$0xff]
      %v456 = vld [vmem:[%s273 + $0x109] sm:$0xff]
      %v457 = vld [vmem:[%s273 + $0x111] sm:$0xff]
      %v458 = vld [vmem:[%s273 + $0x121] sm:$0xff]
      %v459 = vld [vmem:[%s273 + $0x129] sm:$0xff]
      %v460 = vld [vmem:[%s273 + $0x139] sm:$0xff]
      %v461 = vld [vmem:[%s273 + $0x141] sm:$0xff]
      %v462 = vld [vmem:[%s273 + $0x151] sm:$0xff]
      %v463 = vld [vmem:[%s273 + $0x159] sm:$0xff]
      %v464 = vld [vmem:[%s273 + $0x169] sm:$0xff]
      %v465 = vld [vmem:[%s273 + $0x171] sm:$0xff]
      %v466 = vld [vmem:[%s273 + $0x2] sm:$0xff]
      %v467 = vld [vmem:[%s273 + $0xa] sm:$0xff]
      %v468 = vld [vmem:[%s273 + $0x1a] sm:$0xff]
      %v469 = vld [vmem:[%s273 + $0x22] sm:$0xff]
      %v470 = vld [vmem:[%s273 + $0x32] sm:$0xff]
      %v471 = vld [vmem:[%s273 + $0x3a] sm:$0xff]
      %v472 = vld [vmem:[%s273 + $0x4a] sm:$0xff]
      %v473 = vld [vmem:[%s273 + $0x52] sm:$0xff]
      %v474 = vld [vmem:[%s273 + $0x62] sm:$0xff]
      %v475 = vld [vmem:[%s273 + $0x6a] sm:$0xff]
      %v476 = vld [vmem:[%s273 + $0x7a] sm:$0xff]
      %v477 = vld [vmem:[%s273 + $0x82] sm:$0xff]
      %v478 = vld [vmem:[%s273 + $0x92] sm:$0xff]
      %v479 = vld [vmem:[%s273 + $0x9a] sm:$0xff]
      %v480 = vld [vmem:[%s273 + $0xaa] sm:$0xff]
      %v481 = vld [vmem:[%s273 + $0xb2] sm:$0xff]
      %v482 = vld [vmem:[%s273 + $0xc2] sm:$0xff]
      %v483 = vld [vmem:[%s273 + $0xca] sm:$0xff]
      %v484 = vld [vmem:[%s273 + $0xda] sm:$0xff]
      %v485 = vld [vmem:[%s273 + $0xe2] sm:$0xff]
      %v486 = vld [vmem:[%s273 + $0xf2] sm:$0xff]
      %v487 = vld [vmem:[%s273 + $0xfa] sm:$0xff]
      %v488 = vld [vmem:[%s273 + $0x10a] sm:$0xff]
      %v489 = vld [vmem:[%s273 + $0x112] sm:$0xff]
      %v490 = vld [vmem:[%s273 + $0x122] sm:$0xff]
      %v491 = vld [vmem:[%s273 + $0x12a] sm:$0xff]
      %v492 = vld [vmem:[%s273 + $0x13a] sm:$0xff]
      %v493 = vld [vmem:[%s273 + $0x142] sm:$0xff]
      %v494 = vld [vmem:[%s273 + $0x152] sm:$0xff]
      %v495 = vld [vmem:[%s273 + $0x15a] sm:$0xff]
      %v496 = vld [vmem:[%s273 + $0x16a] sm:$0xff]
      %v497 = vld [vmem:[%s273 + $0x172] sm:$0xff]
      %s498 = scalar_lea.vmem [#allocation2], 48
      %v499 = vld [vmem:[%s498] sm:$0xff]
      %v500 = vld [vmem:[%s498 + $0x8] sm:$0xff]
      %v501 = vld [vmem:[%s498 + $0x18] sm:$0xff]
      %v502 = vld [vmem:[%s498 + $0x20] sm:$0xff]
      %v503 = vld [vmem:[%s498 + $0x30] sm:$0xff]
      %v504 = vld [vmem:[%s498 + $0x38] sm:$0xff]
      %v505 = vld [vmem:[%s498 + $0x48] sm:$0xff]
      %v506 = vld [vmem:[%s498 + $0x50] sm:$0xff]
      %v507 = vld [vmem:[%s498 + $0x60] sm:$0xff]
      %v508 = vld [vmem:[%s498 + $0x68] sm:$0xff]
      %v509 = vld [vmem:[%s498 + $0x78] sm:$0xff]
      %v510 = vld [vmem:[%s498 + $0x80] sm:$0xff]
      %v511 = vld [vmem:[%s498 + $0x90] sm:$0xff]
      %v512 = vld [vmem:[%s498 + $0x98] sm:$0xff]
      %v513 = vld [vmem:[%s498 + $0xa8] sm:$0xff]
      %v514 = vld [vmem:[%s498 + $0xb0] sm:$0xff]
      %v515 = vld [vmem:[%s498 + $0xc0] sm:$0xff]
      %v516 = vld [vmem:[%s498 + $0xc8] sm:$0xff]
      %v517 = vld [vmem:[%s498 + $0xd8] sm:$0xff]
      %v518 = vld [vmem:[%s498 + $0xe0] sm:$0xff]
      %v519 = vld [vmem:[%s498 + $0xf0] sm:$0xff]
      %v520 = vld [vmem:[%s498 + $0xf8] sm:$0xff]
      %v521 = vld [vmem:[%s498 + $0x108] sm:$0xff]
      %v522 = vld [vmem:[%s498 + $0x110] sm:$0xff]
      %v523 = vld [vmem:[%s498 + $0x120] sm:$0xff]
      %v524 = vld [vmem:[%s498 + $0x128] sm:$0xff]
      %v525 = vld [vmem:[%s498 + $0x138] sm:$0xff]
      %v526 = vld [vmem:[%s498 + $0x140] sm:$0xff]
      %v527 = vld [vmem:[%s498 + $0x150] sm:$0xff]
      %v528 = vld [vmem:[%s498 + $0x158] sm:$0xff]
      %v529 = vld [vmem:[%s498 + $0x168] sm:$0xff]
      %v530 = vld [vmem:[%s498 + $0x170] sm:$0xff]
      %v531 = vld [vmem:[%s498 + $0x1] sm:$0xff]
      %v532 = vld [vmem:[%s498 + $0x9] sm:$0xff]
      %v533 = vld [vmem:[%s498 + $0x19] sm:$0xff]
      %v534 = vld [vmem:[%s498 + $0x21] sm:$0xff]
      %v535 = vld [vmem:[%s498 + $0x31] sm:$0xff]
      %v536 = vld [vmem:[%s498 + $0x39] sm:$0xff]
      %v537 = vld [vmem:[%s498 + $0x49] sm:$0xff]
      %v538 = vld [vmem:[%s498 + $0x51] sm:$0xff]
      %v539 = vld [vmem:[%s498 + $0x61] sm:$0xff]
      %v540 = vld [vmem:[%s498 + $0x69] sm:$0xff]
      %v541 = vld [vmem:[%s498 + $0x79] sm:$0xff]
      %v542 = vld [vmem:[%s498 + $0x81] sm:$0xff]
      %v543 = vld [vmem:[%s498 + $0x91] sm:$0xff]
      %v544 = vld [vmem:[%s498 + $0x99] sm:$0xff]
      %v545 = vld [vmem:[%s498 + $0xa9] sm:$0xff]
      %v546 = vld [vmem:[%s498 + $0xb1] sm:$0xff]
      %v547 = vld [vmem:[%s498 + $0xc1] sm:$0xff]
      %v548 = vld [vmem:[%s498 + $0xc9] sm:$0xff]
      %v549 = vld [vmem:[%s498 + $0xd9] sm:$0xff]
      %v550 = vld [vmem:[%s498 + $0xe1] sm:$0xff]
      %v551 = vld [vmem:[%s498 + $0xf1] sm:$0xff]
      %v552 = vld [vmem:[%s498 + $0xf9] sm:$0xff]
      %v553 = vld [vmem:[%s498 + $0x109] sm:$0xff]
      %v554 = vld [vmem:[%s498 + $0x111] sm:$0xff]
      %v555 = vld [vmem:[%s498 + $0x121] sm:$0xff]
      %v556 = vld [vmem:[%s498 + $0x129] sm:$0xff]
      %v557 = vld [vmem:[%s498 + $0x139] sm:$0xff]
      %v558 = vld [vmem:[%s498 + $0x141] sm:$0xff]
      %v559 = vld [vmem:[%s498 + $0x151] sm:$0xff]
      %v560 = vld [vmem:[%s498 + $0x159] sm:$0xff]
      %v561 = vld [vmem:[%s498 + $0x169] sm:$0xff]
      %v562 = vld [vmem:[%s498 + $0x171] sm:$0xff]
      %v563 = vld [vmem:[%s498 + $0x2] sm:$0xff]
      %v564 = vld [vmem:[%s498 + $0xa] sm:$0xff]
      %v565 = vld [vmem:[%s498 + $0x1a] sm:$0xff]
      %v566 = vld [vmem:[%s498 + $0x22] sm:$0xff]
      %v567 = vld [vmem:[%s498 + $0x32] sm:$0xff]
      %v568 = vld [vmem:[%s498 + $0x3a] sm:$0xff]
      %v569 = vld [vmem:[%s498 + $0x4a] sm:$0xff]
      %v570 = vld [vmem:[%s498 + $0x52] sm:$0xff]
      %v571 = vld [vmem:[%s498 + $0x62] sm:$0xff]
      %v572 = vld [vmem:[%s498 + $0x6a] sm:$0xff]
      %v573 = vld [vmem:[%s498 + $0x7a] sm:$0xff]
      %v574 = vld [vmem:[%s498 + $0x82] sm:$0xff]
      %v575 = vld [vmem:[%s498 + $0x92] sm:$0xff]
      %v576 = vld [vmem:[%s498 + $0x9a] sm:$0xff]
      %v577 = vld [vmem:[%s498 + $0xaa] sm:$0xff]
      %v578 = vld [vmem:[%s498 + $0xb2] sm:$0xff]
      %v579 = vld [vmem:[%s498 + $0xc2] sm:$0xff]
      %v580 = vld [vmem:[%s498 + $0xca] sm:$0xff]
      %v581 = vld [vmem:[%s498 + $0xda] sm:$0xff]
      %v582 = vld [vmem:[%s498 + $0xe2] sm:$0xff]
      %v583 = vld [vmem:[%s498 + $0xf2] sm:$0xff]
      %v584 = vld [vmem:[%s498 + $0xfa] sm:$0xff]
      %v585 = vld [vmem:[%s498 + $0x10a] sm:$0xff]
      %v586 = vld [vmem:[%s498 + $0x112] sm:$0xff]
      %v587 = vld [vmem:[%s498 + $0x122] sm:$0xff]
      %v588 = vld [vmem:[%s498 + $0x12a] sm:$0xff]
      %v589 = vld [vmem:[%s498 + $0x13a] sm:$0xff]
      %v590 = vld [vmem:[%s498 + $0x142] sm:$0xff]
      %v591 = vld [vmem:[%s498 + $0x152] sm:$0xff]
      %v592 = vld [vmem:[%s498 + $0x15a] sm:$0xff]
      %v593 = vld [vmem:[%s498 + $0x16a] sm:$0xff]
      %v594 = vld [vmem:[%s498 + $0x172] sm:$0xff]
      %v595 = vpack.c.bf16 %v307, %v306
      %v596 = vpack.c.bf16 %v339, %v338
      %v597 = vpack.c.bf16 %v371, %v370
      %v598 = vpack.c.bf16 %v403, %v402
      %v599 = vpack.c.bf16 %v435, %v434
      %v600 = vpack.c.bf16 %v467, %v466
      %v601 = vpack.c.bf16 %v500, %v499
      %v602 = vpack.c.bf16 %v532, %v531
      %v603 = vpack.c.bf16 %v564, %v563
      %v604 = vpack.c.bf16 %v309, %v308
      %v605 = vpack.c.bf16 %v341, %v340
      %v606 = vpack.c.bf16 %v373, %v372
      %v607 = vpack.c.bf16 %v405, %v404
      %v608 = vpack.c.bf16 %v437, %v436
      %v609 = vpack.c.bf16 %v469, %v468
      %v610 = vpack.c.bf16 %v502, %v501
      %v611 = vpack.c.bf16 %v534, %v533
      %v612 = vpack.c.bf16 %v566, %v565
      %v613 = vpack.c.bf16 %v311, %v310
      %v614 = vpack.c.bf16 %v343, %v342
      %v615 = vpack.c.bf16 %v375, %v374
      %v616 = vpack.c.bf16 %v407, %v406
      %v617 = vpack.c.bf16 %v439, %v438
      %v618 = vpack.c.bf16 %v471, %v470
      %v619 = vpack.c.bf16 %v504, %v503
      %v620 = vpack.c.bf16 %v536, %v535
      %v621 = vpack.c.bf16 %v568, %v567
      %v622 = vpack.c.bf16 %v313, %v312
      %v623 = vpack.c.bf16 %v345, %v344
      %v624 = vpack.c.bf16 %v377, %v376
      %v625 = vpack.c.bf16 %v409, %v408
      %v626 = vpack.c.bf16 %v441, %v440
      %v627 = vpack.c.bf16 %v473, %v472
      %v628 = vpack.c.bf16 %v506, %v505
      %v629 = vpack.c.bf16 %v538, %v537
      %v630 = vpack.c.bf16 %v570, %v569
      %v631 = vpack.c.bf16 %v315, %v314
      %v632 = vpack.c.bf16 %v347, %v346
      %v633 = vpack.c.bf16 %v379, %v378
      %v634 = vpack.c.bf16 %v411, %v410
      %v635 = vpack.c.bf16 %v443, %v442
      %v636 = vpack.c.bf16 %v475, %v474
      %v637 = vpack.c.bf16 %v508, %v507
      %v638 = vpack.c.bf16 %v540, %v539
      %v639 = vpack.c.bf16 %v572, %v571
      %v640 = vpack.c.bf16 %v317, %v316
      %v641 = vpack.c.bf16 %v349, %v348
      %v642 = vpack.c.bf16 %v381, %v380
      %v643 = vpack.c.bf16 %v413, %v412
      %v644 = vpack.c.bf16 %v445, %v444
      %v645 = vpack.c.bf16 %v477, %v476
      %v646 = vpack.c.bf16 %v510, %v509
      %v647 = vpack.c.bf16 %v542, %v541
      %v648 = vpack.c.bf16 %v574, %v573
      %v649 = vpack.c.bf16 %v319, %v318
      %v650 = vpack.c.bf16 %v351, %v350
      %v651 = vpack.c.bf16 %v383, %v382
      %v652 = vpack.c.bf16 %v415, %v414
      %v653 = vpack.c.bf16 %v447, %v446
      %v654 = vpack.c.bf16 %v479, %v478
      %v655 = vpack.c.bf16 %v512, %v511
      %v656 = vpack.c.bf16 %v544, %v543
      %v657 = vpack.c.bf16 %v576, %v575
      %v658 = vpack.c.bf16 %v321, %v320
      %v659 = vpack.c.bf16 %v353, %v352
      %v660 = vpack.c.bf16 %v385, %v384
      %v661 = vpack.c.bf16 %v417, %v416
      %v662 = vpack.c.bf16 %v449, %v448
      %v663 = vpack.c.bf16 %v481, %v480
      %v664 = vpack.c.bf16 %v514, %v513
      %v665 = vpack.c.bf16 %v546, %v545
      %v666 = vpack.c.bf16 %v578, %v577
      %v667 = vpack.c.bf16 %v323, %v322
      %v668 = vpack.c.bf16 %v355, %v354
      %v669 = vpack.c.bf16 %v387, %v386
      %v670 = vpack.c.bf16 %v419, %v418
      %v671 = vpack.c.bf16 %v451, %v450
      %v672 = vpack.c.bf16 %v483, %v482
      %v673 = vpack.c.bf16 %v516, %v515
      %v674 = vpack.c.bf16 %v548, %v547
      %v675 = vpack.c.bf16 %v580, %v579
      %v676 = vpack.c.bf16 %v325, %v324
      %v677 = vpack.c.bf16 %v357, %v356
      %v678 = vpack.c.bf16 %v389, %v388
      %v679 = vpack.c.bf16 %v421, %v420
      %v680 = vpack.c.bf16 %v453, %v452
      %v681 = vpack.c.bf16 %v485, %v484
      %v682 = vpack.c.bf16 %v518, %v517
      %v683 = vpack.c.bf16 %v550, %v549
      %v684 = vpack.c.bf16 %v582, %v581
      %v685 = vpack.c.bf16 %v327, %v326
      %v686 = vpack.c.bf16 %v359, %v358
      %v687 = vpack.c.bf16 %v391, %v390
      %v688 = vpack.c.bf16 %v423, %v422
      %v689 = vpack.c.bf16 %v455, %v454
      %v690 = vpack.c.bf16 %v487, %v486
      %v691 = vpack.c.bf16 %v520, %v519
      %v692 = vpack.c.bf16 %v552, %v551
      %v693 = vpack.c.bf16 %v584, %v583
      %v694 = vpack.c.bf16 %v329, %v328
      %v695 = vpack.c.bf16 %v361, %v360
      %v696 = vpack.c.bf16 %v393, %v392
      %v697 = vpack.c.bf16 %v425, %v424
      %v698 = vpack.c.bf16 %v457, %v456
      %v699 = vpack.c.bf16 %v489, %v488
      %v700 = vpack.c.bf16 %v522, %v521
      %v701 = vpack.c.bf16 %v554, %v553
      %v702 = vpack.c.bf16 %v586, %v585
      %v703 = vpack.c.bf16 %v331, %v330
      %v704 = vpack.c.bf16 %v363, %v362
      %v705 = vpack.c.bf16 %v395, %v394
      %v706 = vpack.c.bf16 %v427, %v426
      %v707 = vpack.c.bf16 %v459, %v458
      %v708 = vpack.c.bf16 %v491, %v490
      %v709 = vpack.c.bf16 %v524, %v523
      %v710 = vpack.c.bf16 %v556, %v555
      %v711 = vpack.c.bf16 %v588, %v587
      %v712 = vpack.c.bf16 %v333, %v332
      %v713 = vpack.c.bf16 %v365, %v364
      %v714 = vpack.c.bf16 %v397, %v396
      %v715 = vpack.c.bf16 %v429, %v428
      %v716 = vpack.c.bf16 %v461, %v460
      %v717 = vpack.c.bf16 %v493, %v492
      %v718 = vpack.c.bf16 %v526, %v525
      %v719 = vpack.c.bf16 %v558, %v557
      %v720 = vpack.c.bf16 %v590, %v589
      %v721 = vpack.c.bf16 %v335, %v334
      %v722 = vpack.c.bf16 %v367, %v366
      %v723 = vpack.c.bf16 %v399, %v398
      %v724 = vpack.c.bf16 %v431, %v430
      %v725 = vpack.c.bf16 %v463, %v462
      %v726 = vpack.c.bf16 %v495, %v494
      %v727 = vpack.c.bf16 %v528, %v527
      %v728 = vpack.c.bf16 %v560, %v559
      %v729 = vpack.c.bf16 %v592, %v591
      %v730 = vpack.c.bf16 %v337, %v336
      %v731 = vpack.c.bf16 %v369, %v368
      %v732 = vpack.c.bf16 %v401, %v400
      %v733 = vpack.c.bf16 %v433, %v432
      %v734 = vpack.c.bf16 %v465, %v464
      %v735 = vpack.c.bf16 %v497, %v496
      %v736 = vpack.c.bf16 %v530, %v529
      %v737 = vpack.c.bf16 %v562, %v561
      %v738 = vpack.c.bf16 %v594, %v593
      %v739 = vld [vmem:[%s1] sm:$0xf]
      %v740 = vld [vmem:[%s1 + $0x4] sm:$0xf]
      %v741 = vld [vmem:[%s1 + $0x8] sm:$0xf]
      %v742 = vld [vmem:[%s1 + $0xc] sm:$0xf]
      %v743 = vld [vmem:[%s1 + $0x10] sm:$0xf]
      %v744 = vld [vmem:[%s1 + $0x14] sm:$0xf]
      %v745 = vld [vmem:[%s1 + $0x18] sm:$0xf]
      %v746 = vld [vmem:[%s1 + $0x1c] sm:$0xf]
      %v747 = vld [vmem:[%s1 + $0x20] sm:$0xf]
      %v748 = vld [vmem:[%s1 + $0x24] sm:$0xf]
      %v749 = vld [vmem:[%s1 + $0x28] sm:$0xf]
      %v750 = vld [vmem:[%s1 + $0x2c] sm:$0xf]
      %v751 = vld [vmem:[%s1 + $0x30] sm:$0xf]
      %v752 = vld [vmem:[%s1 + $0x34] sm:$0xf]
      %v753 = vld [vmem:[%s1 + $0x38] sm:$0xf]
      %v754 = vld [vmem:[%s1 + $0x3c] sm:$0xf]
      %v755 = vld [vmem:[%s1 + $0x40] sm:$0xf]
      %v756 = vld [vmem:[%s1 + $0x44] sm:$0xf]
      %v757 = vld [vmem:[%s1 + $0x48] sm:$0xf]
      %v758 = vld [vmem:[%s1 + $0x4c] sm:$0xf]
      %v759 = vld [vmem:[%s1 + $0x50] sm:$0xf]
      %v760 = vld [vmem:[%s1 + $0x54] sm:$0xf]
      %v761 = vld [vmem:[%s1 + $0x58] sm:$0xf]
      %v762 = vld [vmem:[%s1 + $0x5c] sm:$0xf]
      %v763 = vld [vmem:[%s1 + $0x60] sm:$0xf]
      %v764 = vld [vmem:[%s1 + $0x64] sm:$0xf]
      %v765 = vld [vmem:[%s1 + $0x68] sm:$0xf]
      %v766 = vld [vmem:[%s1 + $0x6c] sm:$0xf]
      %v767 = vld [vmem:[%s1 + $0x70] sm:$0xf]
      %v768 = vld [vmem:[%s1 + $0x74] sm:$0xf]
      %v769 = vld [vmem:[%s1 + $0x78] sm:$0xf]
      %v770 = vld [vmem:[%s1 + $0x7c] sm:$0xf]
      %v771 = vld [vmem:[%s1 + $0x80] sm:$0xf]
      %v772 = vld [vmem:[%s1 + $0x84] sm:$0xf]
      %v773 = vld [vmem:[%s1 + $0x88] sm:$0xf]
      %v774 = vld [vmem:[%s1 + $0x8c] sm:$0xf]
      %v775 = vld [vmem:[%s1 + $0x90] sm:$0xf]
      %v776 = vld [vmem:[%s1 + $0x94] sm:$0xf]
      %v777 = vld [vmem:[%s1 + $0x98] sm:$0xf]
      %v778 = vld [vmem:[%s1 + $0x9c] sm:$0xf]
      %v779 = vld [vmem:[%s1 + $0xa0] sm:$0xf]
      %v780 = vld [vmem:[%s1 + $0xa4] sm:$0xf]
      %v781 = vld [vmem:[%s1 + $0xa8] sm:$0xf]
      %v782 = vld [vmem:[%s1 + $0xac] sm:$0xf]
      %v783 = vld [vmem:[%s1 + $0xb0] sm:$0xf]
      %v784 = vld [vmem:[%s1 + $0xb4] sm:$0xf]
      %v785 = vld [vmem:[%s1 + $0xb8] sm:$0xf]
      %v786 = vld [vmem:[%s1 + $0xbc] sm:$0xf]
      %v787 = vld [vmem:[%s1 + $0xc0] sm:$0xf]
      %v788 = vld [vmem:[%s1 + $0xc4] sm:$0xf]
      %v789 = vld [vmem:[%s1 + $0xc8] sm:$0xf]
      %v790 = vld [vmem:[%s1 + $0xcc] sm:$0xf]
      %v791 = vld [vmem:[%s1 + $0xd0] sm:$0xf]
      %v792 = vld [vmem:[%s1 + $0xd4] sm:$0xf]
      %v793 = vld [vmem:[%s1 + $0xd8] sm:$0xf]
      %v794 = vld [vmem:[%s1 + $0xdc] sm:$0xf]
      %v795 = vld [vmem:[%s1 + $0xe0] sm:$0xf]
      %v796 = vld [vmem:[%s1 + $0xe4] sm:$0xf]
      %v797 = vld [vmem:[%s1 + $0xe8] sm:$0xf]
      %v798 = vld [vmem:[%s1 + $0xec] sm:$0xf]
      %v799 = vld [vmem:[%s1 + $0xf0] sm:$0xf]
      %v800 = vld [vmem:[%s1 + $0xf4] sm:$0xf]
      %v801 = vld [vmem:[%s1 + $0xf8] sm:$0xf]
      %v802 = vld [vmem:[%s1 + $0xfc] sm:$0xf]
      %v803 = vld [vmem:[%s1 + $0x100] sm:$0xf]
      %v804 = vld [vmem:[%s1 + $0x104] sm:$0xf]
      %v805 = vld [vmem:[%s1 + $0x108] sm:$0xf]
      %v806 = vld [vmem:[%s1 + $0x10c] sm:$0xf]
      %v807 = vld [vmem:[%s1 + $0x110] sm:$0xf]
      %v808 = vld [vmem:[%s1 + $0x114] sm:$0xf]
      %v809 = vld [vmem:[%s1 + $0x118] sm:$0xf]
      %v810 = vld [vmem:[%s1 + $0x11c] sm:$0xf]
      %v811 = vld [vmem:[%s1 + $0x120] sm:$0xf]
      %v812 = vld [vmem:[%s1 + $0x124] sm:$0xf]
      %v813 = vld [vmem:[%s1 + $0x128] sm:$0xf]
      %v814 = vld [vmem:[%s1 + $0x12c] sm:$0xf]
      %v815 = vld [vmem:[%s1 + $0x130] sm:$0xf]
      %v816 = vld [vmem:[%s1 + $0x134] sm:$0xf]
      %v817 = vld [vmem:[%s1 + $0x138] sm:$0xf]
      %v818 = vld [vmem:[%s1 + $0x13c] sm:$0xf]
      %v819 = vld [vmem:[%s1 + $0x140] sm:$0xf]
      %v820 = vld [vmem:[%s1 + $0x144] sm:$0xf]
      %v821 = vld [vmem:[%s1 + $0x148] sm:$0xf]
      %v822 = vld [vmem:[%s1 + $0x14c] sm:$0xf]
      %v823 = vld [vmem:[%s1 + $0x150] sm:$0xf]
      %v824 = vld [vmem:[%s1 + $0x154] sm:$0xf]
      %v825 = vld [vmem:[%s1 + $0x158] sm:$0xf]
      %v826 = vld [vmem:[%s1 + $0x15c] sm:$0xf]
      %v827 = vld [vmem:[%s1 + $0x160] sm:$0xf]
      %v828 = vld [vmem:[%s1 + $0x164] sm:$0xf]
      %v829 = vld [vmem:[%s1 + $0x168] sm:$0xf]
      %v830 = vld [vmem:[%s1 + $0x16c] sm:$0xf]
      %v831 = vld [vmem:[%s1 + $0x170] sm:$0xf]
      %v832 = vld [vmem:[%s1 + $0x174] sm:$0xf]
      %v833 = vld [vmem:[%s1 + $0x178] sm:$0xf]
      %v834 = vld [vmem:[%s1 + $0x17c] sm:$0xf]
      %v835 = vld [vmem:[%s1 + $0x180] sm:$0xf]
      %v836 = vld [vmem:[%s1 + $0x184] sm:$0xf]
      %v837 = vld [vmem:[%s1 + $0x188] sm:$0xf]
      %v838 = vld [vmem:[%s1 + $0x18c] sm:$0xf]
      %v839 = vld [vmem:[%s1 + $0x190] sm:$0xf]
      %v840 = vld [vmem:[%s1 + $0x194] sm:$0xf]
      %v841 = vld [vmem:[%s1 + $0x198] sm:$0xf]
      %v842 = vld [vmem:[%s1 + $0x19c] sm:$0xf]
      %v843 = vld [vmem:[%s1 + $0x1a0] sm:$0xf]
      %v844 = vld [vmem:[%s1 + $0x1a4] sm:$0xf]
      %v845 = vld [vmem:[%s1 + $0x1a8] sm:$0xf]
      %v846 = vld [vmem:[%s1 + $0x1ac] sm:$0xf]
      %v847 = vld [vmem:[%s1 + $0x1b0] sm:$0xf]
      %v848 = vld [vmem:[%s1 + $0x1b4] sm:$0xf]
      %v849 = vld [vmem:[%s1 + $0x1b8] sm:$0xf]
      %v850 = vld [vmem:[%s1 + $0x1bc] sm:$0xf]
      %v851 = vld [vmem:[%s1 + $0x1c0] sm:$0xf]
      %v852 = vld [vmem:[%s1 + $0x1c4] sm:$0xf]
      %v853 = vld [vmem:[%s1 + $0x1c8] sm:$0xf]
      %v854 = vld [vmem:[%s1 + $0x1cc] sm:$0xf]
      %v855 = vld [vmem:[%s1 + $0x1d0] sm:$0xf]
      %v856 = vld [vmem:[%s1 + $0x1d4] sm:$0xf]
      %v857 = vld [vmem:[%s1 + $0x1d8] sm:$0xf]
      %v858 = vld [vmem:[%s1 + $0x1dc] sm:$0xf]
      %v859 = vld [vmem:[%s1 + $0x1e0] sm:$0xf]
      %v860 = vld [vmem:[%s1 + $0x1e4] sm:$0xf]
      %v861 = vld [vmem:[%s1 + $0x1e8] sm:$0xf]
      %v862 = vld [vmem:[%s1 + $0x1ec] sm:$0xf]
      %v863 = vld [vmem:[%s1 + $0x1f0] sm:$0xf]
      %v864 = vld [vmem:[%s1 + $0x1f4] sm:$0xf]
      %v865 = vld [vmem:[%s1 + $0x1f8] sm:$0xf]
      %v866 = vld [vmem:[%s1 + $0x1fc] sm:$0xf]
      %v867 = vld [vmem:[%s1 + $0x200] sm:$0xf]
      %v868 = vld [vmem:[%s1 + $0x204] sm:$0xf]
      %v869 = vld [vmem:[%s1 + $0x208] sm:$0xf]
      %v870 = vld [vmem:[%s1 + $0x20c] sm:$0xf]
      %v871 = vld [vmem:[%s1 + $0x210] sm:$0xf]
      %v872 = vld [vmem:[%s1 + $0x214] sm:$0xf]
      %v873 = vld [vmem:[%s1 + $0x218] sm:$0xf]
      %v874 = vld [vmem:[%s1 + $0x21c] sm:$0xf]
      %v875 = vld [vmem:[%s1 + $0x220] sm:$0xf]
      %v876 = vld [vmem:[%s1 + $0x224] sm:$0xf]
      %v877 = vld [vmem:[%s1 + $0x228] sm:$0xf]
      %v878 = vld [vmem:[%s1 + $0x22c] sm:$0xf]
      %v879 = vld [vmem:[%s1 + $0x230] sm:$0xf]
      %v880 = vld [vmem:[%s1 + $0x234] sm:$0xf]
      %v881 = vld [vmem:[%s1 + $0x238] sm:$0xf]
      %v882 = vld [vmem:[%s1 + $0x23c] sm:$0xf]
      %v883 = vld [vmem:[%s2] sm:$0x1]
      %v885 = vlaneseq
      %v886 = vshrl.u32 %v885, 7
      %v887 = vsub.s32 0, %v886
      %v888 = vrot.slane %v883, %v887
      %v1034 = vunpack.c.l.b16 %v739
      %v1035 = vunpack.c.l.b16 %v740
      %v1036 = vunpack.c.l.b16 %v741
      %v1037 = vunpack.c.l.b16 %v742
      %v1038 = vunpack.c.l.b16 %v743
      %v1039 = vunpack.c.l.b16 %v744
      %v1040 = vunpack.c.l.b16 %v745
      %v1041 = vunpack.c.l.b16 %v746
      %v1042 = vunpack.c.l.b16 %v747
      %v1043 = vunpack.c.l.b16 %v748
      %v1044 = vunpack.c.l.b16 %v749
      %v1045 = vunpack.c.l.b16 %v750
      %v1046 = vunpack.c.l.b16 %v751
      %v1047 = vunpack.c.l.b16 %v752
      %v1048 = vunpack.c.l.b16 %v753
      %v1049 = vunpack.c.l.b16 %v754
      %v1050 = vunpack.c.l.b16 %v755
      %v1051 = vunpack.c.l.b16 %v756
      %v1052 = vunpack.c.l.b16 %v757
      %v1053 = vunpack.c.l.b16 %v758
      %v1054 = vunpack.c.l.b16 %v759
      %v1055 = vunpack.c.l.b16 %v760
      %v1056 = vunpack.c.l.b16 %v761
      %v1057 = vunpack.c.l.b16 %v762
      %v1058 = vunpack.c.l.b16 %v763
      %v1059 = vunpack.c.l.b16 %v764
      %v1060 = vunpack.c.l.b16 %v765
      %v1061 = vunpack.c.l.b16 %v766
      %v1062 = vunpack.c.l.b16 %v767
      %v1063 = vunpack.c.l.b16 %v768
      %v1064 = vunpack.c.l.b16 %v769
      %v1065 = vunpack.c.l.b16 %v770
      %v1066 = vunpack.c.l.b16 %v771
      %v1067 = vunpack.c.l.b16 %v772
      %v1068 = vunpack.c.l.b16 %v773
      %v1069 = vunpack.c.l.b16 %v774
      %v1070 = vunpack.c.l.b16 %v775
      %v1071 = vunpack.c.l.b16 %v776
      %v1072 = vunpack.c.l.b16 %v777
      %v1073 = vunpack.c.l.b16 %v778
      %v1074 = vunpack.c.l.b16 %v779
      %v1075 = vunpack.c.l.b16 %v780
      %v1076 = vunpack.c.l.b16 %v781
      %v1077 = vunpack.c.l.b16 %v782
      %v1078 = vunpack.c.l.b16 %v783
      %v1079 = vunpack.c.l.b16 %v784
      %v1080 = vunpack.c.l.b16 %v785
      %v1081 = vunpack.c.l.b16 %v786
      %v1082 = vunpack.c.l.b16 %v787
      %v1083 = vunpack.c.l.b16 %v788
      %v1084 = vunpack.c.l.b16 %v789
      %v1085 = vunpack.c.l.b16 %v790
      %v1086 = vunpack.c.l.b16 %v791
      %v1087 = vunpack.c.l.b16 %v792
      %v1088 = vunpack.c.l.b16 %v793
      %v1089 = vunpack.c.l.b16 %v794
      %v1090 = vunpack.c.l.b16 %v795
      %v1091 = vunpack.c.l.b16 %v796
      %v1092 = vunpack.c.l.b16 %v797
      %v1093 = vunpack.c.l.b16 %v798
      %v1094 = vunpack.c.l.b16 %v799
      %v1095 = vunpack.c.l.b16 %v800
      %v1096 = vunpack.c.l.b16 %v801
      %v1097 = vunpack.c.l.b16 %v802
      %v1098 = vunpack.c.l.b16 %v803
      %v1099 = vunpack.c.l.b16 %v804
      %v1100 = vunpack.c.l.b16 %v805
      %v1101 = vunpack.c.l.b16 %v806
      %v1102 = vunpack.c.l.b16 %v807
      %v1103 = vunpack.c.l.b16 %v808
      %v1104 = vunpack.c.l.b16 %v809
      %v1105 = vunpack.c.l.b16 %v810
      %v1106 = vunpack.c.l.b16 %v811
      %v1107 = vunpack.c.l.b16 %v812
      %v1108 = vunpack.c.l.b16 %v813
      %v1109 = vunpack.c.l.b16 %v814
      %v1110 = vunpack.c.l.b16 %v815
      %v1111 = vunpack.c.l.b16 %v816
      %v1112 = vunpack.c.l.b16 %v817
      %v1113 = vunpack.c.l.b16 %v818
      %v1114 = vunpack.c.l.b16 %v819
      %v1115 = vunpack.c.l.b16 %v820
      %v1116 = vunpack.c.l.b16 %v821
      %v1117 = vunpack.c.l.b16 %v822
      %v1118 = vunpack.c.l.b16 %v823
      %v1119 = vunpack.c.l.b16 %v824
      %v1120 = vunpack.c.l.b16 %v825
      %v1121 = vunpack.c.l.b16 %v826
      %v1122 = vunpack.c.l.b16 %v827
      %v1123 = vunpack.c.l.b16 %v828
      %v1124 = vunpack.c.l.b16 %v829
      %v1125 = vunpack.c.l.b16 %v830
      %v1126 = vunpack.c.l.b16 %v831
      %v1127 = vunpack.c.l.b16 %v832
      %v1128 = vunpack.c.l.b16 %v833
      %v1129 = vunpack.c.l.b16 %v834
      %v1130 = vunpack.c.l.b16 %v835
      %v1131 = vunpack.c.l.b16 %v836
      %v1132 = vunpack.c.l.b16 %v837
      %v1133 = vunpack.c.l.b16 %v838
      %v1134 = vunpack.c.l.b16 %v839
      %v1135 = vunpack.c.l.b16 %v840
      %v1136 = vunpack.c.l.b16 %v841
      %v1137 = vunpack.c.l.b16 %v842
      %v1138 = vunpack.c.l.b16 %v843
      %v1139 = vunpack.c.l.b16 %v844
      %v1140 = vunpack.c.l.b16 %v845
      %v1141 = vunpack.c.l.b16 %v846
      %v1142 = vunpack.c.l.b16 %v847
      %v1143 = vunpack.c.l.b16 %v848
      %v1144 = vunpack.c.l.b16 %v849
      %v1145 = vunpack.c.l.b16 %v850
      %v1146 = vunpack.c.l.b16 %v851
      %v1147 = vunpack.c.l.b16 %v852
      %v1148 = vunpack.c.l.b16 %v853
      %v1149 = vunpack.c.l.b16 %v854
      %v1150 = vunpack.c.l.b16 %v855
      %v1151 = vunpack.c.l.b16 %v856
      %v1152 = vunpack.c.l.b16 %v857
      %v1153 = vunpack.c.l.b16 %v858
      %v1154 = vunpack.c.l.b16 %v859
      %v1155 = vunpack.c.l.b16 %v860
      %v1156 = vunpack.c.l.b16 %v861
      %v1157 = vunpack.c.l.b16 %v862
      %v1158 = vunpack.c.l.b16 %v863
      %v1159 = vunpack.c.l.b16 %v864
      %v1160 = vunpack.c.l.b16 %v865
      %v1161 = vunpack.c.l.b16 %v866
      %v1162 = vunpack.c.l.b16 %v867
      %v1163 = vunpack.c.l.b16 %v868
      %v1164 = vunpack.c.l.b16 %v869
      %v1165 = vunpack.c.l.b16 %v870
      %v1166 = vunpack.c.l.b16 %v871
      %v1167 = vunpack.c.l.b16 %v872
      %v1168 = vunpack.c.l.b16 %v873
      %v1169 = vunpack.c.l.b16 %v874
      %v1170 = vunpack.c.l.b16 %v875
      %v1171 = vunpack.c.l.b16 %v876
      %v1172 = vunpack.c.l.b16 %v877
      %v1173 = vunpack.c.l.b16 %v878
      %v1174 = vunpack.c.l.b16 %v879
      %v1175 = vunpack.c.l.b16 %v880
      %v1176 = vunpack.c.l.b16 %v881
      %v1177 = vunpack.c.l.b16 %v882
      %v1178 = vpack.c.b16 %v1035, %v1034
      %v1179 = vpack.c.b16 %v1037, %v1036
      %v1180 = vpack.c.b16 %v1039, %v1038
      %v1181 = vpack.c.b16 %v1041, %v1040
      %v1182 = vpack.c.b16 %v1043, %v1042
      %v1183 = vpack.c.b16 %v1045, %v1044
      %v1184 = vpack.c.b16 %v1047, %v1046
      %v1185 = vpack.c.b16 %v1049, %v1048
      %v1186 = vpack.c.b16 %v1051, %v1050
      %v1187 = vpack.c.b16 %v1053, %v1052
      %v1188 = vpack.c.b16 %v1055, %v1054
      %v1189 = vpack.c.b16 %v1057, %v1056
      %v1190 = vpack.c.b16 %v1059, %v1058
      %v1191 = vpack.c.b16 %v1061, %v1060
      %v1192 = vpack.c.b16 %v1063, %v1062
      %v1193 = vpack.c.b16 %v1065, %v1064
      %v1194 = vpack.c.b16 %v1067, %v1066
      %v1195 = vpack.c.b16 %v1069, %v1068
      %v1196 = vpack.c.b16 %v1071, %v1070
      %v1197 = vpack.c.b16 %v1073, %v1072
      %v1198 = vpack.c.b16 %v1075, %v1074
      %v1199 = vpack.c.b16 %v1077, %v1076
      %v1200 = vpack.c.b16 %v1079, %v1078
      %v1201 = vpack.c.b16 %v1081, %v1080
      %v1202 = vpack.c.b16 %v1083, %v1082
      %v1203 = vpack.c.b16 %v1085, %v1084
      %v1204 = vpack.c.b16 %v1087, %v1086
      %v1205 = vpack.c.b16 %v1089, %v1088
      %v1206 = vpack.c.b16 %v1091, %v1090
      %v1207 = vpack.c.b16 %v1093, %v1092
      %v1208 = vpack.c.b16 %v1095, %v1094
      %v1209 = vpack.c.b16 %v1097, %v1096
      %v1210 = vpack.c.b16 %v1099, %v1098
      %v1211 = vpack.c.b16 %v1101, %v1100
      %v1212 = vpack.c.b16 %v1103, %v1102
      %v1213 = vpack.c.b16 %v1105, %v1104
      %v1214 = vpack.c.b16 %v1107, %v1106
      %v1215 = vpack.c.b16 %v1109, %v1108
      %v1216 = vpack.c.b16 %v1111, %v1110
      %v1217 = vpack.c.b16 %v1113, %v1112
      %v1218 = vpack.c.b16 %v1115, %v1114
      %v1219 = vpack.c.b16 %v1117, %v1116
      %v1220 = vpack.c.b16 %v1119, %v1118
      %v1221 = vpack.c.b16 %v1121, %v1120
      %v1222 = vpack.c.b16 %v1123, %v1122
      %v1223 = vpack.c.b16 %v1125, %v1124
      %v1224 = vpack.c.b16 %v1127, %v1126
      %v1225 = vpack.c.b16 %v1129, %v1128
      %v1226 = vpack.c.b16 %v1131, %v1130
      %v1227 = vpack.c.b16 %v1133, %v1132
      %v1228 = vpack.c.b16 %v1135, %v1134
      %v1229 = vpack.c.b16 %v1137, %v1136
      %v1230 = vpack.c.b16 %v1139, %v1138
      %v1231 = vpack.c.b16 %v1141, %v1140
      %v1232 = vpack.c.b16 %v1143, %v1142
      %v1233 = vpack.c.b16 %v1145, %v1144
      %v1234 = vpack.c.b16 %v1147, %v1146
      %v1235 = vpack.c.b16 %v1149, %v1148
      %v1236 = vpack.c.b16 %v1151, %v1150
      %v1237 = vpack.c.b16 %v1153, %v1152
      %v1238 = vpack.c.b16 %v1155, %v1154
      %v1239 = vpack.c.b16 %v1157, %v1156
      %v1240 = vpack.c.b16 %v1159, %v1158
      %v1241 = vpack.c.b16 %v1161, %v1160
      %v1242 = vpack.c.b16 %v1163, %v1162
      %v1243 = vpack.c.b16 %v1165, %v1164
      %v1244 = vpack.c.b16 %v1167, %v1166
      %v1245 = vpack.c.b16 %v1169, %v1168
      %v1246 = vpack.c.b16 %v1171, %v1170
      %v1247 = vpack.c.b16 %v1173, %v1172
      %v1248 = vpack.c.b16 %v1175, %v1174
      %v1249 = vpack.c.b16 %v1177, %v1176
      %1322 = vmatprep.subr.bf16.mxu0 0
      %1323 = vmatpush1.bf16.msra.mxu0 %v1185
      %1324 = vmatprep.subr.bf16.mxu0 0
      %1325 = vmatpush1.bf16.msra.mxu0 %v1184
      %1326 = vmatprep.subr.bf16.mxu0 0
      %1327 = vmatpush1.bf16.msra.mxu0 %v1183
      %1328 = vmatprep.subr.bf16.mxu0 0
      %1329 = vmatpush1.bf16.msra.mxu0 %v1182
      %1330 = vmatprep.subr.bf16.mxu0 0
      %1331 = vmatpush1.bf16.msra.mxu0 %v1181
      %1332 = vmatprep.subr.bf16.mxu0 0
      %1333 = vmatpush1.bf16.msra.mxu0 %v1180
      %1334 = vmatprep.subr.bf16.mxu0 0
      %1335 = vmatpush1.bf16.msra.mxu0 %v1179
      %1336 = vmatprep.subr.bf16.mxu0 0
      %1337 = vmatpush1.bf16.msra.mxu0 %v1178
      %1338 = vmatprep.subr.bf16.mxu0 0
      %1339 = vmatpush2.bf16.msra.mxu0 %v1193
      %1340 = vmatprep.subr.bf16.mxu0 0
      %1341 = vmatpush2.bf16.msra.mxu0 %v1192
      %1342 = vmatprep.subr.bf16.mxu0 0
      %1343 = vmatpush2.bf16.msra.mxu0 %v1191
      %1344 = vmatprep.subr.bf16.mxu0 0
      %1345 = vmatpush2.bf16.msra.mxu0 %v1190
      %1346 = vmatprep.subr.bf16.mxu0 0
      %1347 = vmatpush2.bf16.msra.mxu0 %v1189
      %1348 = vmatprep.subr.bf16.mxu0 0
      %1349 = vmatpush2.bf16.msra.mxu0 %v1188
      %1350 = vmatprep.subr.bf16.mxu0 0
      %1351 = vmatpush2.bf16.msra.mxu0 %v1187
      %1352 = vmatprep.subr.bf16.mxu0 0
      %1353 = vmatpush2.bf16.msra.mxu0 %v1186
      %1354 = vmatprep.mubr.bf16.mxu0 %v596
      %1355 = vmatmul.mubr.bf16.gmra.mxu0 %v595
      %v1356 = vpop.f32.mrf.mxu0
      %v1357 = vadd.f32 %v888, %v1356
      %v1358 = vpop.f32.mrf.mxu0
      %v1359 = vpop.f32.mrf.mxu0
      %v1360 = vadd.f32 %v888, %v1359
      %v1361 = vpop.f32.mrf.mxu0
      %1362 = vmatprep.mubr.bf16.mxu0 %v605
      %1363 = vmatmul.mubr.bf16.gmra.mxu0 %v604
      %v1364 = vpop.f32.mrf.mxu0
      %v1365 = vadd.f32 %v888, %v1364
      %v1366 = vpop.f32.mrf.mxu0
      %v1367 = vpop.f32.mrf.mxu0
      %v1368 = vadd.f32 %v888, %v1367
      %v1369 = vpop.f32.mrf.mxu0
      %1370 = vmatprep.mubr.bf16.mxu0 %v614
      %1371 = vmatmul.mubr.bf16.gmra.mxu0 %v613
      %v1372 = vpop.f32.mrf.mxu0
      %v1373 = vadd.f32 %v888, %v1372
      %v1374 = vpop.f32.mrf.mxu0
      %v1375 = vpop.f32.mrf.mxu0
      %v1376 = vadd.f32 %v888, %v1375
      %v1377 = vpop.f32.mrf.mxu0
      %1378 = vmatprep.mubr.bf16.mxu0 %v623
      %1379 = vmatmul.mubr.bf16.gmra.mxu0 %v622
      %v1380 = vpop.f32.mrf.mxu0
      %v1381 = vadd.f32 %v888, %v1380
      %v1382 = vpop.f32.mrf.mxu0
      %v1383 = vpop.f32.mrf.mxu0
      %v1384 = vadd.f32 %v888, %v1383
      %v1385 = vpop.f32.mrf.mxu0
      %1386 = vmatprep.mubr.bf16.mxu0 %v632
      %1387 = vmatmul.mubr.bf16.gmra.mxu0 %v631
      %v1388 = vpop.f32.mrf.mxu0
      %v1389 = vadd.f32 %v888, %v1388
      %v1390 = vpop.f32.mrf.mxu0
      %v1391 = vpop.f32.mrf.mxu0
      %v1392 = vadd.f32 %v888, %v1391
      %v1393 = vpop.f32.mrf.mxu0
      %1394 = vmatprep.mubr.bf16.mxu0 %v641
      %1395 = vmatmul.mubr.bf16.gmra.mxu0 %v640
      %v1396 = vpop.f32.mrf.mxu0
      %v1397 = vadd.f32 %v888, %v1396
      %v1398 = vpop.f32.mrf.mxu0
      %v1399 = vpop.f32.mrf.mxu0
      %v1400 = vadd.f32 %v888, %v1399
      %v1401 = vpop.f32.mrf.mxu0
      %1402 = vmatprep.mubr.bf16.mxu0 %v650
      %1403 = vmatmul.mubr.bf16.gmra.mxu0 %v649
      %v1404 = vpop.f32.mrf.mxu0
      %v1405 = vadd.f32 %v888, %v1404
      %v1406 = vpop.f32.mrf.mxu0
      %v1407 = vpop.f32.mrf.mxu0
      %v1408 = vadd.f32 %v888, %v1407
      %v1409 = vpop.f32.mrf.mxu0
      %1410 = vmatprep.mubr.bf16.mxu0 %v659
      %1411 = vmatmul.mubr.bf16.gmra.mxu0 %v658
      %v1412 = vpop.f32.mrf.mxu0
      %v1413 = vadd.f32 %v888, %v1412
      %v1414 = vpop.f32.mrf.mxu0
      %v1415 = vpop.f32.mrf.mxu0
      %v1416 = vadd.f32 %v888, %v1415
      %v1417 = vpop.f32.mrf.mxu0
      %1418 = vmatprep.mubr.bf16.mxu0 %v668
      %1419 = vmatmul.mubr.bf16.gmra.mxu0 %v667
      %v1420 = vpop.f32.mrf.mxu0
      %v1421 = vadd.f32 %v888, %v1420
      %v1422 = vpop.f32.mrf.mxu0
      %v1423 = vpop.f32.mrf.mxu0
      %v1424 = vadd.f32 %v888, %v1423
      %v1425 = vpop.f32.mrf.mxu0
      %1426 = vmatprep.mubr.bf16.mxu0 %v677
      %1427 = vmatmul.mubr.bf16.gmra.mxu0 %v676
      %v1428 = vpop.f32.mrf.mxu0
      %v1429 = vadd.f32 %v888, %v1428
      %v1430 = vpop.f32.mrf.mxu0
      %v1431 = vpop.f32.mrf.mxu0
      %v1432 = vadd.f32 %v888, %v1431
      %v1433 = vpop.f32.mrf.mxu0
      %1434 = vmatprep.mubr.bf16.mxu0 %v686
      %1435 = vmatmul.mubr.bf16.gmra.mxu0 %v685
      %v1436 = vpop.f32.mrf.mxu0
      %v1437 = vadd.f32 %v888, %v1436
      %v1438 = vpop.f32.mrf.mxu0
      %v1439 = vpop.f32.mrf.mxu0
      %v1440 = vadd.f32 %v888, %v1439
      %v1441 = vpop.f32.mrf.mxu0
      %1442 = vmatprep.mubr.bf16.mxu0 %v695
      %1443 = vmatmul.mubr.bf16.gmra.mxu0 %v694
      %v1444 = vpop.f32.mrf.mxu0
      %v1445 = vadd.f32 %v888, %v1444
      %v1446 = vpop.f32.mrf.mxu0
      %v1447 = vpop.f32.mrf.mxu0
      %v1448 = vadd.f32 %v888, %v1447
      %v1449 = vpop.f32.mrf.mxu0
      %1450 = vmatprep.mubr.bf16.mxu0 %v704
      %1451 = vmatmul.mubr.bf16.gmra.mxu0 %v703
      %v1452 = vpop.f32.mrf.mxu0
      %v1453 = vadd.f32 %v888, %v1452
      %v1454 = vpop.f32.mrf.mxu0
      %v1455 = vpop.f32.mrf.mxu0
      %v1456 = vadd.f32 %v888, %v1455
      %v1457 = vpop.f32.mrf.mxu0
      %1458 = vmatprep.mubr.bf16.mxu0 %v713
      %1459 = vmatmul.mubr.bf16.gmra.mxu0 %v712
      %v1460 = vpop.f32.mrf.mxu0
      %v1461 = vadd.f32 %v888, %v1460
      %v1462 = vpop.f32.mrf.mxu0
      %v1463 = vpop.f32.mrf.mxu0
      %v1464 = vadd.f32 %v888, %v1463
      %v1465 = vpop.f32.mrf.mxu0
      %1466 = vmatprep.mubr.bf16.mxu0 %v722
      %1467 = vmatmul.mubr.bf16.gmra.mxu0 %v721
      %v1468 = vpop.f32.mrf.mxu0
      %v1469 = vadd.f32 %v888, %v1468
      %v1470 = vpop.f32.mrf.mxu0
      %v1471 = vpop.f32.mrf.mxu0
      %v1472 = vadd.f32 %v888, %v1471
      %v1473 = vpop.f32.mrf.mxu0
      %1474 = vmatprep.mubr.bf16.mxu0 %v731
      %1475 = vmatmul.mubr.bf16.gmra.mxu0 %v730
      %v1476 = vpop.f32.mrf.mxu0
      %v1477 = vadd.f32 %v888, %v1476
      %v1478 = vpop.f32.mrf.mxu0
      %v1479 = vpop.f32.mrf.mxu0
      %v1480 = vadd.f32 %v888, %v1479
      %v1481 = vpop.f32.mrf.mxu0
      %1482 = vdwg.mxu0
      %1483 = vmatprep.subr.bf16.mxu0 0
      %1484 = vmatpush1.bf16.msra.mxu0 %v1201
      %1485 = vmatprep.subr.bf16.mxu0 0
      %1486 = vmatpush1.bf16.msra.mxu0 %v1200
      %1487 = vmatprep.subr.bf16.mxu0 0
      %1488 = vmatpush1.bf16.msra.mxu0 %v1199
      %1489 = vmatprep.subr.bf16.mxu0 0
      %1490 = vmatpush1.bf16.msra.mxu0 %v1198
      %1491 = vmatprep.subr.bf16.mxu0 0
      %1492 = vmatpush1.bf16.msra.mxu0 %v1197
      %1493 = vmatprep.subr.bf16.mxu0 0
      %1494 = vmatpush1.bf16.msra.mxu0 %v1196
      %1495 = vmatprep.subr.bf16.mxu0 0
      %1496 = vmatpush1.bf16.msra.mxu0 %v1195
      %1497 = vmatprep.subr.bf16.mxu0 0
      %1498 = vmatpush1.bf16.msra.mxu0 %v1194
      %1499 = vmatprep.subr.bf16.mxu0 0
      %1500 = vmatpush2.bf16.msra.mxu0 %v1209
      %1501 = vmatprep.subr.bf16.mxu0 0
      %1502 = vmatpush2.bf16.msra.mxu0 %v1208
      %1503 = vmatprep.subr.bf16.mxu0 0
      %1504 = vmatpush2.bf16.msra.mxu0 %v1207
      %1505 = vmatprep.subr.bf16.mxu0 0
      %1506 = vmatpush2.bf16.msra.mxu0 %v1206
      %1507 = vmatprep.subr.bf16.mxu0 0
      %1508 = vmatpush2.bf16.msra.mxu0 %v1205
      %1509 = vmatprep.subr.bf16.mxu0 0
      %1510 = vmatpush2.bf16.msra.mxu0 %v1204
      %1511 = vmatprep.subr.bf16.mxu0 0
      %1512 = vmatpush2.bf16.msra.mxu0 %v1203
      %1513 = vmatprep.subr.bf16.mxu0 0
      %1514 = vmatpush2.bf16.msra.mxu0 %v1202
      %1515 = vmatprep.mubr.bf16.mxu0 %v598
      %1516 = vmatmul.mubr.bf16.gmra.mxu0 %v597
      %v1517 = vpop.f32.mrf.mxu0
      %v1518 = vadd.f32 %v1357, %v1517
      %v1519 = vpop.f32.mrf.mxu0
      %v1520 = vpop.f32.mrf.mxu0
      %v1521 = vadd.f32 %v1360, %v1520
      %v1522 = vpop.f32.mrf.mxu0
      %1523 = vmatprep.mubr.bf16.mxu0 %v607
      %1524 = vmatmul.mubr.bf16.gmra.mxu0 %v606
      %v1525 = vpop.f32.mrf.mxu0
      %v1526 = vadd.f32 %v1365, %v1525
      %v1527 = vpop.f32.mrf.mxu0
      %v1528 = vpop.f32.mrf.mxu0
      %v1529 = vadd.f32 %v1368, %v1528
      %v1530 = vpop.f32.mrf.mxu0
      %1531 = vmatprep.mubr.bf16.mxu0 %v616
      %1532 = vmatmul.mubr.bf16.gmra.mxu0 %v615
      %v1533 = vpop.f32.mrf.mxu0
      %v1534 = vadd.f32 %v1373, %v1533
      %v1535 = vpop.f32.mrf.mxu0
      %v1536 = vpop.f32.mrf.mxu0
      %v1537 = vadd.f32 %v1376, %v1536
      %v1538 = vpop.f32.mrf.mxu0
      %1539 = vmatprep.mubr.bf16.mxu0 %v625
      %1540 = vmatmul.mubr.bf16.gmra.mxu0 %v624
      %v1541 = vpop.f32.mrf.mxu0
      %v1542 = vadd.f32 %v1381, %v1541
      %v1543 = vpop.f32.mrf.mxu0
      %v1544 = vpop.f32.mrf.mxu0
      %v1545 = vadd.f32 %v1384, %v1544
      %v1546 = vpop.f32.mrf.mxu0
      %1547 = vmatprep.mubr.bf16.mxu0 %v634
      %1548 = vmatmul.mubr.bf16.gmra.mxu0 %v633
      %v1549 = vpop.f32.mrf.mxu0
      %v1550 = vadd.f32 %v1389, %v1549
      %v1551 = vpop.f32.mrf.mxu0
      %v1552 = vpop.f32.mrf.mxu0
      %v1553 = vadd.f32 %v1392, %v1552
      %v1554 = vpop.f32.mrf.mxu0
      %1555 = vmatprep.mubr.bf16.mxu0 %v643
      %1556 = vmatmul.mubr.bf16.gmra.mxu0 %v642
      %v1557 = vpop.f32.mrf.mxu0
      %v1558 = vadd.f32 %v1397, %v1557
      %v1559 = vpop.f32.mrf.mxu0
      %v1560 = vpop.f32.mrf.mxu0
      %v1561 = vadd.f32 %v1400, %v1560
      %v1562 = vpop.f32.mrf.mxu0
      %1563 = vmatprep.mubr.bf16.mxu0 %v652
      %1564 = vmatmul.mubr.bf16.gmra.mxu0 %v651
      %v1565 = vpop.f32.mrf.mxu0
      %v1566 = vadd.f32 %v1405, %v1565
      %v1567 = vpop.f32.mrf.mxu0
      %v1568 = vpop.f32.mrf.mxu0
      %v1569 = vadd.f32 %v1408, %v1568
      %v1570 = vpop.f32.mrf.mxu0
      %1571 = vmatprep.mubr.bf16.mxu0 %v661
      %1572 = vmatmul.mubr.bf16.gmra.mxu0 %v660
      %v1573 = vpop.f32.mrf.mxu0
      %v1574 = vadd.f32 %v1413, %v1573
      %v1575 = vpop.f32.mrf.mxu0
      %v1576 = vpop.f32.mrf.mxu0
      %v1577 = vadd.f32 %v1416, %v1576
      %v1578 = vpop.f32.mrf.mxu0
      %1579 = vmatprep.mubr.bf16.mxu0 %v670
      %1580 = vmatmul.mubr.bf16.gmra.mxu0 %v669
      %v1581 = vpop.f32.mrf.mxu0
      %v1582 = vadd.f32 %v1421, %v1581
      %v1583 = vpop.f32.mrf.mxu0
      %v1584 = vpop.f32.mrf.mxu0
      %v1585 = vadd.f32 %v1424, %v1584
      %v1586 = vpop.f32.mrf.mxu0
      %1587 = vmatprep.mubr.bf16.mxu0 %v679
      %1588 = vmatmul.mubr.bf16.gmra.mxu0 %v678
      %v1589 = vpop.f32.mrf.mxu0
      %v1590 = vadd.f32 %v1429, %v1589
      %v1591 = vpop.f32.mrf.mxu0
      %v1592 = vpop.f32.mrf.mxu0
      %v1593 = vadd.f32 %v1432, %v1592
      %v1594 = vpop.f32.mrf.mxu0
      %1595 = vmatprep.mubr.bf16.mxu0 %v688
      %1596 = vmatmul.mubr.bf16.gmra.mxu0 %v687
      %v1597 = vpop.f32.mrf.mxu0
      %v1598 = vadd.f32 %v1437, %v1597
      %v1599 = vpop.f32.mrf.mxu0
      %v1600 = vpop.f32.mrf.mxu0
      %v1601 = vadd.f32 %v1440, %v1600
      %v1602 = vpop.f32.mrf.mxu0
      %1603 = vmatprep.mubr.bf16.mxu0 %v697
      %1604 = vmatmul.mubr.bf16.gmra.mxu0 %v696
      %v1605 = vpop.f32.mrf.mxu0
      %v1606 = vadd.f32 %v1445, %v1605
      %v1607 = vpop.f32.mrf.mxu0
      %v1608 = vpop.f32.mrf.mxu0
      %v1609 = vadd.f32 %v1448, %v1608
      %v1610 = vpop.f32.mrf.mxu0
      %1611 = vmatprep.mubr.bf16.mxu0 %v706
      %1612 = vmatmul.mubr.bf16.gmra.mxu0 %v705
      %v1613 = vpop.f32.mrf.mxu0
      %v1614 = vadd.f32 %v1453, %v1613
      %v1615 = vpop.f32.mrf.mxu0
      %v1616 = vpop.f32.mrf.mxu0
      %v1617 = vadd.f32 %v1456, %v1616
      %v1618 = vpop.f32.mrf.mxu0
      %1619 = vmatprep.mubr.bf16.mxu0 %v715
      %1620 = vmatmul.mubr.bf16.gmra.mxu0 %v714
      %v1621 = vpop.f32.mrf.mxu0
      %v1622 = vadd.f32 %v1461, %v1621
      %v1623 = vpop.f32.mrf.mxu0
      %v1624 = vpop.f32.mrf.mxu0
      %v1625 = vadd.f32 %v1464, %v1624
      %v1626 = vpop.f32.mrf.mxu0
      %1627 = vmatprep.mubr.bf16.mxu0 %v724
      %1628 = vmatmul.mubr.bf16.gmra.mxu0 %v723
      %v1629 = vpop.f32.mrf.mxu0
      %v1630 = vadd.f32 %v1469, %v1629
      %v1631 = vpop.f32.mrf.mxu0
      %v1632 = vpop.f32.mrf.mxu0
      %v1633 = vadd.f32 %v1472, %v1632
      %v1634 = vpop.f32.mrf.mxu0
      %1635 = vmatprep.mubr.bf16.mxu0 %v733
      %1636 = vmatmul.mubr.bf16.gmra.mxu0 %v732
      %v1637 = vpop.f32.mrf.mxu0
      %v1638 = vadd.f32 %v1477, %v1637
      %v1639 = vpop.f32.mrf.mxu0
      %v1640 = vpop.f32.mrf.mxu0
      %v1641 = vadd.f32 %v1480, %v1640
      %v1642 = vpop.f32.mrf.mxu0
      %1643 = vdwg.mxu0
      %1644 = vmatprep.subr.bf16.mxu0 0
      %1645 = vmatpush1.bf16.msra.mxu0 %v1217
      %1646 = vmatprep.subr.bf16.mxu0 0
      %1647 = vmatpush1.bf16.msra.mxu0 %v1216
      %1648 = vmatprep.subr.bf16.mxu0 0
      %1649 = vmatpush1.bf16.msra.mxu0 %v1215
      %1650 = vmatprep.subr.bf16.mxu0 0
      %1651 = vmatpush1.bf16.msra.mxu0 %v1214
      %1652 = vmatprep.subr.bf16.mxu0 0
      %1653 = vmatpush1.bf16.msra.mxu0 %v1213
      %1654 = vmatprep.subr.bf16.mxu0 0
      %1655 = vmatpush1.bf16.msra.mxu0 %v1212
      %1656 = vmatprep.subr.bf16.mxu0 0
      %1657 = vmatpush1.bf16.msra.mxu0 %v1211
      %1658 = vmatprep.subr.bf16.mxu0 0
      %1659 = vmatpush1.bf16.msra.mxu0 %v1210
      %1660 = vmatprep.subr.bf16.mxu0 0
      %1661 = vmatpush2.bf16.msra.mxu0 %v1225
      %1662 = vmatprep.subr.bf16.mxu0 0
      %1663 = vmatpush2.bf16.msra.mxu0 %v1224
      %1664 = vmatprep.subr.bf16.mxu0 0
      %1665 = vmatpush2.bf16.msra.mxu0 %v1223
      %1666 = vmatprep.subr.bf16.mxu0 0
      %1667 = vmatpush2.bf16.msra.mxu0 %v1222
      %1668 = vmatprep.subr.bf16.mxu0 0
      %1669 = vmatpush2.bf16.msra.mxu0 %v1221
      %1670 = vmatprep.subr.bf16.mxu0 0
      %1671 = vmatpush2.bf16.msra.mxu0 %v1220
      %1672 = vmatprep.subr.bf16.mxu0 0
      %1673 = vmatpush2.bf16.msra.mxu0 %v1219
      %1674 = vmatprep.subr.bf16.mxu0 0
      %1675 = vmatpush2.bf16.msra.mxu0 %v1218
      %1676 = vmatprep.mubr.bf16.mxu0 %v600
      %1677 = vmatmul.mubr.bf16.gmra.mxu0 %v599
      %v1678 = vpop.f32.mrf.mxu0
      %v1679 = vadd.f32 %v1518, %v1678
      %v1680 = vpop.f32.mrf.mxu0
      %v1681 = vpop.f32.mrf.mxu0
      %v1682 = vadd.f32 %v1521, %v1681
      %v1683 = vpop.f32.mrf.mxu0
      %1684 = vmatprep.mubr.bf16.mxu0 %v609
      %1685 = vmatmul.mubr.bf16.gmra.mxu0 %v608
      %v1686 = vpop.f32.mrf.mxu0
      %v1687 = vadd.f32 %v1526, %v1686
      %v1688 = vpop.f32.mrf.mxu0
      %v1689 = vpop.f32.mrf.mxu0
      %v1690 = vadd.f32 %v1529, %v1689
      %v1691 = vpop.f32.mrf.mxu0
      %1692 = vmatprep.mubr.bf16.mxu0 %v618
      %1693 = vmatmul.mubr.bf16.gmra.mxu0 %v617
      %v1694 = vpop.f32.mrf.mxu0
      %v1695 = vadd.f32 %v1534, %v1694
      %v1696 = vpop.f32.mrf.mxu0
      %v1697 = vpop.f32.mrf.mxu0
      %v1698 = vadd.f32 %v1537, %v1697
      %v1699 = vpop.f32.mrf.mxu0
      %1700 = vmatprep.mubr.bf16.mxu0 %v627
      %1701 = vmatmul.mubr.bf16.gmra.mxu0 %v626
      %v1702 = vpop.f32.mrf.mxu0
      %v1703 = vadd.f32 %v1542, %v1702
      %v1704 = vpop.f32.mrf.mxu0
      %v1705 = vpop.f32.mrf.mxu0
      %v1706 = vadd.f32 %v1545, %v1705
      %v1707 = vpop.f32.mrf.mxu0
      %1708 = vmatprep.mubr.bf16.mxu0 %v636
      %1709 = vmatmul.mubr.bf16.gmra.mxu0 %v635
      %v1710 = vpop.f32.mrf.mxu0
      %v1711 = vadd.f32 %v1550, %v1710
      %v1712 = vpop.f32.mrf.mxu0
      %v1713 = vpop.f32.mrf.mxu0
      %v1714 = vadd.f32 %v1553, %v1713
      %v1715 = vpop.f32.mrf.mxu0
      %1716 = vmatprep.mubr.bf16.mxu0 %v645
      %1717 = vmatmul.mubr.bf16.gmra.mxu0 %v644
      %v1718 = vpop.f32.mrf.mxu0
      %v1719 = vadd.f32 %v1558, %v1718
      %v1720 = vpop.f32.mrf.mxu0
      %v1721 = vpop.f32.mrf.mxu0
      %v1722 = vadd.f32 %v1561, %v1721
      %v1723 = vpop.f32.mrf.mxu0
      %1724 = vmatprep.mubr.bf16.mxu0 %v654
      %1725 = vmatmul.mubr.bf16.gmra.mxu0 %v653
      %v1726 = vpop.f32.mrf.mxu0
      %v1727 = vadd.f32 %v1566, %v1726
      %v1728 = vpop.f32.mrf.mxu0
      %v1729 = vpop.f32.mrf.mxu0
      %v1730 = vadd.f32 %v1569, %v1729
      %v1731 = vpop.f32.mrf.mxu0
      %1732 = vmatprep.mubr.bf16.mxu0 %v663
      %1733 = vmatmul.mubr.bf16.gmra.mxu0 %v662
      %v1734 = vpop.f32.mrf.mxu0
      %v1735 = vadd.f32 %v1574, %v1734
      %v1736 = vpop.f32.mrf.mxu0
      %v1737 = vpop.f32.mrf.mxu0
      %v1738 = vadd.f32 %v1577, %v1737
      %v1739 = vpop.f32.mrf.mxu0
      %1740 = vmatprep.mubr.bf16.mxu0 %v672
      %1741 = vmatmul.mubr.bf16.gmra.mxu0 %v671
      %v1742 = vpop.f32.mrf.mxu0
      %v1743 = vadd.f32 %v1582, %v1742
      %v1744 = vpop.f32.mrf.mxu0
      %v1745 = vpop.f32.mrf.mxu0
      %v1746 = vadd.f32 %v1585, %v1745
      %v1747 = vpop.f32.mrf.mxu0
      %1748 = vmatprep.mubr.bf16.mxu0 %v681
      %1749 = vmatmul.mubr.bf16.gmra.mxu0 %v680
      %v1750 = vpop.f32.mrf.mxu0
      %v1751 = vadd.f32 %v1590, %v1750
      %v1752 = vpop.f32.mrf.mxu0
      %v1753 = vpop.f32.mrf.mxu0
      %v1754 = vadd.f32 %v1593, %v1753
      %v1755 = vpop.f32.mrf.mxu0
      %1756 = vmatprep.mubr.bf16.mxu0 %v690
      %1757 = vmatmul.mubr.bf16.gmra.mxu0 %v689
      %v1758 = vpop.f32.mrf.mxu0
      %v1759 = vadd.f32 %v1598, %v1758
      %v1760 = vpop.f32.mrf.mxu0
      %v1761 = vpop.f32.mrf.mxu0
      %v1762 = vadd.f32 %v1601, %v1761
      %v1763 = vpop.f32.mrf.mxu0
      %1764 = vmatprep.mubr.bf16.mxu0 %v699
      %1765 = vmatmul.mubr.bf16.gmra.mxu0 %v698
      %v1766 = vpop.f32.mrf.mxu0
      %v1767 = vadd.f32 %v1606, %v1766
      %v1768 = vpop.f32.mrf.mxu0
      %v1769 = vpop.f32.mrf.mxu0
      %v1770 = vadd.f32 %v1609, %v1769
      %v1771 = vpop.f32.mrf.mxu0
      %1772 = vmatprep.mubr.bf16.mxu0 %v708
      %1773 = vmatmul.mubr.bf16.gmra.mxu0 %v707
      %v1774 = vpop.f32.mrf.mxu0
      %v1775 = vadd.f32 %v1614, %v1774
      %v1776 = vpop.f32.mrf.mxu0
      %v1777 = vpop.f32.mrf.mxu0
      %v1778 = vadd.f32 %v1617, %v1777
      %v1779 = vpop.f32.mrf.mxu0
      %1780 = vmatprep.mubr.bf16.mxu0 %v717
      %1781 = vmatmul.mubr.bf16.gmra.mxu0 %v716
      %v1782 = vpop.f32.mrf.mxu0
      %v1783 = vadd.f32 %v1622, %v1782
      %v1784 = vpop.f32.mrf.mxu0
      %v1785 = vpop.f32.mrf.mxu0
      %v1786 = vadd.f32 %v1625, %v1785
      %v1787 = vpop.f32.mrf.mxu0
      %1788 = vmatprep.mubr.bf16.mxu0 %v726
      %1789 = vmatmul.mubr.bf16.gmra.mxu0 %v725
      %v1790 = vpop.f32.mrf.mxu0
      %v1791 = vadd.f32 %v1630, %v1790
      %v1792 = vpop.f32.mrf.mxu0
      %v1793 = vpop.f32.mrf.mxu0
      %v1794 = vadd.f32 %v1633, %v1793
      %v1795 = vpop.f32.mrf.mxu0
      %1796 = vmatprep.mubr.bf16.mxu0 %v735
      %1797 = vmatmul.mubr.bf16.gmra.mxu0 %v734
      %v1798 = vpop.f32.mrf.mxu0
      %v1799 = vadd.f32 %v1638, %v1798
      %v1800 = vpop.f32.mrf.mxu0
      %v1801 = vpop.f32.mrf.mxu0
      %v1802 = vadd.f32 %v1641, %v1801
      %v1803 = vpop.f32.mrf.mxu0
      %1804 = vdwg.mxu0
      %1805 = vmatprep.subr.bf16.mxu0 0
      %1806 = vmatpush1.bf16.msra.mxu0 %v1233
      %1807 = vmatprep.subr.bf16.mxu0 0
      %1808 = vmatpush1.bf16.msra.mxu0 %v1232
      %1809 = vmatprep.subr.bf16.mxu0 0
      %1810 = vmatpush1.bf16.msra.mxu0 %v1231
      %1811 = vmatprep.subr.bf16.mxu0 0
      %1812 = vmatpush1.bf16.msra.mxu0 %v1230
      %1813 = vmatprep.subr.bf16.mxu0 0
      %1814 = vmatpush1.bf16.msra.mxu0 %v1229
      %1815 = vmatprep.subr.bf16.mxu0 0
      %1816 = vmatpush1.bf16.msra.mxu0 %v1228
      %1817 = vmatprep.subr.bf16.mxu0 0
      %1818 = vmatpush1.bf16.msra.mxu0 %v1227
      %1819 = vmatprep.subr.bf16.mxu0 0
      %1820 = vmatpush1.bf16.msra.mxu0 %v1226
      %1821 = vmatprep.subr.bf16.mxu0 0
      %1822 = vmatpush2.bf16.msra.mxu0 %v1241
      %1823 = vmatprep.subr.bf16.mxu0 0
      %1824 = vmatpush2.bf16.msra.mxu0 %v1240
      %1825 = vmatprep.subr.bf16.mxu0 0
      %1826 = vmatpush2.bf16.msra.mxu0 %v1239
      %1827 = vmatprep.subr.bf16.mxu0 0
      %1828 = vmatpush2.bf16.msra.mxu0 %v1238
      %1829 = vmatprep.subr.bf16.mxu0 0
      %1830 = vmatpush2.bf16.msra.mxu0 %v1237
      %1831 = vmatprep.subr.bf16.mxu0 0
      %1832 = vmatpush2.bf16.msra.mxu0 %v1236
      %1833 = vmatprep.subr.bf16.mxu0 0
      %1834 = vmatpush2.bf16.msra.mxu0 %v1235
      %1835 = vmatprep.subr.bf16.mxu0 0
      %1836 = vmatpush2.bf16.msra.mxu0 %v1234
      %1837 = vmatprep.mubr.bf16.mxu0 %v602
      %1838 = vmatmul.mubr.bf16.gmra.mxu0 %v601
      %v1839 = vpop.f32.mrf.mxu0
      %v1840 = vadd.f32 %v1679, %v1839
      %v1841 = vpop.f32.mrf.mxu0
      %v1842 = vpop.f32.mrf.mxu0
      %v1843 = vadd.f32 %v1682, %v1842
      %v1844 = vpop.f32.mrf.mxu0
      %1845 = vmatprep.mubr.bf16.mxu0 %v611
      %1846 = vmatmul.mubr.bf16.gmra.mxu0 %v610
      %v1847 = vpop.f32.mrf.mxu0
      %v1848 = vadd.f32 %v1687, %v1847
      %v1849 = vpop.f32.mrf.mxu0
      %v1850 = vpop.f32.mrf.mxu0
      %v1851 = vadd.f32 %v1690, %v1850
      %v1852 = vpop.f32.mrf.mxu0
      %1853 = vmatprep.mubr.bf16.mxu0 %v620
      %1854 = vmatmul.mubr.bf16.gmra.mxu0 %v619
      %v1855 = vpop.f32.mrf.mxu0
      %v1856 = vadd.f32 %v1695, %v1855
      %v1857 = vpop.f32.mrf.mxu0
      %v1858 = vpop.f32.mrf.mxu0
      %v1859 = vadd.f32 %v1698, %v1858
      %v1860 = vpop.f32.mrf.mxu0
      %1861 = vmatprep.mubr.bf16.mxu0 %v629
      %1862 = vmatmul.mubr.bf16.gmra.mxu0 %v628
      %v1863 = vpop.f32.mrf.mxu0
      %v1864 = vadd.f32 %v1703, %v1863
      %v1865 = vpop.f32.mrf.mxu0
      %v1866 = vpop.f32.mrf.mxu0
      %v1867 = vadd.f32 %v1706, %v1866
      %v1868 = vpop.f32.mrf.mxu0
      %1869 = vmatprep.mubr.bf16.mxu0 %v638
      %1870 = vmatmul.mubr.bf16.gmra.mxu0 %v637
      %v1871 = vpop.f32.mrf.mxu0
      %v1872 = vadd.f32 %v1711, %v1871
      %v1873 = vpop.f32.mrf.mxu0
      %v1874 = vpop.f32.mrf.mxu0
      %v1875 = vadd.f32 %v1714, %v1874
      %v1876 = vpop.f32.mrf.mxu0
      %1877 = vmatprep.mubr.bf16.mxu0 %v647
      %1878 = vmatmul.mubr.bf16.gmra.mxu0 %v646
      %v1879 = vpop.f32.mrf.mxu0
      %v1880 = vadd.f32 %v1719, %v1879
      %v1881 = vpop.f32.mrf.mxu0
      %v1882 = vpop.f32.mrf.mxu0
      %v1883 = vadd.f32 %v1722, %v1882
      %v1884 = vpop.f32.mrf.mxu0
      %1885 = vmatprep.mubr.bf16.mxu0 %v656
      %1886 = vmatmul.mubr.bf16.gmra.mxu0 %v655
      %v1887 = vpop.f32.mrf.mxu0
      %v1888 = vadd.f32 %v1727, %v1887
      %v1889 = vpop.f32.mrf.mxu0
      %v1890 = vpop.f32.mrf.mxu0
      %v1891 = vadd.f32 %v1730, %v1890
      %v1892 = vpop.f32.mrf.mxu0
      %1893 = vmatprep.mubr.bf16.mxu0 %v665
      %1894 = vmatmul.mubr.bf16.gmra.mxu0 %v664
      %v1895 = vpop.f32.mrf.mxu0
      %v1896 = vadd.f32 %v1735, %v1895
      %v1897 = vpop.f32.mrf.mxu0
      %v1898 = vpop.f32.mrf.mxu0
      %v1899 = vadd.f32 %v1738, %v1898
      %v1900 = vpop.f32.mrf.mxu0
      %1901 = vmatprep.mubr.bf16.mxu0 %v674
      %1902 = vmatmul.mubr.bf16.gmra.mxu0 %v673
      %v1903 = vpop.f32.mrf.mxu0
      %v1904 = vadd.f32 %v1743, %v1903
      %v1905 = vpop.f32.mrf.mxu0
      %v1906 = vpop.f32.mrf.mxu0
      %v1907 = vadd.f32 %v1746, %v1906
      %v1908 = vpop.f32.mrf.mxu0
      %1909 = vmatprep.mubr.bf16.mxu0 %v683
      %1910 = vmatmul.mubr.bf16.gmra.mxu0 %v682
      %v1911 = vpop.f32.mrf.mxu0
      %v1912 = vadd.f32 %v1751, %v1911
      %v1913 = vpop.f32.mrf.mxu0
      %v1914 = vpop.f32.mrf.mxu0
      %v1915 = vadd.f32 %v1754, %v1914
      %v1916 = vpop.f32.mrf.mxu0
      %1917 = vmatprep.mubr.bf16.mxu0 %v692
      %1918 = vmatmul.mubr.bf16.gmra.mxu0 %v691
      %v1919 = vpop.f32.mrf.mxu0
      %v1920 = vadd.f32 %v1759, %v1919
      %v1921 = vpop.f32.mrf.mxu0
      %v1922 = vpop.f32.mrf.mxu0
      %v1923 = vadd.f32 %v1762, %v1922
      %v1924 = vpop.f32.mrf.mxu0
      %1925 = vmatprep.mubr.bf16.mxu0 %v701
      %1926 = vmatmul.mubr.bf16.gmra.mxu0 %v700
      %v1927 = vpop.f32.mrf.mxu0
      %v1928 = vadd.f32 %v1767, %v1927
      %v1929 = vpop.f32.mrf.mxu0
      %v1930 = vpop.f32.mrf.mxu0
      %v1931 = vadd.f32 %v1770, %v1930
      %v1932 = vpop.f32.mrf.mxu0
      %1933 = vmatprep.mubr.bf16.mxu0 %v710
      %1934 = vmatmul.mubr.bf16.gmra.mxu0 %v709
      %v1935 = vpop.f32.mrf.mxu0
      %v1936 = vadd.f32 %v1775, %v1935
      %v1937 = vpop.f32.mrf.mxu0
      %v1938 = vpop.f32.mrf.mxu0
      %v1939 = vadd.f32 %v1778, %v1938
      %v1940 = vpop.f32.mrf.mxu0
      %1941 = vmatprep.mubr.bf16.mxu0 %v719
      %1942 = vmatmul.mubr.bf16.gmra.mxu0 %v718
      %v1943 = vpop.f32.mrf.mxu0
      %v1944 = vadd.f32 %v1783, %v1943
      %v1945 = vpop.f32.mrf.mxu0
      %v1946 = vpop.f32.mrf.mxu0
      %v1947 = vadd.f32 %v1786, %v1946
      %v1948 = vpop.f32.mrf.mxu0
      %1949 = vmatprep.mubr.bf16.mxu0 %v728
      %1950 = vmatmul.mubr.bf16.gmra.mxu0 %v727
      %v1951 = vpop.f32.mrf.mxu0
      %v1952 = vadd.f32 %v1791, %v1951
      %v1953 = vpop.f32.mrf.mxu0
      %v1954 = vpop.f32.mrf.mxu0
      %v1955 = vadd.f32 %v1794, %v1954
      %v1956 = vpop.f32.mrf.mxu0
      %1957 = vmatprep.mubr.bf16.mxu0 %v737
      %1958 = vmatmul.mubr.bf16.gmra.mxu0 %v736
      %v1959 = vpop.f32.mrf.mxu0
      %v1960 = vadd.f32 %v1799, %v1959
      %v1961 = vpop.f32.mrf.mxu0
      %v1962 = vpop.f32.mrf.mxu0
      %v1963 = vadd.f32 %v1802, %v1962
      %v1964 = vpop.f32.mrf.mxu0
      %1965 = vdwg.mxu0
      %1966 = vmatprep.subr.bf16.mxu0 0
      %1967 = vmatpush1.bf16.msra.mxu0 %v1249
      %1968 = vmatprep.subr.bf16.mxu0 0
      %1969 = vmatpush1.bf16.msra.mxu0 %v1248
      %1970 = vmatprep.subr.bf16.mxu0 0
      %1971 = vmatpush1.bf16.msra.mxu0 %v1247
      %1972 = vmatprep.subr.bf16.mxu0 0
      %1973 = vmatpush1.bf16.msra.mxu0 %v1246
      %1974 = vmatprep.subr.bf16.mxu0 0
      %1975 = vmatpush1.bf16.msra.mxu0 %v1245
      %1976 = vmatprep.subr.bf16.mxu0 0
      %1977 = vmatpush1.bf16.msra.mxu0 %v1244
      %1978 = vmatprep.subr.bf16.mxu0 0
      %1979 = vmatpush1.bf16.msra.mxu0 %v1243
      %1980 = vmatprep.subr.bf16.mxu0 0
      %1981 = vmatpush1.bf16.msra.mxu0 %v1242
      %1982 = vmatprep.subr.bf16.mxu0 0
      %1983 = vmatpush2.bf16.msra.mxu0 0
      %1984 = vmatprep.subr.bf16.mxu0 0
      %1985 = vmatpush2.bf16.msra.mxu0 0
      %1986 = vmatprep.subr.bf16.mxu0 0
      %1987 = vmatpush2.bf16.msra.mxu0 0
      %1988 = vmatprep.subr.bf16.mxu0 0
      %1989 = vmatpush2.bf16.msra.mxu0 0
      %1990 = vmatprep.subr.bf16.mxu0 0
      %1991 = vmatpush2.bf16.msra.mxu0 0
      %1992 = vmatprep.subr.bf16.mxu0 0
      %1993 = vmatpush2.bf16.msra.mxu0 0
      %1994 = vmatprep.subr.bf16.mxu0 0
      %1995 = vmatpush2.bf16.msra.mxu0 0
      %1996 = vmatprep.subr.bf16.mxu0 0
      %1997 = vmatpush2.bf16.msra.mxu0 0
      %1998 = vmatprep.mubr.bf16.mxu0 0
      %1999 = vmatmul.mubr.bf16.gmra.mxu0 %v603
      %v2000 = vpop.f32.mrf.mxu0
      %v2001 = vadd.f32 %v1840, %v2000
      %v2002 = vpop.f32.mrf.mxu0
      %v2003 = vpop.f32.mrf.mxu0
      %v2004 = vadd.f32 %v1843, %v2003
      %v2005 = vpop.f32.mrf.mxu0
      %2006 = vmatprep.mubr.bf16.mxu0 0
      %2007 = vmatmul.mubr.bf16.gmra.mxu0 %v612
      %v2008 = vpop.f32.mrf.mxu0
      %v2009 = vadd.f32 %v1848, %v2008
      %v2010 = vpop.f32.mrf.mxu0
      %v2011 = vpop.f32.mrf.mxu0
      %v2012 = vadd.f32 %v1851, %v2011
      %v2013 = vpop.f32.mrf.mxu0
      %2014 = vmatprep.mubr.bf16.mxu0 0
      %2015 = vmatmul.mubr.bf16.gmra.mxu0 %v621
      %v2016 = vpop.f32.mrf.mxu0
      %v2017 = vadd.f32 %v1856, %v2016
      %v2018 = vpop.f32.mrf.mxu0
      %v2019 = vpop.f32.mrf.mxu0
      %v2020 = vadd.f32 %v1859, %v2019
      %v2021 = vpop.f32.mrf.mxu0
      %2022 = vmatprep.mubr.bf16.mxu0 0
      %2023 = vmatmul.mubr.bf16.gmra.mxu0 %v630
      %v2024 = vpop.f32.mrf.mxu0
      %v2025 = vadd.f32 %v1864, %v2024
      %v2026 = vpop.f32.mrf.mxu0
      %v2027 = vpop.f32.mrf.mxu0
      %v2028 = vadd.f32 %v1867, %v2027
      %v2029 = vpop.f32.mrf.mxu0
      %2030 = vmatprep.mubr.bf16.mxu0 0
      %2031 = vmatmul.mubr.bf16.gmra.mxu0 %v639
      %v2032 = vpop.f32.mrf.mxu0
      %v2033 = vadd.f32 %v1872, %v2032
      %v2034 = vpop.f32.mrf.mxu0
      %v2035 = vpop.f32.mrf.mxu0
      %v2036 = vadd.f32 %v1875, %v2035
      %v2037 = vpop.f32.mrf.mxu0
      %2038 = vmatprep.mubr.bf16.mxu0 0
      %2039 = vmatmul.mubr.bf16.gmra.mxu0 %v648
      %v2040 = vpop.f32.mrf.mxu0
      %v2041 = vadd.f32 %v1880, %v2040
      %v2042 = vpop.f32.mrf.mxu0
      %v2043 = vpop.f32.mrf.mxu0
      %v2044 = vadd.f32 %v1883, %v2043
      %v2045 = vpop.f32.mrf.mxu0
      %2046 = vmatprep.mubr.bf16.mxu0 0
      %2047 = vmatmul.mubr.bf16.gmra.mxu0 %v657
      %v2048 = vpop.f32.mrf.mxu0
      %v2049 = vadd.f32 %v1888, %v2048
      %v2050 = vpop.f32.mrf.mxu0
      %v2051 = vpop.f32.mrf.mxu0
      %v2052 = vadd.f32 %v1891, %v2051
      %v2053 = vpop.f32.mrf.mxu0
      %2054 = vmatprep.mubr.bf16.mxu0 0
      %2055 = vmatmul.mubr.bf16.gmra.mxu0 %v666
      %v2056 = vpop.f32.mrf.mxu0
      %v2057 = vadd.f32 %v1896, %v2056
      %v2058 = vpop.f32.mrf.mxu0
      %v2059 = vpop.f32.mrf.mxu0
      %v2060 = vadd.f32 %v1899, %v2059
      %v2061 = vpop.f32.mrf.mxu0
      %2062 = vmatprep.mubr.bf16.mxu0 0
      %2063 = vmatmul.mubr.bf16.gmra.mxu0 %v675
      %v2064 = vpop.f32.mrf.mxu0
      %v2065 = vadd.f32 %v1904, %v2064
      %v2066 = vpop.f32.mrf.mxu0
      %v2067 = vpop.f32.mrf.mxu0
      %v2068 = vadd.f32 %v1907, %v2067
      %v2069 = vpop.f32.mrf.mxu0
      %2070 = vmatprep.mubr.bf16.mxu0 0
      %2071 = vmatmul.mubr.bf16.gmra.mxu0 %v684
      %v2072 = vpop.f32.mrf.mxu0
      %v2073 = vadd.f32 %v1912, %v2072
      %v2074 = vpop.f32.mrf.mxu0
      %v2075 = vpop.f32.mrf.mxu0
      %v2076 = vadd.f32 %v1915, %v2075
      %v2077 = vpop.f32.mrf.mxu0
      %2078 = vmatprep.mubr.bf16.mxu0 0
      %2079 = vmatmul.mubr.bf16.gmra.mxu0 %v693
      %v2080 = vpop.f32.mrf.mxu0
      %v2081 = vadd.f32 %v1920, %v2080
      %v2082 = vpop.f32.mrf.mxu0
      %v2083 = vpop.f32.mrf.mxu0
      %v2084 = vadd.f32 %v1923, %v2083
      %v2085 = vpop.f32.mrf.mxu0
      %2086 = vmatprep.mubr.bf16.mxu0 0
      %2087 = vmatmul.mubr.bf16.gmra.mxu0 %v702
      %v2088 = vpop.f32.mrf.mxu0
      %v2089 = vadd.f32 %v1928, %v2088
      %v2090 = vpop.f32.mrf.mxu0
      %v2091 = vpop.f32.mrf.mxu0
      %v2092 = vadd.f32 %v1931, %v2091
      %v2093 = vpop.f32.mrf.mxu0
      %2094 = vmatprep.mubr.bf16.mxu0 0
      %2095 = vmatmul.mubr.bf16.gmra.mxu0 %v711
      %v2096 = vpop.f32.mrf.mxu0
      %v2097 = vadd.f32 %v1936, %v2096
      %v2098 = vpop.f32.mrf.mxu0
      %v2099 = vpop.f32.mrf.mxu0
      %v2100 = vadd.f32 %v1939, %v2099
      %v2101 = vpop.f32.mrf.mxu0
      %2102 = vmatprep.mubr.bf16.mxu0 0
      %2103 = vmatmul.mubr.bf16.gmra.mxu0 %v720
      %v2104 = vpop.f32.mrf.mxu0
      %v2105 = vadd.f32 %v1944, %v2104
      %v2106 = vpop.f32.mrf.mxu0
      %v2107 = vpop.f32.mrf.mxu0
      %v2108 = vadd.f32 %v1947, %v2107
      %v2109 = vpop.f32.mrf.mxu0
      %2110 = vmatprep.mubr.bf16.mxu0 0
      %2111 = vmatmul.mubr.bf16.gmra.mxu0 %v729
      %v2112 = vpop.f32.mrf.mxu0
      %v2113 = vadd.f32 %v1952, %v2112
      %v2114 = vpop.f32.mrf.mxu0
      %v2115 = vpop.f32.mrf.mxu0
      %v2116 = vadd.f32 %v1955, %v2115
      %v2117 = vpop.f32.mrf.mxu0
      %2118 = vmatprep.mubr.bf16.mxu0 0
      %2119 = vmatmul.mubr.bf16.gmra.mxu0 %v738
      %v2120 = vpop.f32.mrf.mxu0
      %v2121 = vadd.f32 %v1960, %v2120
      %v2122 = vpop.f32.mrf.mxu0
      %v2123 = vpop.f32.mrf.mxu0
      %v2124 = vadd.f32 %v1963, %v2123
      %v2125 = vpop.f32.mrf.mxu0
      %2126 = vdwg.mxu0
      %2127 = vst [vmem:[%s195] sm:$0xff] %v2001
      %2128 = vst [vmem:[%s195 + $0x8] sm:$0xff] %v2004
      %2129 = vst [vmem:[%s195 + $0x10] sm:$0xff] %v2009
      %2130 = vst [vmem:[%s195 + $0x18] sm:$0xff] %v2012
      %2131 = vst [vmem:[%s195 + $0x20] sm:$0xff] %v2017
      %2132 = vst [vmem:[%s195 + $0x28] sm:$0xff] %v2020
      %2133 = vst [vmem:[%s195 + $0x30] sm:$0xff] %v2025
      %2134 = vst [vmem:[%s195 + $0x38] sm:$0xff] %v2028
      %2135 = vst [vmem:[%s195 + $0x40] sm:$0xff] %v2033
      %2136 = vst [vmem:[%s195 + $0x48] sm:$0xff] %v2036
      %2137 = vst [vmem:[%s195 + $0x50] sm:$0xff] %v2041
      %2138 = vst [vmem:[%s195 + $0x58] sm:$0xff] %v2044
      %2139 = vst [vmem:[%s195 + $0x60] sm:$0xff] %v2049
      %2140 = vst [vmem:[%s195 + $0x68] sm:$0xff] %v2052
      %2141 = vst [vmem:[%s195 + $0x70] sm:$0xff] %v2057
      %2142 = vst [vmem:[%s195 + $0x78] sm:$0xff] %v2060
      %2143 = vst [vmem:[%s195 + $0x80] sm:$0xff] %v2065
      %2144 = vst [vmem:[%s195 + $0x88] sm:$0xff] %v2068
      %2145 = vst [vmem:[%s195 + $0x90] sm:$0xff] %v2073
      %2146 = vst [vmem:[%s195 + $0x98] sm:$0xff] %v2076
      %2147 = vst [vmem:[%s195 + $0xa0] sm:$0xff] %v2081
      %2148 = vst [vmem:[%s195 + $0xa8] sm:$0xff] %v2084
      %2149 = vst [vmem:[%s195 + $0xb0] sm:$0xff] %v2089
      %2150 = vst [vmem:[%s195 + $0xb8] sm:$0xff] %v2092
      %2151 = vst [vmem:[%s195 + $0xc0] sm:$0xff] %v2097
      %2152 = vst [vmem:[%s195 + $0xc8] sm:$0xff] %v2100
      %2153 = vst [vmem:[%s195 + $0xd0] sm:$0xff] %v2105
      %2154 = vst [vmem:[%s195 + $0xd8] sm:$0xff] %v2108
      %2155 = vst [vmem:[%s195 + $0xe0] sm:$0xff] %v2113
      %2156 = vst [vmem:[%s195 + $0xe8] sm:$0xff] %v2116
      %2157 = vst [vmem:[%s195 + $0xf0] sm:$0xff] %v2121
      %2158 = vst [vmem:[%s195 + $0xf8] sm:$0xff] %v2124
      %v2159 = vadd.f32 %v2001, %v2004
      %v2160 = vadd.f32 %v2159, %v2009
      %v2161 = vadd.f32 %v2160, %v2012
      %v2162 = vadd.f32 %v2161, %v2017
      %v2163 = vadd.f32 %v2162, %v2020
      %v2164 = vadd.f32 %v2163, %v2025
      %v2165 = vadd.f32 %v2164, %v2028
      %v2166 = vadd.f32 %v2165, %v2033
      %v2167 = vadd.f32 %v2166, %v2036
      %v2168 = vadd.f32 %v2167, %v2041
      %v2169 = vadd.f32 %v2168, %v2044
      %v2170 = vadd.f32 %v2169, %v2049
      %v2171 = vadd.f32 %v2170, %v2052
      %v2172 = vadd.f32 %v2171, %v2057
      %v2173 = vadd.f32 %v2172, %v2060
      %v2174 = vadd.f32 %v2173, %v2065
      %v2175 = vadd.f32 %v2174, %v2068
      %v2176 = vadd.f32 %v2175, %v2073
      %v2177 = vadd.f32 %v2176, %v2076
      %v2178 = vadd.f32 %v2177, %v2081
      %v2179 = vadd.f32 %v2178, %v2084
      %v2180 = vadd.f32 %v2179, %v2089
      %v2181 = vadd.f32 %v2180, %v2092
      %v2182 = vadd.f32 %v2181, %v2097
      %v2183 = vadd.f32 %v2182, %v2100
      %v2184 = vadd.f32 %v2183, %v2105
      %v2185 = vadd.f32 %v2184, %v2108
      %v2186 = vadd.f32 %v2185, %v2113
      %v2187 = vadd.f32 %v2186, %v2116
      %v2188 = vadd.f32 %v2187, %v2121
      %v2189 = vadd.f32 %v2188, %v2124
      %v2190 = vrot.slane %v2189, 4
      %v2191 = vadd.f32 %v2189, %v2190
      %v2192 = vrot.slane %v2191, 2
      %v2193 = vadd.f32 %v2191, %v2192
      %v2194 = vrot.slane %v2193, 1
      %v2195 = vadd.f32 %v2193, %v2194
      %v2196 = vmul.f32 %v2001, %v2001
      %v2197 = vmul.f32 %v2004, %v2004
      %v2198 = vmul.f32 %v2009, %v2009
      %v2199 = vmul.f32 %v2012, %v2012
      %v2200 = vmul.f32 %v2017, %v2017
      %v2201 = vmul.f32 %v2020, %v2020
      %v2202 = vmul.f32 %v2025, %v2025
      %v2203 = vmul.f32 %v2028, %v2028
      %v2204 = vmul.f32 %v2033, %v2033
      %v2205 = vmul.f32 %v2036, %v2036
      %v2206 = vmul.f32 %v2041, %v2041
      %v2207 = vmul.f32 %v2044, %v2044
      %v2208 = vmul.f32 %v2049, %v2049
      %v2209 = vmul.f32 %v2052, %v2052
      %v2210 = vmul.f32 %v2057, %v2057
      %v2211 = vmul.f32 %v2060, %v2060
      %v2212 = vmul.f32 %v2065, %v2065
      %v2213 = vmul.f32 %v2068, %v2068
      %v2214 = vmul.f32 %v2073, %v2073
      %v2215 = vmul.f32 %v2076, %v2076
      %v2216 = vmul.f32 %v2081, %v2081
      %v2217 = vmul.f32 %v2084, %v2084
      %v2218 = vmul.f32 %v2089, %v2089
      %v2219 = vmul.f32 %v2092, %v2092
      %v2220 = vmul.f32 %v2097, %v2097
      %v2221 = vmul.f32 %v2100, %v2100
      %v2222 = vmul.f32 %v2105, %v2105
      %v2223 = vmul.f32 %v2108, %v2108
      %v2224 = vmul.f32 %v2113, %v2113
      %v2225 = vmul.f32 %v2116, %v2116
      %v2226 = vmul.f32 %v2121, %v2121
      %v2227 = vmul.f32 %v2124, %v2124
      %v2228 = vadd.f32 %v2196, %v2197
      %v2229 = vadd.f32 %v2228, %v2198
      %v2230 = vadd.f32 %v2229, %v2199
      %v2231 = vadd.f32 %v2230, %v2200
      %v2232 = vadd.f32 %v2231, %v2201
      %v2233 = vadd.f32 %v2232, %v2202
      %v2234 = vadd.f32 %v2233, %v2203
      %v2235 = vadd.f32 %v2234, %v2204
      %v2236 = vadd.f32 %v2235, %v2205
      %v2237 = vadd.f32 %v2236, %v2206
      %v2238 = vadd.f32 %v2237, %v2207
      %v2239 = vadd.f32 %v2238, %v2208
      %v2240 = vadd.f32 %v2239, %v2209
      %v2241 = vadd.f32 %v2240, %v2210
      %v2242 = vadd.f32 %v2241, %v2211
      %v2243 = vadd.f32 %v2242, %v2212
      %v2244 = vadd.f32 %v2243, %v2213
      %v2245 = vadd.f32 %v2244, %v2214
      %v2246 = vadd.f32 %v2245, %v2215
      %v2247 = vadd.f32 %v2246, %v2216
      %v2248 = vadd.f32 %v2247, %v2217
      %v2249 = vadd.f32 %v2248, %v2218
      %v2250 = vadd.f32 %v2249, %v2219
      %v2251 = vadd.f32 %v2250, %v2220
      %v2252 = vadd.f32 %v2251, %v2221
      %v2253 = vadd.f32 %v2252, %v2222
      %v2254 = vadd.f32 %v2253, %v2223
      %v2255 = vadd.f32 %v2254, %v2224
      %v2256 = vadd.f32 %v2255, %v2225
      %v2257 = vadd.f32 %v2256, %v2226
      %v2258 = vadd.f32 %v2257, %v2227
      %v2259 = vrot.slane %v2258, 4
      %v2260 = vadd.f32 %v2258, %v2259
      %v2261 = vrot.slane %v2260, 2
      %v2262 = vadd.f32 %v2260, %v2261
      %v2263 = vrot.slane %v2262, 1
      %v2264 = vadd.f32 %v2262, %v2263
      %vm2265 = vcmask 1040384
      %v2266 = vsel %vm2265, %v2195, %v2264
      // Predicated region
      $region37: #{residual_forward_nhwc.3} parent=31 // pred_check
        %p2267 = pneg %p229
      $region38: #{residual_forward_nhwc.3} parent=31 // pred_check_branch
        %2269 = sbr.rel (%p2267) target = $region40
      $region39: #{residual_forward_nhwc.3} parent=31 // pred_region
        %2270 = vst [vmem:[%s4] sm:$0x3] 0.0
      $region40: #{residual_forward_nhwc.3} parent=31 // pred_fallthru
        _
      %v2271 = vld [vmem:[%s4] sm:$0x3]
      %v2272 = vadd.f32 %v2271, %v2266
      %2273 = vst [vmem:[%s4] sm:$0x3] %v2272
      %p2274 = scmp.lt.s32.totalorder %s16, 1
      %s2275 = scalar_select %p2274, %s16, 1
      %s2276 = smul.addr %s2275, 32
      %s2277 = smul.addr %s2276, 8
      %s2278 = scalar_lea.vmem %s3, %s2277
      // Predicated region
      $region41: #{residual_forward_nhwc.3} parent=31 // pred_check
        %p2279 = pneg %p102
      $region42: #{residual_forward_nhwc.3} parent=31 // pred_check_branch
        %2281 = sbr.rel (%p2279) target = $region44
      $region43: #{residual_forward_nhwc.3} parent=31 // pred_region
        _
      $region44: #{residual_forward_nhwc.3} parent=31 // pred_fallthru
        _
      // Predicated region
      $region45: #{residual_forward_nhwc.3} parent=31 // pred_check
        %p2282 = pneg %p123
      $region46: #{residual_forward_nhwc.3} parent=31 // pred_check_branch
        %2284 = sbr.rel (%p2282) target = $region48
      $region47: #{residual_forward_nhwc.3} parent=31 // pred_region
        _
      $region48: #{residual_forward_nhwc.3} parent=31 // pred_fallthru
        _
      // Predicated region
      $region49: #{residual_forward_nhwc.3} parent=31 // pred_check
        %p2285 = pneg %p123
      $region50: #{residual_forward_nhwc.3} parent=31 // pred_check_branch
        %2287 = sbr.rel (%p2285) target = $region52
      $region51: #{residual_forward_nhwc.3} parent=31 // pred_region
        _
      $region52: #{residual_forward_nhwc.3} parent=31 // pred_fallthru
        _
    $region32: #{residual_forward_nhwc.3} parent=5 // pred_fallthru
      _
    %p2288 = scmp.le.s32.totalorder 2, %s11
    // Predicated region
    $region53: #{residual_forward_nhwc.3} parent=5 // pred_check
      %p2289 = pneg %p2288
    $region54: #{residual_forward_nhwc.3} parent=5 // pred_check_branch
      %2291 = sbr.rel (%p2289) target = $region56
    $region55: #{residual_forward_nhwc.3} parent=5 // pred_region
      %s2292 = ssub.s32 %s11, 2
      // Predicated region
      $region57: #{residual_forward_nhwc.3} parent=55 // pred_check
        %p2293 = pneg %p108
      $region58: #{residual_forward_nhwc.3} parent=55 // pred_check_branch
        %2295 = sbr.rel (%p2293) target = $region60
      $region59: #{residual_forward_nhwc.3} parent=55 // pred_region
        %p2296 = scmp.lt.s32.totalorder %s17, 1
        %s2297 = scalar_select %p2296, %s17, 1
        %s2298 = smul.addr %s2297, 32
        %s2299 = smul.addr %s2298, 8
        %s2300 = scalar_lea.vmem %s3, %s2299
      $region60: #{residual_forward_nhwc.3} parent=55 // pred_fallthru
        _
    $region56: #{residual_forward_nhwc.3} parent=5 // pred_fallthru
      _
  $region6: #{residual_forward_nhwc.3} parent=0 // loop_footer
    %s15 = sadd.s32 1, %s11
  $region7: #{residual_forward_nhwc.3} parent=0 // loop_footer_branch
    %10 = sbr.rel target = $region3
  $region8: #{residual_forward_nhwc.3} parent=0 // loop_exit
    _

</llo_original>
